<compile_context>
chip_gen: v6e
topology: v6e:2x2x1
jax: 0.10.0
libtpu: 0.0.40
codegen_flags: <defaults>
</compile_context>

<pallas_src>
import numpy as np
import jax
import jax.numpy as jnp
from jax import lax
from jax.experimental import pallas as pl
from jax.experimental.pallas import tpu as pltpu

# Model dims (from the PyTorch module)
VOCAB = 21
EMB = 36
HIDDEN = 150
OUT = 1

# Padded dims for TPU tiling (lane = 128, sublane = 8)
VOCAB_PAD = 32
B_PAD = 8
E_PAD = 128
H_PAD = 256
O_PAD = 128


def lstm_kernel(tok_ref,                                   # SMEM (B, T) int32 (prefetch)
                emb_ref, w_ih_ref, w_hh_hbm, b_ref, w_fc_hbm, b_fc_ref,   # inputs
                out_ref,                                    # output (B_PAD, O_PAD) f32
                x_lhs_ref, x_proj_ref, w_hh_vmem, w_fc_vmem, dma_sems):   # scratch
    B, T = tok_ref.shape

    # Kick off the weight DMAs immediately; hide them behind the gather and the
    # hoisted input-projection matmul.
    w_hh_cp = pltpu.make_async_copy(w_hh_hbm, w_hh_vmem, dma_sems.at[0])
    w_fc_cp = pltpu.make_async_copy(w_fc_hbm, w_fc_vmem, dma_sems.at[1])
    w_hh_cp.start()
    w_fc_cp.start()

    # In-kernel embedding gather: build the time-major (T*B_PAD, E_PAD) LHS.
    # Padded batch rows stay zero (their outputs are discarded by the wrapper).
    x_lhs_ref[...] = jnp.zeros_like(x_lhs_ref)
    for t in range(T):                       # static, fully unrolled: 16 row copies
        for b in range(B):
            tok = tok_ref[b, t]
            x_lhs_ref[pl.ds(t * B_PAD + b, 1), :] = emb_ref[pl.ds(tok, 1), :]

    # Hoisted input projection for ALL timesteps + fused (b_ih + b_hh) bias,
    # staged in VMEM scratch (not a live value across the unrolled loop).
    x_proj_ref[...] = jnp.dot(x_lhs_ref[...].astype(jnp.bfloat16), w_ih_ref[...],
                              preferred_element_type=jnp.float32) + b_ref[...]

    h = jnp.zeros((B_PAD, H_PAD), jnp.float32)
    c = jnp.zeros((B_PAD, H_PAD), jnp.float32)

    # Recurrent weights must be resident before the serial chain starts.
    w_hh_cp.wait()
    w_hh = w_hh_vmem[...]

    # Fully unrolled recurrence (T is small and static) -> LLO can pipeline.
    # TODO(synk): if bundle dumps show W_hh weight-push dominating the 8-row
    # accumulates, drive the MXU explicitly (pltpu.matmul_push_rhs /
    # matmul_acc_lhs / matmul_pop) to keep gate-weight tiles resident across
    # the 8 timesteps (split the 4 gate tiles across the 2 MXUs on v6e/v7x).
    for t in range(T):
        gates = x_proj_ref[pl.ds(t * B_PAD, B_PAD), :] + jnp.dot(
            h.astype(jnp.bfloat16), w_hh, preferred_element_type=jnp.float32)
        i_g = jax.nn.sigmoid(gates[:, 0 * H_PAD:1 * H_PAD])
        f_g = jax.nn.sigmoid(gates[:, 1 * H_PAD:2 * H_PAD])
        g_g = jnp.tanh(gates[:, 2 * H_PAD:3 * H_PAD])
        o_g = jax.nn.sigmoid(gates[:, 3 * H_PAD:4 * H_PAD])
        c = f_g * c + i_g * g_g
        h = o_g * jnp.tanh(c)

    w_fc_cp.wait()
    logits = jnp.dot(h.astype(jnp.bfloat16), w_fc_vmem[...],
                     preferred_element_type=jnp.float32) + b_fc_ref[...]
    out_ref[...] = jax.nn.sigmoid(logits)


def pack_params(emb_table, w_ih, w_hh, b_ih, b_hh, w_fc, b_fc):
    """One-time (model-load) packing of PyTorch-layout weights into padded,
    transposed slabs. Pure jnp -> jit-safe. Matmul weights are bf16; the
    embedding table stays f32 (dynamic row reads are cheapest unpacked)."""

    def pack_gate_weights(w, in_dim, in_pad):
        # w: (4*HIDDEN, in_dim), gate order [i, f, g, o].
        w4 = w.reshape(4, HIDDEN, in_dim)                  # (4, H, in)
        w4 = jnp.transpose(w4, (2, 0, 1))                  # (in, 4, H)
        w4 = jnp.pad(w4, ((0, in_pad - in_dim), (0, 0), (0, H_PAD - HIDDEN)))
        return w4.reshape(in_pad, 4 * H_PAD).astype(jnp.bfloat16)

    emb_p = jnp.pad(emb_table, ((0, VOCAB_PAD - VOCAB),
                                (0, E_PAD - EMB))).astype(jnp.float32)

    w_ih_p = pack_gate_weights(w_ih, EMB, E_PAD)           # (E_PAD, 4*H_PAD)
    w_hh_p = pack_gate_weights(w_hh, HIDDEN, H_PAD)        # (H_PAD, 4*H_PAD)

    b = (b_ih + b_hh).reshape(4, HIDDEN)
    b_p = jnp.pad(b, ((0, 0), (0, H_PAD - HIDDEN))).reshape(
        1, 4 * H_PAD).astype(jnp.float32)

    w_fc_p = jnp.pad(w_fc.T, ((0, H_PAD - HIDDEN),
                              (0, O_PAD - OUT))).astype(jnp.bfloat16)
    b_fc_p = jnp.pad(b_fc.reshape(1, OUT),
                     ((0, 0), (0, O_PAD - OUT))).astype(jnp.float32)
    return emb_p, w_ih_p, w_hh_p, b_p, w_fc_p, b_fc_p


def lstm_forward_pallas(tokens, packed):
    """tokens: (B, T) int (batch_first, like PyTorch). Returns (B, OUT) f32."""
    emb_p, w_ih_p, w_hh_p, b_p, w_fc_p, b_fc_p = packed
    B, T = tokens.shape
    tokens = tokens.astype(jnp.int32)

    vmem = pl.BlockSpec(memory_space=pltpu.MemorySpace.VMEM)
    anym = pl.BlockSpec(memory_space=pl.ANY)   # weights we DMA manually

    grid_spec = pltpu.PrefetchScalarGridSpec(
        num_scalar_prefetch=1,                 # tokens -> SMEM
        grid=(),
        in_specs=[vmem,                        # emb table   (VOCAB_PAD, E_PAD) f32
                  vmem,                        # w_ih        (E_PAD, 4*H_PAD) bf16
                  anym,                        # w_hh        (H_PAD, 4*H_PAD) bf16
                  vmem,                        # fused bias  (1, 4*H_PAD) f32
                  anym,                        # w_fc        (H_PAD, O_PAD) bf16
                  vmem],                       # b_fc        (1, O_PAD) f32
        out_specs=vmem,
        scratch_shapes=[
            pltpu.VMEM((T * B_PAD, E_PAD), jnp.float32),       # gathered LHS
            pltpu.VMEM((T * B_PAD, 4 * H_PAD), jnp.float32),   # staged x_proj
            pltpu.VMEM((H_PAD, 4 * H_PAD), jnp.bfloat16),      # resident W_hh
            pltpu.VMEM((H_PAD, O_PAD), jnp.bfloat16),          # resident W_fc
            pltpu.SemaphoreType.DMA((2,)),
        ],
    )

    cost = pl.CostEstimate(
        flops=(2 * (T * B_PAD) * E_PAD * 4 * H_PAD          # hoisted x @ W_ih
               + T * 2 * B_PAD * H_PAD * 4 * H_PAD          # recurrence h @ W_hh
               + 2 * B_PAD * H_PAD * O_PAD),                 # fc
        transcendentals=T * 5 * B_PAD * H_PAD + B_PAD * O_PAD,
        bytes_accessed=(VOCAB_PAD * E_PAD * 4 + E_PAD * 4 * H_PAD * 2
                        + H_PAD * 4 * H_PAD * 2 + 4 * H_PAD * 4
                        + H_PAD * O_PAD * 2 + O_PAD * 4
                        + B * T * 4 + B_PAD * O_PAD * 4),
    )

    out = pl.pallas_call(
        lstm_kernel,
        out_shape=jax.ShapeDtypeStruct((B_PAD, O_PAD), jnp.float32),
        grid_spec=grid_spec,
        cost_estimate=cost,
    )(tokens, emb_p, w_ih_p, w_hh_p, b_p, w_fc_p, b_fc_p)

    return out[:B, :OUT]


lstm_forward = jax.jit(lstm_forward_pallas)


def lstm_ref(x_emb, w_ih, w_hh, b_ih, b_hh, w_fc, b_fc):
    """Pure-JAX f32 reference matching PyTorch LSTM semantics (gate order i,f,g,o)."""
    B = x_emb.shape[0]
    h0 = jnp.zeros((B, HIDDEN), jnp.float32)
    c0 = jnp.zeros((B, HIDDEN), jnp.float32)

    def step(carry, x_t):
        h, c = carry
        gates = x_t @ w_ih.T + h @ w_hh.T + b_ih + b_hh
        i, f, g, o = jnp.split(gates, 4, axis=-1)
        i = jax.nn.sigmoid(i)
        f = jax.nn.sigmoid(f)
        g = jnp.tanh(g)
        o = jax.nn.sigmoid(o)
        c = f * c + i * g
        h = o * jnp.tanh(c)
        return (h, c), None

    (h, _), _ = lax.scan(step, (h0, c0), jnp.transpose(x_emb, (1, 0, 2)))
    return jax.nn.sigmoid(h @ w_fc.T + b_fc)


if __name__ == "__main__":
    key = jax.random.PRNGKey(0)
    k_tok, k_emb, k1, k2, k3, k4, k5, k6 = jax.random.split(key, 8)

    B, T = 2, 8
    tokens = jax.random.randint(k_tok, (B, T), 0, VOCAB)            # (B, T) int32

    # Deterministic parameter init (shapes per the PyTorch module's __init__)
    emb_table = jax.random.normal(k_emb, (VOCAB, EMB), jnp.float32)
    k_lstm = 1.0 / np.sqrt(HIDDEN)
    w_ih = jax.random.uniform(k1, (4 * HIDDEN, EMB), jnp.float32, -k_lstm, k_lstm)
    w_hh = jax.random.uniform(k2, (4 * HIDDEN, HIDDEN), jnp.float32, -k_lstm, k_lstm)
    b_ih = jax.random.uniform(k3, (4 * HIDDEN,), jnp.float32, -k_lstm, k_lstm)
    b_hh = jax.random.uniform(k4, (4 * HIDDEN,), jnp.float32, -k_lstm, k_lstm)
    w_fc = jax.random.uniform(k5, (OUT, HIDDEN), jnp.float32, -k_lstm, k_lstm)
    b_fc = jax.random.uniform(k6, (OUT,), jnp.float32, -k_lstm, k_lstm)

    # One-time weight packing ("model load" time, not per forward call).
    packed = jax.tree_util.tree_map(
        jax.block_until_ready,
        pack_params(emb_table, w_ih, w_hh, b_ih, b_hh, w_fc, b_fc))

    out = lstm_forward(tokens, packed)
    out = jax.block_until_ready(out)

    x_emb = emb_table[tokens]                                        # (B, T, EMB)
    ref = lstm_ref(x_emb, w_ih, w_hh, b_ih, b_hh, w_fc, b_fc)

    assert out.shape == (B, OUT)
    np.testing.assert_allclose(np.asarray(out), np.asarray(ref),
                               atol=2e-2, rtol=0)
    print("KERNEL_OK")
</pallas_src>

<mosaic_0001>
module attributes {stable_mosaic.version = 11 : i64} {
  func.func @lstm_kernel(%arg0: memref<2x8xi32, #tpu.memory_space<smem>>, %arg1: memref<32x128xf32, #tpu.memory_space<vmem>>, %arg2: memref<128x1024xbf16, #tpu.memory_space<vmem>>, %arg3: memref<256x1024xbf16, #tpu.memory_space<any>>, %arg4: memref<1x1024xf32, #tpu.memory_space<vmem>>, %arg5: memref<256x128xbf16, #tpu.memory_space<any>>, %arg6: memref<1x128xf32, #tpu.memory_space<vmem>>, %arg7: memref<8x128xf32, #tpu.memory_space<vmem>>, %arg8: memref<64x128xf32, #tpu.memory_space<vmem>>, %arg9: memref<64x1024xf32, #tpu.memory_space<vmem>>, %arg10: memref<256x1024xbf16, #tpu.memory_space<vmem>>, %arg11: memref<256x128xbf16, #tpu.memory_space<vmem>>, %arg12: memref<2x!tpu.dma_semaphore, #tpu.memory_space<semaphore_mem>>) attributes {dimension_semantics = [], scalar_prefetch = 1 : i64, scratch_operands = 5 : i64, tpu.core_type = #tpu.core_type<tc>} {
    %c0_i32 = arith.constant 0 : i32
    %0 = tpu.memref_slice %arg12[%c0_i32] : memref<2x!tpu.dma_semaphore, #tpu.memory_space<semaphore_mem>> -> memref<1x!tpu.dma_semaphore, #tpu.memory_space<semaphore_mem>>
    %1 = tpu.memref_squeeze %0 : memref<1x!tpu.dma_semaphore, #tpu.memory_space<semaphore_mem>> -> memref<!tpu.dma_semaphore, #tpu.memory_space<semaphore_mem>>
    tpu.enqueue_dma source(%arg3 : memref<256x1024xbf16, #tpu.memory_space<any>>) target(%arg10 : memref<256x1024xbf16, #tpu.memory_space<vmem>>) target_semaphore(%1 : memref<!tpu.dma_semaphore, #tpu.memory_space<semaphore_mem>>)
    %c1_i32 = arith.constant 1 : i32
    %2 = tpu.memref_slice %arg12[%c1_i32] : memref<2x!tpu.dma_semaphore, #tpu.memory_space<semaphore_mem>> -> memref<1x!tpu.dma_semaphore, #tpu.memory_space<semaphore_mem>>
    %3 = tpu.memref_squeeze %2 : memref<1x!tpu.dma_semaphore, #tpu.memory_space<semaphore_mem>> -> memref<!tpu.dma_semaphore, #tpu.memory_space<semaphore_mem>>
    tpu.enqueue_dma source(%arg5 : memref<256x128xbf16, #tpu.memory_space<any>>) target(%arg11 : memref<256x128xbf16, #tpu.memory_space<vmem>>) target_semaphore(%3 : memref<!tpu.dma_semaphore, #tpu.memory_space<semaphore_mem>>)
    %cst = arith.constant 0.000000e+00 : f32
    %4 = vector.broadcast %cst : f32 to vector<64x128xf32>
    %c0 = arith.constant 0 : index
    %c0_0 = arith.constant 0 : index
    %5 = vector.load %arg8[%c0, %c0_0] : memref<64x128xf32, #tpu.memory_space<vmem>>, vector<64x128xf32>
    tpu.vector_store %arg8[%c0, %c0_0], %4 {strides = array<i32>} : memref<64x128xf32, #tpu.memory_space<vmem>>, vector<64x128xf32>,
    %c0_1 = arith.constant 0 : index
    %c0_2 = arith.constant 0 : index
    %6 = memref.load %arg0[%c0_1, %c0_2] : memref<2x8xi32, #tpu.memory_space<smem>>
    %7 = arith.index_cast %6 : i32 to index
    %c0_3 = arith.constant 0 : index
    %8 = vector.load %arg1[%7, %c0_3] : memref<32x128xf32, #tpu.memory_space<vmem>>, vector<1x128xf32>
    %c0_4 = arith.constant 0 : index
    %c0_5 = arith.constant 0 : index
    %9 = vector.load %arg8[%c0_4, %c0_5] : memref<64x128xf32, #tpu.memory_space<vmem>>, vector<1x128xf32>
    tpu.vector_store %arg8[%c0_4, %c0_5], %8 {strides = array<i32>} : memref<64x128xf32, #tpu.memory_space<vmem>>, vector<1x128xf32>,
    %c1 = arith.constant 1 : index
    %c0_6 = arith.constant 0 : index
    %10 = memref.load %arg0[%c1, %c0_6] : memref<2x8xi32, #tpu.memory_space<smem>>
    %11 = arith.index_cast %10 : i32 to index
    %c0_7 = arith.constant 0 : index
    %12 = vector.load %arg1[%11, %c0_7] : memref<32x128xf32, #tpu.memory_space<vmem>>, vector<1x128xf32>
    %c1_8 = arith.constant 1 : index
    %c0_9 = arith.constant 0 : index
    %13 = vector.load %arg8[%c1_8, %c0_9] : memref<64x128xf32, #tpu.memory_space<vmem>>, vector<1x128xf32>
    tpu.vector_store %arg8[%c1_8, %c0_9], %12 {strides = array<i32>} : memref<64x128xf32, #tpu.memory_space<vmem>>, vector<1x128xf32>,
    %c0_10 = arith.constant 0 : index
    %c1_11 = arith.constant 1 : index
    %14 = memref.load %arg0[%c0_10, %c1_11] : memref<2x8xi32, #tpu.memory_space<smem>>
    %15 = arith.index_cast %14 : i32 to index
    %c0_12 = arith.constant 0 : index
    %16 = vector.load %arg1[%15, %c0_12] : memref<32x128xf32, #tpu.memory_space<vmem>>, vector<1x128xf32>
    %c8 = arith.constant 8 : index
    %c0_13 = arith.constant 0 : index
    %17 = vector.load %arg8[%c8, %c0_13] : memref<64x128xf32, #tpu.memory_space<vmem>>, vector<1x128xf32>
    tpu.vector_store %arg8[%c8, %c0_13], %16 {strides = array<i32>} : memref<64x128xf32, #tpu.memory_space<vmem>>, vector<1x128xf32>,
    %c1_14 = arith.constant 1 : index
    %c1_15 = arith.constant 1 : index
    %18 = memref.load %arg0[%c1_14, %c1_15] : memref<2x8xi32, #tpu.memory_space<smem>>
    %19 = arith.index_cast %18 : i32 to index
    %c0_16 = arith.constant 0 : index
    %20 = vector.load %arg1[%19, %c0_16] : memref<32x128xf32, #tpu.memory_space<vmem>>, vector<1x128xf32>
    %c9 = arith.constant 9 : index
    %c0_17 = arith.constant 0 : index
    %21 = vector.load %arg8[%c9, %c0_17] : memref<64x128xf32, #tpu.memory_space<vmem>>, vector<1x128xf32>
    tpu.vector_store %arg8[%c9, %c0_17], %20 {strides = array<i32>} : memref<64x128xf32, #tpu.memory_space<vmem>>, vector<1x128xf32>,
    %c0_18 = arith.constant 0 : index
    %c2 = arith.constant 2 : index
    %22 = memref.load %arg0[%c0_18, %c2] : memref<2x8xi32, #tpu.memory_space<smem>>
    %23 = arith.index_cast %22 : i32 to index
    %c0_19 = arith.constant 0 : index
    %24 = vector.load %arg1[%23, %c0_19] : memref<32x128xf32, #tpu.memory_space<vmem>>, vector<1x128xf32>
    %c16 = arith.constant 16 : index
    %c0_20 = arith.constant 0 : index
    %25 = vector.load %arg8[%c16, %c0_20] : memref<64x128xf32, #tpu.memory_space<vmem>>, vector<1x128xf32>
    tpu.vector_store %arg8[%c16, %c0_20], %24 {strides = array<i32>} : memref<64x128xf32, #tpu.memory_space<vmem>>, vector<1x128xf32>,
    %c1_21 = arith.constant 1 : index
    %c2_22 = arith.constant 2 : index
    %26 = memref.load %arg0[%c1_21, %c2_22] : memref<2x8xi32, #tpu.memory_space<smem>>
    %27 = arith.index_cast %26 : i32 to index
    %c0_23 = arith.constant 0 : index
    %28 = vector.load %arg1[%27, %c0_23] : memref<32x128xf32, #tpu.memory_space<vmem>>, vector<1x128xf32>
    %c17 = arith.constant 17 : index
    %c0_24 = arith.constant 0 : index
    %29 = vector.load %arg8[%c17, %c0_24] : memref<64x128xf32, #tpu.memory_space<vmem>>, vector<1x128xf32>
    tpu.vector_store %arg8[%c17, %c0_24], %28 {strides = array<i32>} : memref<64x128xf32, #tpu.memory_space<vmem>>, vector<1x128xf32>,
    %c0_25 = arith.constant 0 : index
    %c3 = arith.constant 3 : index
    %30 = memref.load %arg0[%c0_25, %c3] : memref<2x8xi32, #tpu.memory_space<smem>>
    %31 = arith.index_cast %30 : i32 to index
    %c0_26 = arith.constant 0 : index
    %32 = vector.load %arg1[%31, %c0_26] : memref<32x128xf32, #tpu.memory_space<vmem>>, vector<1x128xf32>
    %c24 = arith.constant 24 : index
    %c0_27 = arith.constant 0 : index
    %33 = vector.load %arg8[%c24, %c0_27] : memref<64x128xf32, #tpu.memory_space<vmem>>, vector<1x128xf32>
    tpu.vector_store %arg8[%c24, %c0_27], %32 {strides = array<i32>} : memref<64x128xf32, #tpu.memory_space<vmem>>, vector<1x128xf32>,
    %c1_28 = arith.constant 1 : index
    %c3_29 = arith.constant 3 : index
    %34 = memref.load %arg0[%c1_28, %c3_29] : memref<2x8xi32, #tpu.memory_space<smem>>
    %35 = arith.index_cast %34 : i32 to index
    %c0_30 = arith.constant 0 : index
    %36 = vector.load %arg1[%35, %c0_30] : memref<32x128xf32, #tpu.memory_space<vmem>>, vector<1x128xf32>
    %c25 = arith.constant 25 : index
    %c0_31 = arith.constant 0 : index
    %37 = vector.load %arg8[%c25, %c0_31] : memref<64x128xf32, #tpu.memory_space<vmem>>, vector<1x128xf32>
    tpu.vector_store %arg8[%c25, %c0_31], %36 {strides = array<i32>} : memref<64x128xf32, #tpu.memory_space<vmem>>, vector<1x128xf32>,
    %c0_32 = arith.constant 0 : index
    %c4 = arith.constant 4 : index
    %38 = memref.load %arg0[%c0_32, %c4] : memref<2x8xi32, #tpu.memory_space<smem>>
    %39 = arith.index_cast %38 : i32 to index
    %c0_33 = arith.constant 0 : index
    %40 = vector.load %arg1[%39, %c0_33] : memref<32x128xf32, #tpu.memory_space<vmem>>, vector<1x128xf32>
    %c32 = arith.constant 32 : index
    %c0_34 = arith.constant 0 : index
    %41 = vector.load %arg8[%c32, %c0_34] : memref<64x128xf32, #tpu.memory_space<vmem>>, vector<1x128xf32>
    tpu.vector_store %arg8[%c32, %c0_34], %40 {strides = array<i32>} : memref<64x128xf32, #tpu.memory_space<vmem>>, vector<1x128xf32>,
    %c1_35 = arith.constant 1 : index
    %c4_36 = arith.constant 4 : index
    %42 = memref.load %arg0[%c1_35, %c4_36] : memref<2x8xi32, #tpu.memory_space<smem>>
    %43 = arith.index_cast %42 : i32 to index
    %c0_37 = arith.constant 0 : index
    %44 = vector.load %arg1[%43, %c0_37] : memref<32x128xf32, #tpu.memory_space<vmem>>, vector<1x128xf32>
    %c33 = arith.constant 33 : index
    %c0_38 = arith.constant 0 : index
    %45 = vector.load %arg8[%c33, %c0_38] : memref<64x128xf32, #tpu.memory_space<vmem>>, vector<1x128xf32>
    tpu.vector_store %arg8[%c33, %c0_38], %44 {strides = array<i32>} : memref<64x128xf32, #tpu.memory_space<vmem>>, vector<1x128xf32>,
    %c0_39 = arith.constant 0 : index
    %c5 = arith.constant 5 : index
    %46 = memref.load %arg0[%c0_39, %c5] : memref<2x8xi32, #tpu.memory_space<smem>>
    %47 = arith.index_cast %46 : i32 to index
    %c0_40 = arith.constant 0 : index
    %48 = vector.load %arg1[%47, %c0_40] : memref<32x128xf32, #tpu.memory_space<vmem>>, vector<1x128xf32>
    %c40 = arith.constant 40 : index
    %c0_41 = arith.constant 0 : index
    %49 = vector.load %arg8[%c40, %c0_41] : memref<64x128xf32, #tpu.memory_space<vmem>>, vector<1x128xf32>
    tpu.vector_store %arg8[%c40, %c0_41], %48 {strides = array<i32>} : memref<64x128xf32, #tpu.memory_space<vmem>>, vector<1x128xf32>,
    %c1_42 = arith.constant 1 : index
    %c5_43 = arith.constant 5 : index
    %50 = memref.load %arg0[%c1_42, %c5_43] : memref<2x8xi32, #tpu.memory_space<smem>>
    %51 = arith.index_cast %50 : i32 to index
    %c0_44 = arith.constant 0 : index
    %52 = vector.load %arg1[%51, %c0_44] : memref<32x128xf32, #tpu.memory_space<vmem>>, vector<1x128xf32>
    %c41 = arith.constant 41 : index
    %c0_45 = arith.constant 0 : index
    %53 = vector.load %arg8[%c41, %c0_45] : memref<64x128xf32, #tpu.memory_space<vmem>>, vector<1x128xf32>
    tpu.vector_store %arg8[%c41, %c0_45], %52 {strides = array<i32>} : memref<64x128xf32, #tpu.memory_space<vmem>>, vector<1x128xf32>,
    %c0_46 = arith.constant 0 : index
    %c6 = arith.constant 6 : index
    %54 = memref.load %arg0[%c0_46, %c6] : memref<2x8xi32, #tpu.memory_space<smem>>
    %55 = arith.index_cast %54 : i32 to index
    %c0_47 = arith.constant 0 : index
    %56 = vector.load %arg1[%55, %c0_47] : memref<32x128xf32, #tpu.memory_space<vmem>>, vector<1x128xf32>
    %c48 = arith.constant 48 : index
    %c0_48 = arith.constant 0 : index
    %57 = vector.load %arg8[%c48, %c0_48] : memref<64x128xf32, #tpu.memory_space<vmem>>, vector<1x128xf32>
    tpu.vector_store %arg8[%c48, %c0_48], %56 {strides = array<i32>} : memref<64x128xf32, #tpu.memory_space<vmem>>, vector<1x128xf32>,
    %c1_49 = arith.constant 1 : index
    %c6_50 = arith.constant 6 : index
    %58 = memref.load %arg0[%c1_49, %c6_50] : memref<2x8xi32, #tpu.memory_space<smem>>
    %59 = arith.index_cast %58 : i32 to index
    %c0_51 = arith.constant 0 : index
    %60 = vector.load %arg1[%59, %c0_51] : memref<32x128xf32, #tpu.memory_space<vmem>>, vector<1x128xf32>
    %c49 = arith.constant 49 : index
    %c0_52 = arith.constant 0 : index
    %61 = vector.load %arg8[%c49, %c0_52] : memref<64x128xf32, #tpu.memory_space<vmem>>, vector<1x128xf32>
    tpu.vector_store %arg8[%c49, %c0_52], %60 {strides = array<i32>} : memref<64x128xf32, #tpu.memory_space<vmem>>, vector<1x128xf32>,
    %c0_53 = arith.constant 0 : index
    %c7 = arith.constant 7 : index
    %62 = memref.load %arg0[%c0_53, %c7] : memref<2x8xi32, #tpu.memory_space<smem>>
    %63 = arith.index_cast %62 : i32 to index
    %c0_54 = arith.constant 0 : index
    %64 = vector.load %arg1[%63, %c0_54] : memref<32x128xf32, #tpu.memory_space<vmem>>, vector<1x128xf32>
    %c56 = arith.constant 56 : index
    %c0_55 = arith.constant 0 : index
    %65 = vector.load %arg8[%c56, %c0_55] : memref<64x128xf32, #tpu.memory_space<vmem>>, vector<1x128xf32>
    tpu.vector_store %arg8[%c56, %c0_55], %64 {strides = array<i32>} : memref<64x128xf32, #tpu.memory_space<vmem>>, vector<1x128xf32>,
    %c1_56 = arith.constant 1 : index
    %c7_57 = arith.constant 7 : index
    %66 = memref.load %arg0[%c1_56, %c7_57] : memref<2x8xi32, #tpu.memory_space<smem>>
    %67 = arith.index_cast %66 : i32 to index
    %c0_58 = arith.constant 0 : index
    %68 = vector.load %arg1[%67, %c0_58] : memref<32x128xf32, #tpu.memory_space<vmem>>, vector<1x128xf32>
    %c57 = arith.constant 57 : index
    %c0_59 = arith.constant 0 : index
    %69 = vector.load %arg8[%c57, %c0_59] : memref<64x128xf32, #tpu.memory_space<vmem>>, vector<1x128xf32>
    tpu.vector_store %arg8[%c57, %c0_59], %68 {strides = array<i32>} : memref<64x128xf32, #tpu.memory_space<vmem>>, vector<1x128xf32>,
    %c0_60 = arith.constant 0 : index
    %c0_61 = arith.constant 0 : index
    %70 = vector.load %arg8[%c0_60, %c0_61] : memref<64x128xf32, #tpu.memory_space<vmem>>, vector<64x128xf32>
    %71 = arith.truncf %70 : vector<64x128xf32> to vector<64x128xbf16>
    %c0_62 = arith.constant 0 : index
    %c0_63 = arith.constant 0 : index
    %72 = vector.load %arg2[%c0_62, %c0_63] : memref<128x1024xbf16, #tpu.memory_space<vmem>>, vector<128x1024xbf16>
    %cst_64 = arith.constant dense<0.000000e+00> : vector<64x1024xf32>
    %73 = tpu.matmul %71, %72, %cst_64 {dimension_numbers = #tpu.dot_dimension_numbers<[1], [0], [0], [1], [0, 0, 1, 1], [], []>} : vector<64x128xbf16>, vector<128x1024xbf16>, vector<64x1024xf32> -> vector<64x1024xf32>
    %c0_65 = arith.constant 0 : index
    %c0_66 = arith.constant 0 : index
    %74 = vector.load %arg4[%c0_65, %c0_66] : memref<1x1024xf32, #tpu.memory_space<vmem>>, vector<1x1024xf32>
    %75 = vector.broadcast %74 : vector<1x1024xf32> to vector<64x1024xf32>
    %76 = arith.addf %73, %75 : vector<64x1024xf32>
    %c0_67 = arith.constant 0 : index
    %c0_68 = arith.constant 0 : index
    %77 = vector.load %arg9[%c0_67, %c0_68] : memref<64x1024xf32, #tpu.memory_space<vmem>>, vector<64x1024xf32>
    tpu.vector_store %arg9[%c0_67, %c0_68], %76 {strides = array<i32>} : memref<64x1024xf32, #tpu.memory_space<vmem>>, vector<64x1024xf32>,
    %cst_69 = arith.constant 0.000000e+00 : f32
    %78 = vector.broadcast %cst_69 : f32 to vector<8x256xf32>
    %cst_70 = arith.constant 0.000000e+00 : f32
    %79 = vector.broadcast %cst_70 : f32 to vector<8x256xf32>
    %c0_i32_71 = arith.constant 0 : i32
    %80 = tpu.memref_slice %arg12[%c0_i32_71] : memref<2x!tpu.dma_semaphore, #tpu.memory_space<semaphore_mem>> -> memref<1x!tpu.dma_semaphore, #tpu.memory_space<semaphore_mem>>
    %81 = tpu.memref_squeeze %80 : memref<1x!tpu.dma_semaphore, #tpu.memory_space<semaphore_mem>> -> memref<!tpu.dma_semaphore, #tpu.memory_space<semaphore_mem>>
    tpu.wait_dma2 semaphore(%81 : memref<!tpu.dma_semaphore, #tpu.memory_space<semaphore_mem>>) src(%arg3 : memref<256x1024xbf16, #tpu.memory_space<any>>) dst(%arg10 : memref<256x1024xbf16, #tpu.memory_space<vmem>>)
    %c0_72 = arith.constant 0 : index
    %c0_73 = arith.constant 0 : index
    %82 = vector.load %arg10[%c0_72, %c0_73] : memref<256x1024xbf16, #tpu.memory_space<vmem>>, vector<256x1024xbf16>
    %c0_74 = arith.constant 0 : index
    %c0_75 = arith.constant 0 : index
    %83 = vector.load %arg9[%c0_74, %c0_75] : memref<64x1024xf32, #tpu.memory_space<vmem>>, vector<8x1024xf32>
    %84 = arith.truncf %78 : vector<8x256xf32> to vector<8x256xbf16>
    %cst_76 = arith.constant dense<0.000000e+00> : vector<8x1024xf32>
    %85 = tpu.matmul %84, %82, %cst_76 {dimension_numbers = #tpu.dot_dimension_numbers<[1], [0], [0], [1], [0, 0, 1, 1], [], []>} : vector<8x256xbf16>, vector<256x1024xbf16>, vector<8x1024xf32> -> vector<8x1024xf32>
    %86 = arith.addf %83, %85 : vector<8x1024xf32>
    %87 = vector.extract_strided_slice %86 {offsets = [0, 0], sizes = [8, 256], strides = [1, 1]} : vector<8x1024xf32> to vector<8x256xf32>
    %88 = arith.negf %87 : vector<8x256xf32>
    %89 = math.exp %88 : vector<8x256xf32>
    %cst_77 = arith.constant 1.000000e+00 : f32
    %90 = vector.broadcast %cst_77 : f32 to vector<8x256xf32>
    %91 = arith.addf %90, %89 : vector<8x256xf32>
    %92 = arith.divf %90, %91 : vector<8x256xf32>
    %93 = vector.extract_strided_slice %86 {offsets = [0, 256], sizes = [8, 256], strides = [1, 1]} : vector<8x1024xf32> to vector<8x256xf32>
    %94 = arith.negf %93 : vector<8x256xf32>
    %95 = math.exp %94 : vector<8x256xf32>
    %cst_78 = arith.constant 1.000000e+00 : f32
    %96 = vector.broadcast %cst_78 : f32 to vector<8x256xf32>
    %97 = arith.addf %96, %95 : vector<8x256xf32>
    %98 = arith.divf %96, %97 : vector<8x256xf32>
    %99 = vector.extract_strided_slice %86 {offsets = [0, 512], sizes = [8, 256], strides = [1, 1]} : vector<8x1024xf32> to vector<8x256xf32>
    %100 = math.tanh %99 : vector<8x256xf32>
    %101 = vector.extract_strided_slice %86 {offsets = [0, 768], sizes = [8, 256], strides = [1, 1]} : vector<8x1024xf32> to vector<8x256xf32>
    %102 = arith.negf %101 : vector<8x256xf32>
    %103 = math.exp %102 : vector<8x256xf32>
    %cst_79 = arith.constant 1.000000e+00 : f32
    %104 = vector.broadcast %cst_79 : f32 to vector<8x256xf32>
    %105 = arith.addf %104, %103 : vector<8x256xf32>
    %106 = arith.divf %104, %105 : vector<8x256xf32>
    %107 = arith.mulf %98, %79 : vector<8x256xf32>
    %108 = arith.mulf %92, %100 : vector<8x256xf32>
    %109 = arith.addf %107, %108 : vector<8x256xf32>
    %110 = math.tanh %109 : vector<8x256xf32>
    %111 = arith.mulf %106, %110 : vector<8x256xf32>
    %c8_80 = arith.constant 8 : index
    %c0_81 = arith.constant 0 : index
    %112 = vector.load %arg9[%c8_80, %c0_81] : memref<64x1024xf32, #tpu.memory_space<vmem>>, vector<8x1024xf32>
    %113 = arith.truncf %111 : vector<8x256xf32> to vector<8x256xbf16>
    %cst_82 = arith.constant dense<0.000000e+00> : vector<8x1024xf32>
    %114 = tpu.matmul %113, %82, %cst_82 {dimension_numbers = #tpu.dot_dimension_numbers<[1], [0], [0], [1], [0, 0, 1, 1], [], []>} : vector<8x256xbf16>, vector<256x1024xbf16>, vector<8x1024xf32> -> vector<8x1024xf32>
    %115 = arith.addf %112, %114 : vector<8x1024xf32>
    %116 = vector.extract_strided_slice %115 {offsets = [0, 0], sizes = [8, 256], strides = [1, 1]} : vector<8x1024xf32> to vector<8x256xf32>
    %117 = arith.negf %116 : vector<8x256xf32>
    %118 = math.exp %117 : vector<8x256xf32>
    %cst_83 = arith.constant 1.000000e+00 : f32
    %119 = vector.broadcast %cst_83 : f32 to vector<8x256xf32>
    %120 = arith.addf %119, %118 : vector<8x256xf32>
    %121 = arith.divf %119, %120 : vector<8x256xf32>
    %122 = vector.extract_strided_slice %115 {offsets = [0, 256], sizes = [8, 256], strides = [1, 1]} : vector<8x1024xf32> to vector<8x256xf32>
    %123 = arith.negf %122 : vector<8x256xf32>
    %124 = math.exp %123 : vector<8x256xf32>
    %cst_84 = arith.constant 1.000000e+00 : f32
    %125 = vector.broadcast %cst_84 : f32 to vector<8x256xf32>
    %126 = arith.addf %125, %124 : vector<8x256xf32>
    %127 = arith.divf %125, %126 : vector<8x256xf32>
    %128 = vector.extract_strided_slice %115 {offsets = [0, 512], sizes = [8, 256], strides = [1, 1]} : vector<8x1024xf32> to vector<8x256xf32>
    %129 = math.tanh %128 : vector<8x256xf32>
    %130 = vector.extract_strided_slice %115 {offsets = [0, 768], sizes = [8, 256], strides = [1, 1]} : vector<8x1024xf32> to vector<8x256xf32>
    %131 = arith.negf %130 : vector<8x256xf32>
    %132 = math.exp %131 : vector<8x256xf32>
    %cst_85 = arith.constant 1.000000e+00 : f32
    %133 = vector.broadcast %cst_85 : f32 to vector<8x256xf32>
    %134 = arith.addf %133, %132 : vector<8x256xf32>
    %135 = arith.divf %133, %134 : vector<8x256xf32>
    %136 = arith.mulf %127, %109 : vector<8x256xf32>
    %137 = arith.mulf %121, %129 : vector<8x256xf32>
    %138 = arith.addf %136, %137 : vector<8x256xf32>
    %139 = math.tanh %138 : vector<8x256xf32>
    %140 = arith.mulf %135, %139 : vector<8x256xf32>
    %c16_86 = arith.constant 16 : index
    %c0_87 = arith.constant 0 : index
    %141 = vector.load %arg9[%c16_86, %c0_87] : memref<64x1024xf32, #tpu.memory_space<vmem>>, vector<8x1024xf32>
    %142 = arith.truncf %140 : vector<8x256xf32> to vector<8x256xbf16>
    %cst_88 = arith.constant dense<0.000000e+00> : vector<8x1024xf32>
    %143 = tpu.matmul %142, %82, %cst_88 {dimension_numbers = #tpu.dot_dimension_numbers<[1], [0], [0], [1], [0, 0, 1, 1], [], []>} : vector<8x256xbf16>, vector<256x1024xbf16>, vector<8x1024xf32> -> vector<8x1024xf32>
    %144 = arith.addf %141, %143 : vector<8x1024xf32>
    %145 = vector.extract_strided_slice %144 {offsets = [0, 0], sizes = [8, 256], strides = [1, 1]} : vector<8x1024xf32> to vector<8x256xf32>
    %146 = arith.negf %145 : vector<8x256xf32>
    %147 = math.exp %146 : vector<8x256xf32>
    %cst_89 = arith.constant 1.000000e+00 : f32
    %148 = vector.broadcast %cst_89 : f32 to vector<8x256xf32>
    %149 = arith.addf %148, %147 : vector<8x256xf32>
    %150 = arith.divf %148, %149 : vector<8x256xf32>
    %151 = vector.extract_strided_slice %144 {offsets = [0, 256], sizes = [8, 256], strides = [1, 1]} : vector<8x1024xf32> to vector<8x256xf32>
    %152 = arith.negf %151 : vector<8x256xf32>
    %153 = math.exp %152 : vector<8x256xf32>
    %cst_90 = arith.constant 1.000000e+00 : f32
    %154 = vector.broadcast %cst_90 : f32 to vector<8x256xf32>
    %155 = arith.addf %154, %153 : vector<8x256xf32>
    %156 = arith.divf %154, %155 : vector<8x256xf32>
    %157 = vector.extract_strided_slice %144 {offsets = [0, 512], sizes = [8, 256], strides = [1, 1]} : vector<8x1024xf32> to vector<8x256xf32>
    %158 = math.tanh %157 : vector<8x256xf32>
    %159 = vector.extract_strided_slice %144 {offsets = [0, 768], sizes = [8, 256], strides = [1, 1]} : vector<8x1024xf32> to vector<8x256xf32>
    %160 = arith.negf %159 : vector<8x256xf32>
    %161 = math.exp %160 : vector<8x256xf32>
    %cst_91 = arith.constant 1.000000e+00 : f32
    %162 = vector.broadcast %cst_91 : f32 to vector<8x256xf32>
    %163 = arith.addf %162, %161 : vector<8x256xf32>
    %164 = arith.divf %162, %163 : vector<8x256xf32>
    %165 = arith.mulf %156, %138 : vector<8x256xf32>
    %166 = arith.mulf %150, %158 : vector<8x256xf32>
    %167 = arith.addf %165, %166 : vector<8x256xf32>
    %168 = math.tanh %167 : vector<8x256xf32>
    %169 = arith.mulf %164, %168 : vector<8x256xf32>
    %c24_92 = arith.constant 24 : index
    %c0_93 = arith.constant 0 : index
    %170 = vector.load %arg9[%c24_92, %c0_93] : memref<64x1024xf32, #tpu.memory_space<vmem>>, vector<8x1024xf32>
    %171 = arith.truncf %169 : vector<8x256xf32> to vector<8x256xbf16>
    %cst_94 = arith.constant dense<0.000000e+00> : vector<8x1024xf32>
    %172 = tpu.matmul %171, %82, %cst_94 {dimension_numbers = #tpu.dot_dimension_numbers<[1], [0], [0], [1], [0, 0, 1, 1], [], []>} : vector<8x256xbf16>, vector<256x1024xbf16>, vector<8x1024xf32> -> vector<8x1024xf32>
    %173 = arith.addf %170, %172 : vector<8x1024xf32>
    %174 = vector.extract_strided_slice %173 {offsets = [0, 0], sizes = [8, 256], strides = [1, 1]} : vector<8x1024xf32> to vector<8x256xf32>
    %175 = arith.negf %174 : vector<8x256xf32>
    %176 = math.exp %175 : vector<8x256xf32>
    %cst_95 = arith.constant 1.000000e+00 : f32
    %177 = vector.broadcast %cst_95 : f32 to vector<8x256xf32>
    %178 = arith.addf %177, %176 : vector<8x256xf32>
    %179 = arith.divf %177, %178 : vector<8x256xf32>
    %180 = vector.extract_strided_slice %173 {offsets = [0, 256], sizes = [8, 256], strides = [1, 1]} : vector<8x1024xf32> to vector<8x256xf32>
    %181 = arith.negf %180 : vector<8x256xf32>
    %182 = math.exp %181 : vector<8x256xf32>
    %cst_96 = arith.constant 1.000000e+00 : f32
    %183 = vector.broadcast %cst_96 : f32 to vector<8x256xf32>
    %184 = arith.addf %183, %182 : vector<8x256xf32>
    %185 = arith.divf %183, %184 : vector<8x256xf32>
    %186 = vector.extract_strided_slice %173 {offsets = [0, 512], sizes = [8, 256], strides = [1, 1]} : vector<8x1024xf32> to vector<8x256xf32>
    %187 = math.tanh %186 : vector<8x256xf32>
    %188 = vector.extract_strided_slice %173 {offsets = [0, 768], sizes = [8, 256], strides = [1, 1]} : vector<8x1024xf32> to vector<8x256xf32>
    %189 = arith.negf %188 : vector<8x256xf32>
    %190 = math.exp %189 : vector<8x256xf32>
    %cst_97 = arith.constant 1.000000e+00 : f32
    %191 = vector.broadcast %cst_97 : f32 to vector<8x256xf32>
    %192 = arith.addf %191, %190 : vector<8x256xf32>
    %193 = arith.divf %191, %192 : vector<8x256xf32>
    %194 = arith.mulf %185, %167 : vector<8x256xf32>
    %195 = arith.mulf %179, %187 : vector<8x256xf32>
    %196 = arith.addf %194, %195 : vector<8x256xf32>
    %197 = math.tanh %196 : vector<8x256xf32>
    %198 = arith.mulf %193, %197 : vector<8x256xf32>
    %c32_98 = arith.constant 32 : index
    %c0_99 = arith.constant 0 : index
    %199 = vector.load %arg9[%c32_98, %c0_99] : memref<64x1024xf32, #tpu.memory_space<vmem>>, vector<8x1024xf32>
    %200 = arith.truncf %198 : vector<8x256xf32> to vector<8x256xbf16>
    %cst_100 = arith.constant dense<0.000000e+00> : vector<8x1024xf32>
    %201 = tpu.matmul %200, %82, %cst_100 {dimension_numbers = #tpu.dot_dimension_numbers<[1], [0], [0], [1], [0, 0, 1, 1], [], []>} : vector<8x256xbf16>, vector<256x1024xbf16>, vector<8x1024xf32> -> vector<8x1024xf32>
    %202 = arith.addf %199, %201 : vector<8x1024xf32>
    %203 = vector.extract_strided_slice %202 {offsets = [0, 0], sizes = [8, 256], strides = [1, 1]} : vector<8x1024xf32> to vector<8x256xf32>
    %204 = arith.negf %203 : vector<8x256xf32>
    %205 = math.exp %204 : vector<8x256xf32>
    %cst_101 = arith.constant 1.000000e+00 : f32
    %206 = vector.broadcast %cst_101 : f32 to vector<8x256xf32>
    %207 = arith.addf %206, %205 : vector<8x256xf32>
    %208 = arith.divf %206, %207 : vector<8x256xf32>
    %209 = vector.extract_strided_slice %202 {offsets = [0, 256], sizes = [8, 256], strides = [1, 1]} : vector<8x1024xf32> to vector<8x256xf32>
    %210 = arith.negf %209 : vector<8x256xf32>
    %211 = math.exp %210 : vector<8x256xf32>
    %cst_102 = arith.constant 1.000000e+00 : f32
    %212 = vector.broadcast %cst_102 : f32 to vector<8x256xf32>
    %213 = arith.addf %212, %211 : vector<8x256xf32>
    %214 = arith.divf %212, %213 : vector<8x256xf32>
    %215 = vector.extract_strided_slice %202 {offsets = [0, 512], sizes = [8, 256], strides = [1, 1]} : vector<8x1024xf32> to vector<8x256xf32>
    %216 = math.tanh %215 : vector<8x256xf32>
    %217 = vector.extract_strided_slice %202 {offsets = [0, 768], sizes = [8, 256], strides = [1, 1]} : vector<8x1024xf32> to vector<8x256xf32>
    %218 = arith.negf %217 : vector<8x256xf32>
    %219 = math.exp %218 : vector<8x256xf32>
    %cst_103 = arith.constant 1.000000e+00 : f32
    %220 = vector.broadcast %cst_103 : f32 to vector<8x256xf32>
    %221 = arith.addf %220, %219 : vector<8x256xf32>
    %222 = arith.divf %220, %221 : vector<8x256xf32>
    %223 = arith.mulf %214, %196 : vector<8x256xf32>
    %224 = arith.mulf %208, %216 : vector<8x256xf32>
    %225 = arith.addf %223, %224 : vector<8x256xf32>
    %226 = math.tanh %225 : vector<8x256xf32>
    %227 = arith.mulf %222, %226 : vector<8x256xf32>
    %c40_104 = arith.constant 40 : index
    %c0_105 = arith.constant 0 : index
    %228 = vector.load %arg9[%c40_104, %c0_105] : memref<64x1024xf32, #tpu.memory_space<vmem>>, vector<8x1024xf32>
    %229 = arith.truncf %227 : vector<8x256xf32> to vector<8x256xbf16>
    %cst_106 = arith.constant dense<0.000000e+00> : vector<8x1024xf32>
    %230 = tpu.matmul %229, %82, %cst_106 {dimension_numbers = #tpu.dot_dimension_numbers<[1], [0], [0], [1], [0, 0, 1, 1], [], []>} : vector<8x256xbf16>, vector<256x1024xbf16>, vector<8x1024xf32> -> vector<8x1024xf32>
    %231 = arith.addf %228, %230 : vector<8x1024xf32>
    %232 = vector.extract_strided_slice %231 {offsets = [0, 0], sizes = [8, 256], strides = [1, 1]} : vector<8x1024xf32> to vector<8x256xf32>
    %233 = arith.negf %232 : vector<8x256xf32>
    %234 = math.exp %233 : vector<8x256xf32>
    %cst_107 = arith.constant 1.000000e+00 : f32
    %235 = vector.broadcast %cst_107 : f32 to vector<8x256xf32>
    %236 = arith.addf %235, %234 : vector<8x256xf32>
    %237 = arith.divf %235, %236 : vector<8x256xf32>
    %238 = vector.extract_strided_slice %231 {offsets = [0, 256], sizes = [8, 256], strides = [1, 1]} : vector<8x1024xf32> to vector<8x256xf32>
    %239 = arith.negf %238 : vector<8x256xf32>
    %240 = math.exp %239 : vector<8x256xf32>
    %cst_108 = arith.constant 1.000000e+00 : f32
    %241 = vector.broadcast %cst_108 : f32 to vector<8x256xf32>
    %242 = arith.addf %241, %240 : vector<8x256xf32>
    %243 = arith.divf %241, %242 : vector<8x256xf32>
    %244 = vector.extract_strided_slice %231 {offsets = [0, 512], sizes = [8, 256], strides = [1, 1]} : vector<8x1024xf32> to vector<8x256xf32>
    %245 = math.tanh %244 : vector<8x256xf32>
    %246 = vector.extract_strided_slice %231 {offsets = [0, 768], sizes = [8, 256], strides = [1, 1]} : vector<8x1024xf32> to vector<8x256xf32>
    %247 = arith.negf %246 : vector<8x256xf32>
    %248 = math.exp %247 : vector<8x256xf32>
    %cst_109 = arith.constant 1.000000e+00 : f32
    %249 = vector.broadcast %cst_109 : f32 to vector<8x256xf32>
    %250 = arith.addf %249, %248 : vector<8x256xf32>
    %251 = arith.divf %249, %250 : vector<8x256xf32>
    %252 = arith.mulf %243, %225 : vector<8x256xf32>
    %253 = arith.mulf %237, %245 : vector<8x256xf32>
    %254 = arith.addf %252, %253 : vector<8x256xf32>
    %255 = math.tanh %254 : vector<8x256xf32>
    %256 = arith.mulf %251, %255 : vector<8x256xf32>
    %c48_110 = arith.constant 48 : index
    %c0_111 = arith.constant 0 : index
    %257 = vector.load %arg9[%c48_110, %c0_111] : memref<64x1024xf32, #tpu.memory_space<vmem>>, vector<8x1024xf32>
    %258 = arith.truncf %256 : vector<8x256xf32> to vector<8x256xbf16>
    %cst_112 = arith.constant dense<0.000000e+00> : vector<8x1024xf32>
    %259 = tpu.matmul %258, %82, %cst_112 {dimension_numbers = #tpu.dot_dimension_numbers<[1], [0], [0], [1], [0, 0, 1, 1], [], []>} : vector<8x256xbf16>, vector<256x1024xbf16>, vector<8x1024xf32> -> vector<8x1024xf32>
    %260 = arith.addf %257, %259 : vector<8x1024xf32>
    %261 = vector.extract_strided_slice %260 {offsets = [0, 0], sizes = [8, 256], strides = [1, 1]} : vector<8x1024xf32> to vector<8x256xf32>
    %262 = arith.negf %261 : vector<8x256xf32>
    %263 = math.exp %262 : vector<8x256xf32>
    %cst_113 = arith.constant 1.000000e+00 : f32
    %264 = vector.broadcast %cst_113 : f32 to vector<8x256xf32>
    %265 = arith.addf %264, %263 : vector<8x256xf32>
    %266 = arith.divf %264, %265 : vector<8x256xf32>
    %267 = vector.extract_strided_slice %260 {offsets = [0, 256], sizes = [8, 256], strides = [1, 1]} : vector<8x1024xf32> to vector<8x256xf32>
    %268 = arith.negf %267 : vector<8x256xf32>
    %269 = math.exp %268 : vector<8x256xf32>
    %cst_114 = arith.constant 1.000000e+00 : f32
    %270 = vector.broadcast %cst_114 : f32 to vector<8x256xf32>
    %271 = arith.addf %270, %269 : vector<8x256xf32>
    %272 = arith.divf %270, %271 : vector<8x256xf32>
    %273 = vector.extract_strided_slice %260 {offsets = [0, 512], sizes = [8, 256], strides = [1, 1]} : vector<8x1024xf32> to vector<8x256xf32>
    %274 = math.tanh %273 : vector<8x256xf32>
    %275 = vector.extract_strided_slice %260 {offsets = [0, 768], sizes = [8, 256], strides = [1, 1]} : vector<8x1024xf32> to vector<8x256xf32>
    %276 = arith.negf %275 : vector<8x256xf32>
    %277 = math.exp %276 : vector<8x256xf32>
    %cst_115 = arith.constant 1.000000e+00 : f32
    %278 = vector.broadcast %cst_115 : f32 to vector<8x256xf32>
    %279 = arith.addf %278, %277 : vector<8x256xf32>
    %280 = arith.divf %278, %279 : vector<8x256xf32>
    %281 = arith.mulf %272, %254 : vector<8x256xf32>
    %282 = arith.mulf %266, %274 : vector<8x256xf32>
    %283 = arith.addf %281, %282 : vector<8x256xf32>
    %284 = math.tanh %283 : vector<8x256xf32>
    %285 = arith.mulf %280, %284 : vector<8x256xf32>
    %c56_116 = arith.constant 56 : index
    %c0_117 = arith.constant 0 : index
    %286 = vector.load %arg9[%c56_116, %c0_117] : memref<64x1024xf32, #tpu.memory_space<vmem>>, vector<8x1024xf32>
    %287 = arith.truncf %285 : vector<8x256xf32> to vector<8x256xbf16>
    %cst_118 = arith.constant dense<0.000000e+00> : vector<8x1024xf32>
    %288 = tpu.matmul %287, %82, %cst_118 {dimension_numbers = #tpu.dot_dimension_numbers<[1], [0], [0], [1], [0, 0, 1, 1], [], []>} : vector<8x256xbf16>, vector<256x1024xbf16>, vector<8x1024xf32> -> vector<8x1024xf32>
    %289 = arith.addf %286, %288 : vector<8x1024xf32>
    %290 = vector.extract_strided_slice %289 {offsets = [0, 0], sizes = [8, 256], strides = [1, 1]} : vector<8x1024xf32> to vector<8x256xf32>
    %291 = arith.negf %290 : vector<8x256xf32>
    %292 = math.exp %291 : vector<8x256xf32>
    %cst_119 = arith.constant 1.000000e+00 : f32
    %293 = vector.broadcast %cst_119 : f32 to vector<8x256xf32>
    %294 = arith.addf %293, %292 : vector<8x256xf32>
    %295 = arith.divf %293, %294 : vector<8x256xf32>
    %296 = vector.extract_strided_slice %289 {offsets = [0, 256], sizes = [8, 256], strides = [1, 1]} : vector<8x1024xf32> to vector<8x256xf32>
    %297 = arith.negf %296 : vector<8x256xf32>
    %298 = math.exp %297 : vector<8x256xf32>
    %cst_120 = arith.constant 1.000000e+00 : f32
    %299 = vector.broadcast %cst_120 : f32 to vector<8x256xf32>
    %300 = arith.addf %299, %298 : vector<8x256xf32>
    %301 = arith.divf %299, %300 : vector<8x256xf32>
    %302 = vector.extract_strided_slice %289 {offsets = [0, 512], sizes = [8, 256], strides = [1, 1]} : vector<8x1024xf32> to vector<8x256xf32>
    %303 = math.tanh %302 : vector<8x256xf32>
    %304 = vector.extract_strided_slice %289 {offsets = [0, 768], sizes = [8, 256], strides = [1, 1]} : vector<8x1024xf32> to vector<8x256xf32>
    %305 = arith.negf %304 : vector<8x256xf32>
    %306 = math.exp %305 : vector<8x256xf32>
    %cst_121 = arith.constant 1.000000e+00 : f32
    %307 = vector.broadcast %cst_121 : f32 to vector<8x256xf32>
    %308 = arith.addf %307, %306 : vector<8x256xf32>
    %309 = arith.divf %307, %308 : vector<8x256xf32>
    %310 = arith.mulf %301, %283 : vector<8x256xf32>
    %311 = arith.mulf %295, %303 : vector<8x256xf32>
    %312 = arith.addf %310, %311 : vector<8x256xf32>
    %313 = math.tanh %312 : vector<8x256xf32>
    %314 = arith.mulf %309, %313 : vector<8x256xf32>
    %c1_i32_122 = arith.constant 1 : i32
    %315 = tpu.memref_slice %arg12[%c1_i32_122] : memref<2x!tpu.dma_semaphore, #tpu.memory_space<semaphore_mem>> -> memref<1x!tpu.dma_semaphore, #tpu.memory_space<semaphore_mem>>
    %316 = tpu.memref_squeeze %315 : memref<1x!tpu.dma_semaphore, #tpu.memory_space<semaphore_mem>> -> memref<!tpu.dma_semaphore, #tpu.memory_space<semaphore_mem>>
    tpu.wait_dma2 semaphore(%316 : memref<!tpu.dma_semaphore, #tpu.memory_space<semaphore_mem>>) src(%arg5 : memref<256x128xbf16, #tpu.memory_space<any>>) dst(%arg11 : memref<256x128xbf16, #tpu.memory_space<vmem>>)
    %317 = arith.truncf %314 : vector<8x256xf32> to vector<8x256xbf16>
    %c0_123 = arith.constant 0 : index
    %c0_124 = arith.constant 0 : index
    %318 = vector.load %arg11[%c0_123, %c0_124] : memref<256x128xbf16, #tpu.memory_space<vmem>>, vector<256x128xbf16>
    %cst_125 = arith.constant dense<0.000000e+00> : vector<8x128xf32>
    %319 = tpu.matmul %317, %318, %cst_125 {dimension_numbers = #tpu.dot_dimension_numbers<[1], [0], [0], [1], [0, 0, 1, 1], [], []>} : vector<8x256xbf16>, vector<256x128xbf16>, vector<8x128xf32> -> vector<8x128xf32>
    %c0_126 = arith.constant 0 : index
    %c0_127 = arith.constant 0 : index
    %320 = vector.load %arg6[%c0_126, %c0_127] : memref<1x128xf32, #tpu.memory_space<vmem>>, vector<1x128xf32>
    %321 = vector.broadcast %320 : vector<1x128xf32> to vector<8x128xf32>
    %322 = arith.addf %319, %321 : vector<8x128xf32>
    %323 = arith.negf %322 : vector<8x128xf32>
    %324 = math.exp %323 : vector<8x128xf32>
    %cst_128 = arith.constant 1.000000e+00 : f32
    %325 = vector.broadcast %cst_128 : f32 to vector<8x128xf32>
    %326 = arith.addf %325, %324 : vector<8x128xf32>
    %327 = arith.divf %325, %326 : vector<8x128xf32>
    %c0_129 = arith.constant 0 : index
    %c0_130 = arith.constant 0 : index
    %328 = vector.load %arg7[%c0_129, %c0_130] : memref<8x128xf32, #tpu.memory_space<vmem>>, vector<8x128xf32>
    tpu.vector_store %arg7[%c0_129, %c0_130], %327 {strides = array<i32>} : memref<8x128xf32, #tpu.memory_space<vmem>>, vector<8x128xf32>,
    return
  }
}

</mosaic_0001>

<llo_original>
// kernel: lstm_forward_pallas.1
$region0: #{lstm_forward_pallas.1}
  #allocation0 [shape = 'u32[]', space=smem, size = 0x4, offset = 0x4, fixed_abs, tag = 'smem constant byte address 0x4 - core index']
  #allocation1 [shape = 'u32[144,128]{1,0:T(1,128)}', space=vmem, size = 0x12000, scoped, tag = 'internal scratch']
  #allocation2 [shape = 'f32[64,128]{1,0:T(8,128)}', space=vmem, size = 0x8000, scoped, tag = 'scratch operand']
  #allocation3 [shape = 'f32[64,1024]{1,0:T(8,128)}', space=vmem, size = 0x40000, scoped, tag = 'scratch operand']
  #allocation4 [shape = 'bf16[256,1024]{1,0:T(8,128)(2,1)}', space=vmem, size = 0x80000, scoped, tag = 'scratch operand']
  #allocation5 [shape = 'bf16[256,128]{1,0:T(8,128)(2,1)}', space=vmem, size = 0x10000, scoped, tag = 'scratch operand']
  #allocation6 [shape = 's32[2]{0}', space=sflag, size = 0x8, scoped, tag = 'scratch operand']
  #allocation7 [shape = 's32[1]{0}', space=sflag, size = 0x4, scoped, tag = 'scoped memory for lstm_forward_pallas.1']
  #allocation8 [shape = 'u8[1024]{0}', space=smem, size = 0x400, scoped, tag = 'prefetched SMEM operand 0']
  #allocation14 [shape = 's32[]', space=sflag, size = 0x4, offset = 0, fixed_abs, tag = 'sflag constant byte address 0x0 - dummy sync flag']
  #allocation15 [shape = 's32[]', space=sflag, size = 0x4, offset = 0, fixed_abs, tag = 'sflag constant byte address 0x0 - dummy sync flag']
  #allocation16 [shape = 'u32[]', space=smem, size = 0x4, offset = 0x44, fixed_abs, tag = 'smem constant byte address 0x44 - assertion arg 0']
  #allocation17 [shape = 'u32[]', space=smem, size = 0x4, offset = 0x48, fixed_abs, tag = 'smem constant byte address 0x48 - assertion arg 1']
  #allocation18 [shape = 's32[]', space=sflag, size = 0x4, offset = 0, fixed_abs, tag = 'sflag constant byte address 0x0 - dummy sync flag']
  #allocation19 [shape = 's32[]', space=sflag, size = 0x4, offset = 0, fixed_abs, tag = 'sflag constant byte address 0x0 - dummy sync flag']
  %s0 = inlined_call_operand.hbm [shape: s32[2,8], index: 0, kind: input, shape index: {}]
  %s1 = inlined_call_operand.hbm [shape: f32[32,128], index: 1, kind: input, shape index: {}]
  %s2 = inlined_call_operand.hbm [shape: bf16[128,1024], index: 2, kind: input, shape index: {}]
  %s3 = inlined_call_operand.hbm [shape: bf16[256,1024], index: 3, kind: input, shape index: {}]
  %s4 = inlined_call_operand.hbm [shape: f32[1,1024], index: 4, kind: input, shape index: {}]
  %s5 = inlined_call_operand.hbm [shape: bf16[256,128], index: 5, kind: input, shape index: {}]
  %s6 = inlined_call_operand.vmem [shape: f32[1,128], index: 6, kind: input, shape index: {}]
  %s7 = inlined_call_operand.vmem [shape: f32[8,128], index: 7, kind: output, shape index: {}]
  %s8 = sld [smem:[#allocation0]]
  $region46: #{lstm_forward_pallas.1} parent=0
    _
  %s10 = ssub.s32 1, %s8
  %s11 = scalar_select 0, %s10, %s8
  %13 = dma.hbm_to_smem %s0, 32, [#allocation8], [#allocation7]
  %14 = dma.done [#allocation7], 32
  %15 = sfence
  $region1: #{lstm_forward_pallas.1} parent=0
    #allocation9 [shape = 'u8[16384]{0}', space=vmem, size = 0x4000, scoped, tag = 'input window, operand 1, single buffered']
    #allocation10 [shape = 's32[1]{0}', space=sflag, size = 0x4, scoped, tag = 'scoped memory for lstm_forward_pallas.1']
    #allocation11 [shape = 'u8[262144]{0}', space=vmem, size = 0x40000, scoped, tag = 'input window, operand 2, single buffered']
    #allocation12 [shape = 's32[1]{0}', space=sflag, size = 0x4, scoped, tag = 'scoped memory for lstm_forward_pallas.1']
    #allocation13 [shape = 'u8[4096]{0}', space=vmem, size = 0x1000, scoped, tag = 'input window, operand 4, single buffered']
    %16 = vsyncpa [#allocation10], 0
    %17 = vsyncpa [#allocation12], 0
    // Predicated region
    $region2: #{lstm_forward_pallas.1} parent=1 // pred_check
      _
    $region3: #{lstm_forward_pallas.1} parent=1 // pred_check_branch
      %19 = sbr.rel (0) target = $region5
    $region4: #{lstm_forward_pallas.1} parent=1 // pred_region
      %s21 = ssub.s32 512, 512
      %22 = vsyncadd [#allocation10], %s21
      %s23 = sshll.u32 [#allocation9], 4
      %s24 = int_to_ptr.vmem [resolvable:$true] %s23
      %29 = dma.hbm_to_vmem [thread:$0]  %s1, 512, %s24, [#allocation10], 128, 128, 8
    $region5: #{lstm_forward_pallas.1} parent=1 // pred_fallthru
      _
    // Predicated region
    $region6: #{lstm_forward_pallas.1} parent=1 // pred_check
      _
    $region7: #{lstm_forward_pallas.1} parent=1 // pred_check_branch
      %31 = sbr.rel (0) target = $region9
    $region8: #{lstm_forward_pallas.1} parent=1 // pred_region
      %s33 = ssub.s32 8192, 8192
      %34 = vsyncadd [#allocation12], %s33
      %s35 = sshll.u32 [#allocation11], 4
      %s36 = int_to_ptr.vmem [resolvable:$true] %s35
      %41 = dma.hbm_to_vmem [thread:$0]  %s2, 8192, %s36, [#allocation12], 512, 512, 32
    $region9: #{lstm_forward_pallas.1} parent=1 // pred_fallthru
      _
    // Predicated region
    $region10: #{lstm_forward_pallas.1} parent=1 // pred_check
      _
    $region11: #{lstm_forward_pallas.1} parent=1 // pred_check_branch
      %43 = sbr.rel (0) target = $region13
    $region12: #{lstm_forward_pallas.1} parent=1 // pred_region
      %s45 = ssub.s32 128, 128
      %46 = vsyncadd [#allocation12], %s45
      %s48 = sshll.u32 [#allocation13], 4
      %s49 = int_to_ptr.vmem [resolvable:$true] %s48
      %51 = dma.hbm_to_vmem [thread:$0]  %s4, 128, %s49, [#allocation12]
    $region13: #{lstm_forward_pallas.1} parent=1 // pred_fallthru
      _
    // Predicated region
    $region14: #{lstm_forward_pallas.1} parent=1 // pred_check
      _
    $region15: #{lstm_forward_pallas.1} parent=1 // pred_check_branch
      %53 = sbr.rel (0) target = $region17
    $region16: #{lstm_forward_pallas.1} parent=1 // pred_region
      _
    $region17: #{lstm_forward_pallas.1} parent=1 // pred_fallthru
      _
    // Predicated region
    $region18: #{lstm_forward_pallas.1} parent=1 // pred_check
      _
    $region19: #{lstm_forward_pallas.1} parent=1 // pred_check_branch
      %55 = sbr.rel (0) target = $region21
    $region20: #{lstm_forward_pallas.1} parent=1 // pred_region
      %56 = dma.done [#allocation10], 512
    $region21: #{lstm_forward_pallas.1} parent=1 // pred_fallthru
      _
    // Predicated region
    $region22: #{lstm_forward_pallas.1} parent=1 // pred_check
      _
    $region23: #{lstm_forward_pallas.1} parent=1 // pred_check_branch
      %58 = sbr.rel (0) target = $region25
    $region24: #{lstm_forward_pallas.1} parent=1 // pred_region
      %59 = dma.done [#allocation12], 8192
    $region25: #{lstm_forward_pallas.1} parent=1 // pred_fallthru
      _
    // Predicated region
    $region26: #{lstm_forward_pallas.1} parent=1 // pred_check
      _
    $region27: #{lstm_forward_pallas.1} parent=1 // pred_check_branch
      %61 = sbr.rel (0) target = $region29
    $region28: #{lstm_forward_pallas.1} parent=1 // pred_region
      %62 = dma.done [#allocation12], 128
    $region29: #{lstm_forward_pallas.1} parent=1 // pred_fallthru
      _
    // Predicated region
    $region30: #{lstm_forward_pallas.1} parent=1 // pred_check
      _
    $region31: #{lstm_forward_pallas.1} parent=1 // pred_check_branch
      %65 = sbr.rel target = $region33
    $region32: #{lstm_forward_pallas.1} parent=1 // pred_region
      %66 = sst [smem:[#allocation16]] [#allocation15]
      %67 = sst [smem:[#allocation17]] [#allocation14]
    $region33: #{lstm_forward_pallas.1} parent=1 // pred_fallthru
      _
    %69 = shalt.err (0)
    %s71 = sshll.u32 [#allocation4], 4
    %s72 = int_to_ptr.vmem [resolvable:$true] %s71
    %74 = dma.hbm_to_vmem [thread:$0]  %s3, 16384, %s72, [#allocation6]
    %s75 = scalar_lea.sflag [#allocation6], 1
    // Predicated region
    $region34: #{lstm_forward_pallas.1} parent=1 // pred_check
      _
    $region35: #{lstm_forward_pallas.1} parent=1 // pred_check_branch
      %77 = sbr.rel target = $region37
    $region36: #{lstm_forward_pallas.1} parent=1 // pred_region
      %78 = sst [smem:[#allocation16]] [#allocation19]
      %79 = sst [smem:[#allocation17]] [#allocation18]
    $region37: #{lstm_forward_pallas.1} parent=1 // pred_fallthru
      _
    %81 = shalt.err (0)
    %s83 = sshll.u32 [#allocation5], 4
    %s84 = int_to_ptr.vmem [resolvable:$true] %s83
    %86 = dma.hbm_to_vmem [thread:$0]  %s5, 2048, %s84, %s75
    %87 = vst [vmem:[#allocation2] sm:$0xff] 0.0
    %88 = vst [vmem:[#allocation2 + $0x8] sm:$0xff] 0.0
    %89 = vst [vmem:[#allocation2 + $0x10] sm:$0xff] 0.0
    %90 = vst [vmem:[#allocation2 + $0x18] sm:$0xff] 0.0
    %91 = vst [vmem:[#allocation2 + $0x20] sm:$0xff] 0.0
    %92 = vst [vmem:[#allocation2 + $0x28] sm:$0xff] 0.0
    %93 = vst [vmem:[#allocation2 + $0x30] sm:$0xff] 0.0
    %94 = vst [vmem:[#allocation2 + $0x38] sm:$0xff] 0.0
    %s95 = sld [smem:[#allocation8]]
    %s96 = scalar_lea.vmem [#allocation9], %s95
    %v97 = vld [vmem:[%s96] sm:$0x1]
    %98 = vst [vmem:[#allocation2] sm:$0x1] %v97
    %s99 = sld [smem:[#allocation8 + $0x80]]
    %s100 = scalar_lea.vmem [#allocation9], %s99
    %v101 = vld [vmem:[%s100] sm:$0x1]
    %102 = vst [vmem:[#allocation2 + $0x1] sm:$0x1] %v101
    %s103 = sld [smem:[#allocation8 + $0x1]]
    %s104 = scalar_lea.vmem [#allocation9], %s103
    %v105 = vld [vmem:[%s104] sm:$0x1]
    %106 = vst [vmem:[#allocation2 + $0x8] sm:$0x1] %v105
    %s107 = sld [smem:[#allocation8 + $0x81]]
    %s108 = scalar_lea.vmem [#allocation9], %s107
    %v109 = vld [vmem:[%s108] sm:$0x1]
    %110 = vst [vmem:[#allocation2 + $0x9] sm:$0x1] %v109
    %s111 = sld [smem:[#allocation8 + $0x2]]
    %s112 = scalar_lea.vmem [#allocation9], %s111
    %v113 = vld [vmem:[%s112] sm:$0x1]
    %114 = vst [vmem:[#allocation2 + $0x10] sm:$0x1] %v113
    %s115 = sld [smem:[#allocation8 + $0x82]]
    %s116 = scalar_lea.vmem [#allocation9], %s115
    %v117 = vld [vmem:[%s116] sm:$0x1]
    %118 = vst [vmem:[#allocation2 + $0x11] sm:$0x1] %v117
    %s119 = sld [smem:[#allocation8 + $0x3]]
    %s120 = scalar_lea.vmem [#allocation9], %s119
    %v121 = vld [vmem:[%s120] sm:$0x1]
    %122 = vst [vmem:[#allocation2 + $0x18] sm:$0x1] %v121
    %s123 = sld [smem:[#allocation8 + $0x83]]
    %s124 = scalar_lea.vmem [#allocation9], %s123
    %v125 = vld [vmem:[%s124] sm:$0x1]
    %126 = vst [vmem:[#allocation2 + $0x19] sm:$0x1] %v125
    %s127 = sld [smem:[#allocation8 + $0x4]]
    %s128 = scalar_lea.vmem [#allocation9], %s127
    %v129 = vld [vmem:[%s128] sm:$0x1]
    %130 = vst [vmem:[#allocation2 + $0x20] sm:$0x1] %v129
    %s131 = sld [smem:[#allocation8 + $0x84]]
    %s132 = scalar_lea.vmem [#allocation9], %s131
    %v133 = vld [vmem:[%s132] sm:$0x1]
    %134 = vst [vmem:[#allocation2 + $0x21] sm:$0x1] %v133
    %s135 = sld [smem:[#allocation8 + $0x5]]
    %s136 = scalar_lea.vmem [#allocation9], %s135
    %v137 = vld [vmem:[%s136] sm:$0x1]
    %138 = vst [vmem:[#allocation2 + $0x28] sm:$0x1] %v137
    %s139 = sld [smem:[#allocation8 + $0x85]]
    %s140 = scalar_lea.vmem [#allocation9], %s139
    %v141 = vld [vmem:[%s140] sm:$0x1]
    %142 = vst [vmem:[#allocation2 + $0x29] sm:$0x1] %v141
    %s143 = sld [smem:[#allocation8 + $0x6]]
    %s144 = scalar_lea.vmem [#allocation9], %s143
    %v145 = vld [vmem:[%s144] sm:$0x1]
    %146 = vst [vmem:[#allocation2 + $0x30] sm:$0x1] %v145
    %s147 = sld [smem:[#allocation8 + $0x86]]
    %s148 = scalar_lea.vmem [#allocation9], %s147
    %v149 = vld [vmem:[%s148] sm:$0x1]
    %150 = vst [vmem:[#allocation2 + $0x31] sm:$0x1] %v149
    %s151 = sld [smem:[#allocation8 + $0x7]]
    %s152 = scalar_lea.vmem [#allocation9], %s151
    %v153 = vld [vmem:[%s152] sm:$0x1]
    %154 = vst [vmem:[#allocation2 + $0x38] sm:$0x1] %v153
    %s155 = sld [smem:[#allocation8 + $0x87]]
    %s156 = scalar_lea.vmem [#allocation9], %s155
    %v157 = vld [vmem:[%s156] sm:$0x1]
    %158 = vst [vmem:[#allocation2 + $0x39] sm:$0x1] %v157
    %v159 = vld [vmem:[#allocation2] sm:$0xff]
    %v160 = vld [vmem:[#allocation2 + $0x8] sm:$0xff]
    %v161 = vld [vmem:[#allocation2 + $0x10] sm:$0xff]
    %v162 = vld [vmem:[#allocation2 + $0x18] sm:$0xff]
    %v163 = vld [vmem:[#allocation2 + $0x20] sm:$0xff]
    %v164 = vld [vmem:[#allocation2 + $0x28] sm:$0xff]
    %v165 = vld [vmem:[#allocation2 + $0x30] sm:$0xff]
    %v166 = vld [vmem:[#allocation2 + $0x38] sm:$0xff]
    %v167 = vpack.c.bf16 %v160, %v159
    %v168 = vpack.c.bf16 %v162, %v161
    %v169 = vpack.c.bf16 %v164, %v163
    %v170 = vpack.c.bf16 %v166, %v165
    %v171 = vld [vmem:[#allocation11] sm:$0xff]
    %v172 = vld [vmem:[#allocation11 + $0x8] sm:$0xff]
    %v173 = vld [vmem:[#allocation11 + $0x10] sm:$0xff]
    %v174 = vld [vmem:[#allocation11 + $0x18] sm:$0xff]
    %v175 = vld [vmem:[#allocation11 + $0x20] sm:$0xff]
    %v176 = vld [vmem:[#allocation11 + $0x28] sm:$0xff]
    %v177 = vld [vmem:[#allocation11 + $0x30] sm:$0xff]
    %v178 = vld [vmem:[#allocation11 + $0x38] sm:$0xff]
    %v179 = vld [vmem:[#allocation11 + $0x40] sm:$0xff]
    %v180 = vld [vmem:[#allocation11 + $0x48] sm:$0xff]
    %v181 = vld [vmem:[#allocation11 + $0x50] sm:$0xff]
    %v182 = vld [vmem:[#allocation11 + $0x58] sm:$0xff]
    %v183 = vld [vmem:[#allocation11 + $0x60] sm:$0xff]
    %v184 = vld [vmem:[#allocation11 + $0x68] sm:$0xff]
    %v185 = vld [vmem:[#allocation11 + $0x70] sm:$0xff]
    %v186 = vld [vmem:[#allocation11 + $0x78] sm:$0xff]
    %v187 = vld [vmem:[#allocation11 + $0x80] sm:$0xff]
    %v188 = vld [vmem:[#allocation11 + $0x88] sm:$0xff]
    %v189 = vld [vmem:[#allocation11 + $0x90] sm:$0xff]
    %v190 = vld [vmem:[#allocation11 + $0x98] sm:$0xff]
    %v191 = vld [vmem:[#allocation11 + $0xa0] sm:$0xff]
    %v192 = vld [vmem:[#allocation11 + $0xa8] sm:$0xff]
    %v193 = vld [vmem:[#allocation11 + $0xb0] sm:$0xff]
    %v194 = vld [vmem:[#allocation11 + $0xb8] sm:$0xff]
    %v195 = vld [vmem:[#allocation11 + $0xc0] sm:$0xff]
    %v196 = vld [vmem:[#allocation11 + $0xc8] sm:$0xff]
    %v197 = vld [vmem:[#allocation11 + $0xd0] sm:$0xff]
    %v198 = vld [vmem:[#allocation11 + $0xd8] sm:$0xff]
    %v199 = vld [vmem:[#allocation11 + $0xe0] sm:$0xff]
    %v200 = vld [vmem:[#allocation11 + $0xe8] sm:$0xff]
    %v201 = vld [vmem:[#allocation11 + $0xf0] sm:$0xff]
    %v202 = vld [vmem:[#allocation11 + $0xf8] sm:$0xff]
    %v203 = vld [vmem:[#allocation11 + $0x100] sm:$0xff]
    %v204 = vld [vmem:[#allocation11 + $0x108] sm:$0xff]
    %v205 = vld [vmem:[#allocation11 + $0x110] sm:$0xff]
    %v206 = vld [vmem:[#allocation11 + $0x118] sm:$0xff]
    %v207 = vld [vmem:[#allocation11 + $0x120] sm:$0xff]
    %v208 = vld [vmem:[#allocation11 + $0x128] sm:$0xff]
    %v209 = vld [vmem:[#allocation11 + $0x130] sm:$0xff]
    %v210 = vld [vmem:[#allocation11 + $0x138] sm:$0xff]
    %v211 = vld [vmem:[#allocation11 + $0x140] sm:$0xff]
    %v212 = vld [vmem:[#allocation11 + $0x148] sm:$0xff]
    %v213 = vld [vmem:[#allocation11 + $0x150] sm:$0xff]
    %v214 = vld [vmem:[#allocation11 + $0x158] sm:$0xff]
    %v215 = vld [vmem:[#allocation11 + $0x160] sm:$0xff]
    %v216 = vld [vmem:[#allocation11 + $0x168] sm:$0xff]
    %v217 = vld [vmem:[#allocation11 + $0x170] sm:$0xff]
    %v218 = vld [vmem:[#allocation11 + $0x178] sm:$0xff]
    %v219 = vld [vmem:[#allocation11 + $0x180] sm:$0xff]
    %v220 = vld [vmem:[#allocation11 + $0x188] sm:$0xff]
    %v221 = vld [vmem:[#allocation11 + $0x190] sm:$0xff]
    %v222 = vld [vmem:[#allocation11 + $0x198] sm:$0xff]
    %v223 = vld [vmem:[#allocation11 + $0x1a0] sm:$0xff]
    %v224 = vld [vmem:[#allocation11 + $0x1a8] sm:$0xff]
    %v225 = vld [vmem:[#allocation11 + $0x1b0] sm:$0xff]
    %v226 = vld [vmem:[#allocation11 + $0x1b8] sm:$0xff]
    %v227 = vld [vmem:[#allocation11 + $0x1c0] sm:$0xff]
    %v228 = vld [vmem:[#allocation11 + $0x1c8] sm:$0xff]
    %v229 = vld [vmem:[#allocation11 + $0x1d0] sm:$0xff]
    %v230 = vld [vmem:[#allocation11 + $0x1d8] sm:$0xff]
    %v231 = vld [vmem:[#allocation11 + $0x1e0] sm:$0xff]
    %v232 = vld [vmem:[#allocation11 + $0x1e8] sm:$0xff]
    %v233 = vld [vmem:[#allocation11 + $0x1f0] sm:$0xff]
    %v234 = vld [vmem:[#allocation11 + $0x1f8] sm:$0xff]
    %v235 = vld [vmem:[#allocation13] sm:$0xff]
    %v237 = vlaneseq
    %v238 = vshrl.u32 %v237, 7
    %v239 = vsub.s32 0, %v238
    %v240 = vrot.slane %v235, %v239
    %v241 = vlaneseq
    %v242 = vshrl.u32 %v241, 7
    %v243 = vsub.s32 1, %v242
    %v244 = vrot.slane %v235, %v243
    %v245 = vlaneseq
    %v246 = vshrl.u32 %v245, 7
    %v247 = vsub.s32 2, %v246
    %v248 = vrot.slane %v235, %v247
    %v249 = vlaneseq
    %v250 = vshrl.u32 %v249, 7
    %v251 = vsub.s32 3, %v250
    %v252 = vrot.slane %v235, %v251
    %v253 = vlaneseq
    %v254 = vshrl.u32 %v253, 7
    %v255 = vsub.s32 4, %v254
    %v256 = vrot.slane %v235, %v255
    %v257 = vlaneseq
    %v258 = vshrl.u32 %v257, 7
    %v259 = vsub.s32 5, %v258
    %v260 = vrot.slane %v235, %v259
    %v261 = vlaneseq
    %v262 = vshrl.u32 %v261, 7
    %v263 = vsub.s32 6, %v262
    %v264 = vrot.slane %v235, %v263
    %v265 = vlaneseq
    %v266 = vshrl.u32 %v265, 7
    %v267 = vsub.s32 7, %v266
    %v268 = vrot.slane %v235, %v267
    %v341 = vunpack.c.l.b16 %v171
    %v342 = vunpack.c.h.b16 %v171
    %v343 = vunpack.c.l.b16 %v172
    %v344 = vunpack.c.h.b16 %v172
    %v345 = vunpack.c.l.b16 %v173
    %v346 = vunpack.c.h.b16 %v173
    %v347 = vunpack.c.l.b16 %v174
    %v348 = vunpack.c.h.b16 %v174
    %v349 = vunpack.c.l.b16 %v175
    %v350 = vunpack.c.h.b16 %v175
    %v351 = vunpack.c.l.b16 %v176
    %v352 = vunpack.c.h.b16 %v176
    %v353 = vunpack.c.l.b16 %v177
    %v354 = vunpack.c.h.b16 %v177
    %v355 = vunpack.c.l.b16 %v178
    %v356 = vunpack.c.h.b16 %v178
    %v357 = vunpack.c.l.b16 %v179
    %v358 = vunpack.c.h.b16 %v179
    %v359 = vunpack.c.l.b16 %v180
    %v360 = vunpack.c.h.b16 %v180
    %v361 = vunpack.c.l.b16 %v181
    %v362 = vunpack.c.h.b16 %v181
    %v363 = vunpack.c.l.b16 %v182
    %v364 = vunpack.c.h.b16 %v182
    %v365 = vunpack.c.l.b16 %v183
    %v366 = vunpack.c.h.b16 %v183
    %v367 = vunpack.c.l.b16 %v184
    %v368 = vunpack.c.h.b16 %v184
    %v369 = vunpack.c.l.b16 %v185
    %v370 = vunpack.c.h.b16 %v185
    %v371 = vunpack.c.l.b16 %v186
    %v372 = vunpack.c.h.b16 %v186
    %v373 = vunpack.c.l.b16 %v187
    %v374 = vunpack.c.h.b16 %v187
    %v375 = vunpack.c.l.b16 %v188
    %v376 = vunpack.c.h.b16 %v188
    %v377 = vunpack.c.l.b16 %v189
    %v378 = vunpack.c.h.b16 %v189
    %v379 = vunpack.c.l.b16 %v190
    %v380 = vunpack.c.h.b16 %v190
    %v381 = vunpack.c.l.b16 %v191
    %v382 = vunpack.c.h.b16 %v191
    %v383 = vunpack.c.l.b16 %v192
    %v384 = vunpack.c.h.b16 %v192
    %v385 = vunpack.c.l.b16 %v193
    %v386 = vunpack.c.h.b16 %v193
    %v387 = vunpack.c.l.b16 %v194
    %v388 = vunpack.c.h.b16 %v194
    %v389 = vunpack.c.l.b16 %v195
    %v390 = vunpack.c.h.b16 %v195
    %v391 = vunpack.c.l.b16 %v196
    %v392 = vunpack.c.h.b16 %v196
    %v393 = vunpack.c.l.b16 %v197
    %v394 = vunpack.c.h.b16 %v197
    %v395 = vunpack.c.l.b16 %v198
    %v396 = vunpack.c.h.b16 %v198
    %v397 = vunpack.c.l.b16 %v199
    %v398 = vunpack.c.h.b16 %v199
    %v399 = vunpack.c.l.b16 %v200
    %v400 = vunpack.c.h.b16 %v200
    %v401 = vunpack.c.l.b16 %v201
    %v402 = vunpack.c.h.b16 %v201
    %v403 = vunpack.c.l.b16 %v202
    %v404 = vunpack.c.h.b16 %v202
    %v405 = vunpack.c.l.b16 %v203
    %v406 = vunpack.c.h.b16 %v203
    %v407 = vunpack.c.l.b16 %v204
    %v408 = vunpack.c.h.b16 %v204
    %v409 = vunpack.c.l.b16 %v205
    %v410 = vunpack.c.h.b16 %v205
    %v411 = vunpack.c.l.b16 %v206
    %v412 = vunpack.c.h.b16 %v206
    %v413 = vunpack.c.l.b16 %v207
    %v414 = vunpack.c.h.b16 %v207
    %v415 = vunpack.c.l.b16 %v208
    %v416 = vunpack.c.h.b16 %v208
    %v417 = vunpack.c.l.b16 %v209
    %v418 = vunpack.c.h.b16 %v209
    %v419 = vunpack.c.l.b16 %v210
    %v420 = vunpack.c.h.b16 %v210
    %v421 = vunpack.c.l.b16 %v211
    %v422 = vunpack.c.h.b16 %v211
    %v423 = vunpack.c.l.b16 %v212
    %v424 = vunpack.c.h.b16 %v212
    %v425 = vunpack.c.l.b16 %v213
    %v426 = vunpack.c.h.b16 %v213
    %v427 = vunpack.c.l.b16 %v214
    %v428 = vunpack.c.h.b16 %v214
    %v429 = vunpack.c.l.b16 %v215
    %v430 = vunpack.c.h.b16 %v215
    %v431 = vunpack.c.l.b16 %v216
    %v432 = vunpack.c.h.b16 %v216
    %v433 = vunpack.c.l.b16 %v217
    %v434 = vunpack.c.h.b16 %v217
    %v435 = vunpack.c.l.b16 %v218
    %v436 = vunpack.c.h.b16 %v218
    %v437 = vunpack.c.l.b16 %v219
    %v438 = vunpack.c.h.b16 %v219
    %v439 = vunpack.c.l.b16 %v220
    %v440 = vunpack.c.h.b16 %v220
    %v441 = vunpack.c.l.b16 %v221
    %v442 = vunpack.c.h.b16 %v221
    %v443 = vunpack.c.l.b16 %v222
    %v444 = vunpack.c.h.b16 %v222
    %v445 = vunpack.c.l.b16 %v223
    %v446 = vunpack.c.h.b16 %v223
    %v447 = vunpack.c.l.b16 %v224
    %v448 = vunpack.c.h.b16 %v224
    %v449 = vunpack.c.l.b16 %v225
    %v450 = vunpack.c.h.b16 %v225
    %v451 = vunpack.c.l.b16 %v226
    %v452 = vunpack.c.h.b16 %v226
    %v453 = vunpack.c.l.b16 %v227
    %v454 = vunpack.c.h.b16 %v227
    %v455 = vunpack.c.l.b16 %v228
    %v456 = vunpack.c.h.b16 %v228
    %v457 = vunpack.c.l.b16 %v229
    %v458 = vunpack.c.h.b16 %v229
    %v459 = vunpack.c.l.b16 %v230
    %v460 = vunpack.c.h.b16 %v230
    %v461 = vunpack.c.l.b16 %v231
    %v462 = vunpack.c.h.b16 %v231
    %v463 = vunpack.c.l.b16 %v232
    %v464 = vunpack.c.h.b16 %v232
    %v465 = vunpack.c.l.b16 %v233
    %v466 = vunpack.c.h.b16 %v233
    %v467 = vunpack.c.l.b16 %v234
    %v468 = vunpack.c.h.b16 %v234
    %v469 = vpack.c.b16 %v349, %v341
    %v470 = vpack.c.b16 %v350, %v342
    %v471 = vpack.c.b16 %v351, %v343
    %v472 = vpack.c.b16 %v352, %v344
    %v473 = vpack.c.b16 %v353, %v345
    %v474 = vpack.c.b16 %v354, %v346
    %v475 = vpack.c.b16 %v355, %v347
    %v476 = vpack.c.b16 %v356, %v348
    %v477 = vpack.c.b16 %v365, %v357
    %v478 = vpack.c.b16 %v366, %v358
    %v479 = vpack.c.b16 %v367, %v359
    %v480 = vpack.c.b16 %v368, %v360
    %v481 = vpack.c.b16 %v369, %v361
    %v482 = vpack.c.b16 %v370, %v362
    %v483 = vpack.c.b16 %v371, %v363
    %v484 = vpack.c.b16 %v372, %v364
    %v485 = vpack.c.b16 %v381, %v373
    %v486 = vpack.c.b16 %v382, %v374
    %v487 = vpack.c.b16 %v383, %v375
    %v488 = vpack.c.b16 %v384, %v376
    %v489 = vpack.c.b16 %v385, %v377
    %v490 = vpack.c.b16 %v386, %v378
    %v491 = vpack.c.b16 %v387, %v379
    %v492 = vpack.c.b16 %v388, %v380
    %v493 = vpack.c.b16 %v397, %v389
    %v494 = vpack.c.b16 %v398, %v390
    %v495 = vpack.c.b16 %v399, %v391
    %v496 = vpack.c.b16 %v400, %v392
    %v497 = vpack.c.b16 %v401, %v393
    %v498 = vpack.c.b16 %v402, %v394
    %v499 = vpack.c.b16 %v403, %v395
    %v500 = vpack.c.b16 %v404, %v396
    %v501 = vpack.c.b16 %v413, %v405
    %v502 = vpack.c.b16 %v414, %v406
    %v503 = vpack.c.b16 %v415, %v407
    %v504 = vpack.c.b16 %v416, %v408
    %v505 = vpack.c.b16 %v417, %v409
    %v506 = vpack.c.b16 %v418, %v410
    %v507 = vpack.c.b16 %v419, %v411
    %v508 = vpack.c.b16 %v420, %v412
    %v509 = vpack.c.b16 %v429, %v421
    %v510 = vpack.c.b16 %v430, %v422
    %v511 = vpack.c.b16 %v431, %v423
    %v512 = vpack.c.b16 %v432, %v424
    %v513 = vpack.c.b16 %v433, %v425
    %v514 = vpack.c.b16 %v434, %v426
    %v515 = vpack.c.b16 %v435, %v427
    %v516 = vpack.c.b16 %v436, %v428
    %v517 = vpack.c.b16 %v445, %v437
    %v518 = vpack.c.b16 %v446, %v438
    %v519 = vpack.c.b16 %v447, %v439
    %v520 = vpack.c.b16 %v448, %v440
    %v521 = vpack.c.b16 %v449, %v441
    %v522 = vpack.c.b16 %v450, %v442
    %v523 = vpack.c.b16 %v451, %v443
    %v524 = vpack.c.b16 %v452, %v444
    %v525 = vpack.c.b16 %v461, %v453
    %v526 = vpack.c.b16 %v462, %v454
    %v527 = vpack.c.b16 %v463, %v455
    %v528 = vpack.c.b16 %v464, %v456
    %v529 = vpack.c.b16 %v465, %v457
    %v530 = vpack.c.b16 %v466, %v458
    %v531 = vpack.c.b16 %v467, %v459
    %v532 = vpack.c.b16 %v468, %v460
    %597 = vmatprep.subr.bf16.mxu0 %v526
    %598 = vmatpush1.bf16.msra.mxu0 %v525
    %599 = vmatprep.subr.bf16.mxu0 %v518
    %600 = vmatpush1.bf16.msra.mxu0 %v517
    %601 = vmatprep.subr.bf16.mxu0 %v510
    %602 = vmatpush1.bf16.msra.mxu0 %v509
    %603 = vmatprep.subr.bf16.mxu0 %v502
    %604 = vmatpush1.bf16.msra.mxu0 %v501
    %605 = vmatprep.subr.bf16.mxu0 %v494
    %606 = vmatpush1.bf16.msra.mxu0 %v493
    %607 = vmatprep.subr.bf16.mxu0 %v486
    %608 = vmatpush1.bf16.msra.mxu0 %v485
    %609 = vmatprep.subr.bf16.mxu0 %v478
    %610 = vmatpush1.bf16.msra.mxu0 %v477
    %611 = vmatprep.subr.bf16.mxu0 %v470
    %612 = vmatpush1.bf16.msra.mxu0 %v469
    %613 = vmatprep.subr.bf16.mxu0 0
    %614 = vmatpush2.bf16.msra.mxu0 0
    %615 = vmatprep.subr.bf16.mxu0 0
    %616 = vmatpush2.bf16.msra.mxu0 0
    %617 = vmatprep.subr.bf16.mxu0 0
    %618 = vmatpush2.bf16.msra.mxu0 0
    %619 = vmatprep.subr.bf16.mxu0 0
    %620 = vmatpush2.bf16.msra.mxu0 0
    %621 = vmatprep.subr.bf16.mxu0 0
    %622 = vmatpush2.bf16.msra.mxu0 0
    %623 = vmatprep.subr.bf16.mxu0 0
    %624 = vmatpush2.bf16.msra.mxu0 0
    %625 = vmatprep.subr.bf16.mxu0 0
    %626 = vmatpush2.bf16.msra.mxu0 0
    %627 = vmatprep.subr.bf16.mxu0 0
    %628 = vmatpush2.bf16.msra.mxu0 0
    %629 = vmatprep.mubr.bf16.mxu0 0
    %630 = vmatmul.mubr.bf16.gmra.mxu0 %v167
    %v631 = vpop.f32.mrf.mxu0
    %v632 = vadd.f32 %v240, %v631
    %v633 = vpop.f32.mrf.mxu0
    %v634 = vadd.f32 %v244, %v633
    %v635 = vpop.f32.mrf.mxu0
    %v636 = vadd.f32 %v240, %v635
    %v637 = vpop.f32.mrf.mxu0
    %v638 = vadd.f32 %v244, %v637
    %639 = vmatprep.mubr.bf16.mxu0 0
    %640 = vmatmul.mubr.bf16.gmra.mxu0 %v168
    %v641 = vpop.f32.mrf.mxu0
    %v642 = vadd.f32 %v240, %v641
    %v643 = vpop.f32.mrf.mxu0
    %v644 = vadd.f32 %v244, %v643
    %v645 = vpop.f32.mrf.mxu0
    %v646 = vadd.f32 %v240, %v645
    %v647 = vpop.f32.mrf.mxu0
    %v648 = vadd.f32 %v244, %v647
    %649 = vmatprep.mubr.bf16.mxu0 0
    %650 = vmatmul.mubr.bf16.gmra.mxu0 %v169
    %v651 = vpop.f32.mrf.mxu0
    %v652 = vadd.f32 %v240, %v651
    %v653 = vpop.f32.mrf.mxu0
    %v654 = vadd.f32 %v244, %v653
    %v655 = vpop.f32.mrf.mxu0
    %v656 = vadd.f32 %v240, %v655
    %v657 = vpop.f32.mrf.mxu0
    %v658 = vadd.f32 %v244, %v657
    %659 = vmatprep.mubr.bf16.mxu0 0
    %660 = vmatmul.mubr.bf16.gmra.mxu0 %v170
    %v661 = vpop.f32.mrf.mxu0
    %v662 = vadd.f32 %v240, %v661
    %v663 = vpop.f32.mrf.mxu0
    %v664 = vadd.f32 %v244, %v663
    %v665 = vpop.f32.mrf.mxu0
    %v666 = vadd.f32 %v240, %v665
    %v667 = vpop.f32.mrf.mxu0
    %v668 = vadd.f32 %v244, %v667
    %669 = vdwg.mxu0
    %670 = vmatprep.subr.bf16.mxu0 %v528
    %671 = vmatpush1.bf16.msra.mxu0 %v527
    %672 = vmatprep.subr.bf16.mxu0 %v520
    %673 = vmatpush1.bf16.msra.mxu0 %v519
    %674 = vmatprep.subr.bf16.mxu0 %v512
    %675 = vmatpush1.bf16.msra.mxu0 %v511
    %676 = vmatprep.subr.bf16.mxu0 %v504
    %677 = vmatpush1.bf16.msra.mxu0 %v503
    %678 = vmatprep.subr.bf16.mxu0 %v496
    %679 = vmatpush1.bf16.msra.mxu0 %v495
    %680 = vmatprep.subr.bf16.mxu0 %v488
    %681 = vmatpush1.bf16.msra.mxu0 %v487
    %682 = vmatprep.subr.bf16.mxu0 %v480
    %683 = vmatpush1.bf16.msra.mxu0 %v479
    %684 = vmatprep.subr.bf16.mxu0 %v472
    %685 = vmatpush1.bf16.msra.mxu0 %v471
    %686 = vmatprep.subr.bf16.mxu0 0
    %687 = vmatpush2.bf16.msra.mxu0 0
    %688 = vmatprep.subr.bf16.mxu0 0
    %689 = vmatpush2.bf16.msra.mxu0 0
    %690 = vmatprep.subr.bf16.mxu0 0
    %691 = vmatpush2.bf16.msra.mxu0 0
    %692 = vmatprep.subr.bf16.mxu0 0
    %693 = vmatpush2.bf16.msra.mxu0 0
    %694 = vmatprep.subr.bf16.mxu0 0
    %695 = vmatpush2.bf16.msra.mxu0 0
    %696 = vmatprep.subr.bf16.mxu0 0
    %697 = vmatpush2.bf16.msra.mxu0 0
    %698 = vmatprep.subr.bf16.mxu0 0
    %699 = vmatpush2.bf16.msra.mxu0 0
    %700 = vmatprep.subr.bf16.mxu0 0
    %701 = vmatpush2.bf16.msra.mxu0 0
    %702 = vmatprep.mubr.bf16.mxu0 0
    %703 = vmatmul.mubr.bf16.gmra.mxu0 %v167
    %v704 = vpop.f32.mrf.mxu0
    %v705 = vadd.f32 %v248, %v704
    %v706 = vpop.f32.mrf.mxu0
    %v707 = vadd.f32 %v252, %v706
    %v708 = vpop.f32.mrf.mxu0
    %v709 = vadd.f32 %v248, %v708
    %v710 = vpop.f32.mrf.mxu0
    %v711 = vadd.f32 %v252, %v710
    %712 = vmatprep.mubr.bf16.mxu0 0
    %713 = vmatmul.mubr.bf16.gmra.mxu0 %v168
    %v714 = vpop.f32.mrf.mxu0
    %v715 = vadd.f32 %v248, %v714
    %v716 = vpop.f32.mrf.mxu0
    %v717 = vadd.f32 %v252, %v716
    %v718 = vpop.f32.mrf.mxu0
    %v719 = vadd.f32 %v248, %v718
    %v720 = vpop.f32.mrf.mxu0
    %v721 = vadd.f32 %v252, %v720
    %722 = vmatprep.mubr.bf16.mxu0 0
    %723 = vmatmul.mubr.bf16.gmra.mxu0 %v169
    %v724 = vpop.f32.mrf.mxu0
    %v725 = vadd.f32 %v248, %v724
    %v726 = vpop.f32.mrf.mxu0
    %v727 = vadd.f32 %v252, %v726
    %v728 = vpop.f32.mrf.mxu0
    %v729 = vadd.f32 %v248, %v728
    %v730 = vpop.f32.mrf.mxu0
    %v731 = vadd.f32 %v252, %v730
    %732 = vmatprep.mubr.bf16.mxu0 0
    %733 = vmatmul.mubr.bf16.gmra.mxu0 %v170
    %v734 = vpop.f32.mrf.mxu0
    %v735 = vadd.f32 %v248, %v734
    %v736 = vpop.f32.mrf.mxu0
    %v737 = vadd.f32 %v252, %v736
    %v738 = vpop.f32.mrf.mxu0
    %v739 = vadd.f32 %v248, %v738
    %v740 = vpop.f32.mrf.mxu0
    %v741 = vadd.f32 %v252, %v740
    %742 = vdwg.mxu0
    %743 = vmatprep.subr.bf16.mxu0 %v530
    %744 = vmatpush1.bf16.msra.mxu0 %v529
    %745 = vmatprep.subr.bf16.mxu0 %v522
    %746 = vmatpush1.bf16.msra.mxu0 %v521
    %747 = vmatprep.subr.bf16.mxu0 %v514
    %748 = vmatpush1.bf16.msra.mxu0 %v513
    %749 = vmatprep.subr.bf16.mxu0 %v506
    %750 = vmatpush1.bf16.msra.mxu0 %v505
    %751 = vmatprep.subr.bf16.mxu0 %v498
    %752 = vmatpush1.bf16.msra.mxu0 %v497
    %753 = vmatprep.subr.bf16.mxu0 %v490
    %754 = vmatpush1.bf16.msra.mxu0 %v489
    %755 = vmatprep.subr.bf16.mxu0 %v482
    %756 = vmatpush1.bf16.msra.mxu0 %v481
    %757 = vmatprep.subr.bf16.mxu0 %v474
    %758 = vmatpush1.bf16.msra.mxu0 %v473
    %759 = vmatprep.subr.bf16.mxu0 0
    %760 = vmatpush2.bf16.msra.mxu0 0
    %761 = vmatprep.subr.bf16.mxu0 0
    %762 = vmatpush2.bf16.msra.mxu0 0
    %763 = vmatprep.subr.bf16.mxu0 0
    %764 = vmatpush2.bf16.msra.mxu0 0
    %765 = vmatprep.subr.bf16.mxu0 0
    %766 = vmatpush2.bf16.msra.mxu0 0
    %767 = vmatprep.subr.bf16.mxu0 0
    %768 = vmatpush2.bf16.msra.mxu0 0
    %769 = vmatprep.subr.bf16.mxu0 0
    %770 = vmatpush2.bf16.msra.mxu0 0
    %771 = vmatprep.subr.bf16.mxu0 0
    %772 = vmatpush2.bf16.msra.mxu0 0
    %773 = vmatprep.subr.bf16.mxu0 0
    %774 = vmatpush2.bf16.msra.mxu0 0
    %775 = vmatprep.mubr.bf16.mxu0 0
    %776 = vmatmul.mubr.bf16.gmra.mxu0 %v167
    %v777 = vpop.f32.mrf.mxu0
    %v778 = vadd.f32 %v256, %v777
    %v779 = vpop.f32.mrf.mxu0
    %v780 = vadd.f32 %v260, %v779
    %v781 = vpop.f32.mrf.mxu0
    %v782 = vadd.f32 %v256, %v781
    %v783 = vpop.f32.mrf.mxu0
    %v784 = vadd.f32 %v260, %v783
    %785 = vmatprep.mubr.bf16.mxu0 0
    %786 = vmatmul.mubr.bf16.gmra.mxu0 %v168
    %v787 = vpop.f32.mrf.mxu0
    %v788 = vadd.f32 %v256, %v787
    %v789 = vpop.f32.mrf.mxu0
    %v790 = vadd.f32 %v260, %v789
    %v791 = vpop.f32.mrf.mxu0
    %v792 = vadd.f32 %v256, %v791
    %v793 = vpop.f32.mrf.mxu0
    %v794 = vadd.f32 %v260, %v793
    %795 = vmatprep.mubr.bf16.mxu0 0
    %796 = vmatmul.mubr.bf16.gmra.mxu0 %v169
    %v797 = vpop.f32.mrf.mxu0
    %v798 = vadd.f32 %v256, %v797
    %v799 = vpop.f32.mrf.mxu0
    %v800 = vadd.f32 %v260, %v799
    %v801 = vpop.f32.mrf.mxu0
    %v802 = vadd.f32 %v256, %v801
    %v803 = vpop.f32.mrf.mxu0
    %v804 = vadd.f32 %v260, %v803
    %805 = vmatprep.mubr.bf16.mxu0 0
    %806 = vmatmul.mubr.bf16.gmra.mxu0 %v170
    %v807 = vpop.f32.mrf.mxu0
    %v808 = vadd.f32 %v256, %v807
    %v809 = vpop.f32.mrf.mxu0
    %v810 = vadd.f32 %v260, %v809
    %v811 = vpop.f32.mrf.mxu0
    %v812 = vadd.f32 %v256, %v811
    %v813 = vpop.f32.mrf.mxu0
    %v814 = vadd.f32 %v260, %v813
    %815 = vdwg.mxu0
    %816 = vmatprep.subr.bf16.mxu0 %v532
    %817 = vmatpush1.bf16.msra.mxu0 %v531
    %818 = vmatprep.subr.bf16.mxu0 %v524
    %819 = vmatpush1.bf16.msra.mxu0 %v523
    %820 = vmatprep.subr.bf16.mxu0 %v516
    %821 = vmatpush1.bf16.msra.mxu0 %v515
    %822 = vmatprep.subr.bf16.mxu0 %v508
    %823 = vmatpush1.bf16.msra.mxu0 %v507
    %824 = vmatprep.subr.bf16.mxu0 %v500
    %825 = vmatpush1.bf16.msra.mxu0 %v499
    %826 = vmatprep.subr.bf16.mxu0 %v492
    %827 = vmatpush1.bf16.msra.mxu0 %v491
    %828 = vmatprep.subr.bf16.mxu0 %v484
    %829 = vmatpush1.bf16.msra.mxu0 %v483
    %830 = vmatprep.subr.bf16.mxu0 %v476
    %831 = vmatpush1.bf16.msra.mxu0 %v475
    %832 = vmatprep.subr.bf16.mxu0 0
    %833 = vmatpush2.bf16.msra.mxu0 0
    %834 = vmatprep.subr.bf16.mxu0 0
    %835 = vmatpush2.bf16.msra.mxu0 0
    %836 = vmatprep.subr.bf16.mxu0 0
    %837 = vmatpush2.bf16.msra.mxu0 0
    %838 = vmatprep.subr.bf16.mxu0 0
    %839 = vmatpush2.bf16.msra.mxu0 0
    %840 = vmatprep.subr.bf16.mxu0 0
    %841 = vmatpush2.bf16.msra.mxu0 0
    %842 = vmatprep.subr.bf16.mxu0 0
    %843 = vmatpush2.bf16.msra.mxu0 0
    %844 = vmatprep.subr.bf16.mxu0 0
    %845 = vmatpush2.bf16.msra.mxu0 0
    %846 = vmatprep.subr.bf16.mxu0 0
    %847 = vmatpush2.bf16.msra.mxu0 0
    %848 = vmatprep.mubr.bf16.mxu0 0
    %849 = vmatmul.mubr.bf16.gmra.mxu0 %v167
    %v850 = vpop.f32.mrf.mxu0
    %v851 = vadd.f32 %v264, %v850
    %v852 = vpop.f32.mrf.mxu0
    %v853 = vadd.f32 %v268, %v852
    %v854 = vpop.f32.mrf.mxu0
    %v855 = vadd.f32 %v264, %v854
    %v856 = vpop.f32.mrf.mxu0
    %v857 = vadd.f32 %v268, %v856
    %858 = vmatprep.mubr.bf16.mxu0 0
    %859 = vmatmul.mubr.bf16.gmra.mxu0 %v168
    %v860 = vpop.f32.mrf.mxu0
    %v861 = vadd.f32 %v264, %v860
    %v862 = vpop.f32.mrf.mxu0
    %v863 = vadd.f32 %v268, %v862
    %v864 = vpop.f32.mrf.mxu0
    %v865 = vadd.f32 %v264, %v864
    %v866 = vpop.f32.mrf.mxu0
    %v867 = vadd.f32 %v268, %v866
    %868 = vmatprep.mubr.bf16.mxu0 0
    %869 = vmatmul.mubr.bf16.gmra.mxu0 %v169
    %v870 = vpop.f32.mrf.mxu0
    %v871 = vadd.f32 %v264, %v870
    %v872 = vpop.f32.mrf.mxu0
    %v873 = vadd.f32 %v268, %v872
    %v874 = vpop.f32.mrf.mxu0
    %v875 = vadd.f32 %v264, %v874
    %v876 = vpop.f32.mrf.mxu0
    %v877 = vadd.f32 %v268, %v876
    %878 = vmatprep.mubr.bf16.mxu0 0
    %879 = vmatmul.mubr.bf16.gmra.mxu0 %v170
    %v880 = vpop.f32.mrf.mxu0
    %v881 = vadd.f32 %v264, %v880
    %v882 = vpop.f32.mrf.mxu0
    %v883 = vadd.f32 %v268, %v882
    %v884 = vpop.f32.mrf.mxu0
    %v885 = vadd.f32 %v264, %v884
    %v886 = vpop.f32.mrf.mxu0
    %v887 = vadd.f32 %v268, %v886
    %888 = vdwg.mxu0
    %889 = vst [vmem:[#allocation3] sm:$0xff] %v632
    %890 = vst [vmem:[#allocation3 + $0x8] sm:$0xff] %v634
    %891 = vst [vmem:[#allocation3 + $0x10] sm:$0xff] %v705
    %892 = vst [vmem:[#allocation3 + $0x18] sm:$0xff] %v707
    %893 = vst [vmem:[#allocation3 + $0x20] sm:$0xff] %v778
    %894 = vst [vmem:[#allocation3 + $0x28] sm:$0xff] %v780
    %895 = vst [vmem:[#allocation3 + $0x30] sm:$0xff] %v851
    %896 = vst [vmem:[#allocation3 + $0x38] sm:$0xff] %v853
    %897 = vst [vmem:[#allocation3 + $0x40] sm:$0xff] %v636
    %898 = vst [vmem:[#allocation3 + $0x48] sm:$0xff] %v638
    %899 = vst [vmem:[#allocation3 + $0x50] sm:$0xff] %v709
    %900 = vst [vmem:[#allocation3 + $0x58] sm:$0xff] %v711
    %901 = vst [vmem:[#allocation3 + $0x60] sm:$0xff] %v782
    %902 = vst [vmem:[#allocation3 + $0x68] sm:$0xff] %v784
    %903 = vst [vmem:[#allocation3 + $0x70] sm:$0xff] %v855
    %904 = vst [vmem:[#allocation3 + $0x78] sm:$0xff] %v857
    %905 = vst [vmem:[#allocation3 + $0x80] sm:$0xff] %v642
    %906 = vst [vmem:[#allocation3 + $0x88] sm:$0xff] %v644
    %907 = vst [vmem:[#allocation3 + $0x90] sm:$0xff] %v715
    %908 = vst [vmem:[#allocation3 + $0x98] sm:$0xff] %v717
    %909 = vst [vmem:[#allocation3 + $0xa0] sm:$0xff] %v788
    %910 = vst [vmem:[#allocation3 + $0xa8] sm:$0xff] %v790
    %911 = vst [vmem:[#allocation3 + $0xb0] sm:$0xff] %v861
    %912 = vst [vmem:[#allocation3 + $0xb8] sm:$0xff] %v863
    %913 = vst [vmem:[#allocation3 + $0xc0] sm:$0xff] %v646
    %914 = vst [vmem:[#allocation3 + $0xc8] sm:$0xff] %v648
    %915 = vst [vmem:[#allocation3 + $0xd0] sm:$0xff] %v719
    %916 = vst [vmem:[#allocation3 + $0xd8] sm:$0xff] %v721
    %917 = vst [vmem:[#allocation3 + $0xe0] sm:$0xff] %v792
    %918 = vst [vmem:[#allocation3 + $0xe8] sm:$0xff] %v794
    %919 = vst [vmem:[#allocation3 + $0xf0] sm:$0xff] %v865
    %920 = vst [vmem:[#allocation3 + $0xf8] sm:$0xff] %v867
    %921 = vst [vmem:[#allocation3 + $0x100] sm:$0xff] %v652
    %922 = vst [vmem:[#allocation3 + $0x108] sm:$0xff] %v654
    %923 = vst [vmem:[#allocation3 + $0x110] sm:$0xff] %v725
    %924 = vst [vmem:[#allocation3 + $0x118] sm:$0xff] %v727
    %925 = vst [vmem:[#allocation3 + $0x120] sm:$0xff] %v798
    %926 = vst [vmem:[#allocation3 + $0x128] sm:$0xff] %v800
    %927 = vst [vmem:[#allocation3 + $0x130] sm:$0xff] %v871
    %928 = vst [vmem:[#allocation3 + $0x138] sm:$0xff] %v873
    %929 = vst [vmem:[#allocation3 + $0x140] sm:$0xff] %v656
    %930 = vst [vmem:[#allocation3 + $0x148] sm:$0xff] %v658
    %931 = vst [vmem:[#allocation3 + $0x150] sm:$0xff] %v729
    %932 = vst [vmem:[#allocation3 + $0x158] sm:$0xff] %v731
    %933 = vst [vmem:[#allocation3 + $0x160] sm:$0xff] %v802
    %934 = vst [vmem:[#allocation3 + $0x168] sm:$0xff] %v804
    %935 = vst [vmem:[#allocation3 + $0x170] sm:$0xff] %v875
    %936 = vst [vmem:[#allocation3 + $0x178] sm:$0xff] %v877
    %937 = vst [vmem:[#allocation3 + $0x180] sm:$0xff] %v662
    %938 = vst [vmem:[#allocation3 + $0x188] sm:$0xff] %v664
    %939 = vst [vmem:[#allocation3 + $0x190] sm:$0xff] %v735
    %940 = vst [vmem:[#allocation3 + $0x198] sm:$0xff] %v737
    %941 = vst [vmem:[#allocation3 + $0x1a0] sm:$0xff] %v808
    %942 = vst [vmem:[#allocation3 + $0x1a8] sm:$0xff] %v810
    %943 = vst [vmem:[#allocation3 + $0x1b0] sm:$0xff] %v881
    %944 = vst [vmem:[#allocation3 + $0x1b8] sm:$0xff] %v883
    %945 = vst [vmem:[#allocation3 + $0x1c0] sm:$0xff] %v666
    %946 = vst [vmem:[#allocation3 + $0x1c8] sm:$0xff] %v668
    %947 = vst [vmem:[#allocation3 + $0x1d0] sm:$0xff] %v739
    %948 = vst [vmem:[#allocation3 + $0x1d8] sm:$0xff] %v741
    %949 = vst [vmem:[#allocation3 + $0x1e0] sm:$0xff] %v812
    %950 = vst [vmem:[#allocation3 + $0x1e8] sm:$0xff] %v814
    %951 = vst [vmem:[#allocation3 + $0x1f0] sm:$0xff] %v885
    %952 = vst [vmem:[#allocation3 + $0x1f8] sm:$0xff] %v887
    %s953 = smul.u32 4, 32
    %s954 = smul.u32 %s953, 8
    %s955 = sshll.u32 %s954, 4
    %956 = dma.done [#allocation6], %s955
    %v957 = vld [vmem:[#allocation4] sm:$0xff]
    %v958 = vld [vmem:[#allocation4 + $0x8] sm:$0xff]
    %v959 = vld [vmem:[#allocation4 + $0x10] sm:$0xff]
    %v960 = vld [vmem:[#allocation4 + $0x18] sm:$0xff]
    %v961 = vld [vmem:[#allocation4 + $0x20] sm:$0xff]
    %v962 = vld [vmem:[#allocation4 + $0x28] sm:$0xff]
    %v963 = vld [vmem:[#allocation4 + $0x30] sm:$0xff]
    %v964 = vld [vmem:[#allocation4 + $0x38] sm:$0xff]
    %v965 = vld [vmem:[#allocation4 + $0x40] sm:$0xff]
    %v966 = vld [vmem:[#allocation4 + $0x48] sm:$0xff]
    %v967 = vld [vmem:[#allocation4 + $0x50] sm:$0xff]
    %v968 = vld [vmem:[#allocation4 + $0x58] sm:$0xff]
    %v969 = vld [vmem:[#allocation4 + $0x60] sm:$0xff]
    %v970 = vld [vmem:[#allocation4 + $0x68] sm:$0xff]
    %v971 = vld [vmem:[#allocation4 + $0x70] sm:$0xff]
    %v972 = vld [vmem:[#allocation4 + $0x78] sm:$0xff]
    %v973 = vld [vmem:[#allocation4 + $0x80] sm:$0xff]
    %v974 = vld [vmem:[#allocation4 + $0x88] sm:$0xff]
    %v975 = vld [vmem:[#allocation4 + $0x90] sm:$0xff]
    %v976 = vld [vmem:[#allocation4 + $0x98] sm:$0xff]
    %v977 = vld [vmem:[#allocation4 + $0xa0] sm:$0xff]
    %v978 = vld [vmem:[#allocation4 + $0xa8] sm:$0xff]
    %v979 = vld [vmem:[#allocation4 + $0xb0] sm:$0xff]
    %v980 = vld [vmem:[#allocation4 + $0xb8] sm:$0xff]
    %v981 = vld [vmem:[#allocation4 + $0xc0] sm:$0xff]
    %v982 = vld [vmem:[#allocation4 + $0xc8] sm:$0xff]
    %v983 = vld [vmem:[#allocation4 + $0xd0] sm:$0xff]
    %v984 = vld [vmem:[#allocation4 + $0xd8] sm:$0xff]
    %v985 = vld [vmem:[#allocation4 + $0xe0] sm:$0xff]
    %v986 = vld [vmem:[#allocation4 + $0xe8] sm:$0xff]
    %v987 = vld [vmem:[#allocation4 + $0xf0] sm:$0xff]
    %v988 = vld [vmem:[#allocation4 + $0xf8] sm:$0xff]
    %v989 = vld [vmem:[#allocation4 + $0x100] sm:$0xff]
    %v990 = vld [vmem:[#allocation4 + $0x108] sm:$0xff]
    %v991 = vld [vmem:[#allocation4 + $0x110] sm:$0xff]
    %v992 = vld [vmem:[#allocation4 + $0x118] sm:$0xff]
    %v993 = vld [vmem:[#allocation4 + $0x120] sm:$0xff]
    %v994 = vld [vmem:[#allocation4 + $0x128] sm:$0xff]
    %v995 = vld [vmem:[#allocation4 + $0x130] sm:$0xff]
    %v996 = vld [vmem:[#allocation4 + $0x138] sm:$0xff]
    %v997 = vld [vmem:[#allocation4 + $0x140] sm:$0xff]
    %v998 = vld [vmem:[#allocation4 + $0x148] sm:$0xff]
    %v999 = vld [vmem:[#allocation4 + $0x150] sm:$0xff]
    %v1000 = vld [vmem:[#allocation4 + $0x158] sm:$0xff]
    %v1001 = vld [vmem:[#allocation4 + $0x160] sm:$0xff]
    %v1002 = vld [vmem:[#allocation4 + $0x168] sm:$0xff]
    %v1003 = vld [vmem:[#allocation4 + $0x170] sm:$0xff]
    %v1004 = vld [vmem:[#allocation4 + $0x178] sm:$0xff]
    %v1005 = vld [vmem:[#allocation4 + $0x180] sm:$0xff]
    %v1006 = vld [vmem:[#allocation4 + $0x188] sm:$0xff]
    %v1007 = vld [vmem:[#allocation4 + $0x190] sm:$0xff]
    %v1008 = vld [vmem:[#allocation4 + $0x198] sm:$0xff]
    %v1009 = vld [vmem:[#allocation4 + $0x1a0] sm:$0xff]
    %v1010 = vld [vmem:[#allocation4 + $0x1a8] sm:$0xff]
    %v1011 = vld [vmem:[#allocation4 + $0x1b0] sm:$0xff]
    %v1012 = vld [vmem:[#allocation4 + $0x1b8] sm:$0xff]
    %v1013 = vld [vmem:[#allocation4 + $0x1c0] sm:$0xff]
    %v1014 = vld [vmem:[#allocation4 + $0x1c8] sm:$0xff]
    %v1015 = vld [vmem:[#allocation4 + $0x1d0] sm:$0xff]
    %v1016 = vld [vmem:[#allocation4 + $0x1d8] sm:$0xff]
    %v1017 = vld [vmem:[#allocation4 + $0x1e0] sm:$0xff]
    %v1018 = vld [vmem:[#allocation4 + $0x1e8] sm:$0xff]
    %v1019 = vld [vmem:[#allocation4 + $0x1f0] sm:$0xff]
    %v1020 = vld [vmem:[#allocation4 + $0x1f8] sm:$0xff]
    %v1021 = vld [vmem:[#allocation4 + $0x200] sm:$0xff]
    %v1022 = vld [vmem:[#allocation4 + $0x208] sm:$0xff]
    %v1023 = vld [vmem:[#allocation4 + $0x210] sm:$0xff]
    %v1024 = vld [vmem:[#allocation4 + $0x218] sm:$0xff]
    %v1025 = vld [vmem:[#allocation4 + $0x220] sm:$0xff]
    %v1026 = vld [vmem:[#allocation4 + $0x228] sm:$0xff]
    %v1027 = vld [vmem:[#allocation4 + $0x230] sm:$0xff]
    %v1028 = vld [vmem:[#allocation4 + $0x238] sm:$0xff]
    %v1029 = vld [vmem:[#allocation4 + $0x240] sm:$0xff]
    %v1030 = vld [vmem:[#allocation4 + $0x248] sm:$0xff]
    %v1031 = vld [vmem:[#allocation4 + $0x250] sm:$0xff]
    %v1032 = vld [vmem:[#allocation4 + $0x258] sm:$0xff]
    %v1033 = vld [vmem:[#allocation4 + $0x260] sm:$0xff]
    %v1034 = vld [vmem:[#allocation4 + $0x268] sm:$0xff]
    %v1035 = vld [vmem:[#allocation4 + $0x270] sm:$0xff]
    %v1036 = vld [vmem:[#allocation4 + $0x278] sm:$0xff]
    %v1037 = vld [vmem:[#allocation4 + $0x280] sm:$0xff]
    %v1038 = vld [vmem:[#allocation4 + $0x288] sm:$0xff]
    %v1039 = vld [vmem:[#allocation4 + $0x290] sm:$0xff]
    %v1040 = vld [vmem:[#allocation4 + $0x298] sm:$0xff]
    %v1041 = vld [vmem:[#allocation4 + $0x2a0] sm:$0xff]
    %v1042 = vld [vmem:[#allocation4 + $0x2a8] sm:$0xff]
    %v1043 = vld [vmem:[#allocation4 + $0x2b0] sm:$0xff]
    %v1044 = vld [vmem:[#allocation4 + $0x2b8] sm:$0xff]
    %v1045 = vld [vmem:[#allocation4 + $0x2c0] sm:$0xff]
    %v1046 = vld [vmem:[#allocation4 + $0x2c8] sm:$0xff]
    %v1047 = vld [vmem:[#allocation4 + $0x2d0] sm:$0xff]
    %v1048 = vld [vmem:[#allocation4 + $0x2d8] sm:$0xff]
    %v1049 = vld [vmem:[#allocation4 + $0x2e0] sm:$0xff]
    %v1050 = vld [vmem:[#allocation4 + $0x2e8] sm:$0xff]
    %v1051 = vld [vmem:[#allocation4 + $0x2f0] sm:$0xff]
    %v1052 = vld [vmem:[#allocation4 + $0x2f8] sm:$0xff]
    %v1053 = vld [vmem:[#allocation4 + $0x300] sm:$0xff]
    %v1054 = vld [vmem:[#allocation4 + $0x308] sm:$0xff]
    %v1055 = vld [vmem:[#allocation4 + $0x310] sm:$0xff]
    %v1056 = vld [vmem:[#allocation4 + $0x318] sm:$0xff]
    %v1057 = vld [vmem:[#allocation4 + $0x320] sm:$0xff]
    %v1058 = vld [vmem:[#allocation4 + $0x328] sm:$0xff]
    %v1059 = vld [vmem:[#allocation4 + $0x330] sm:$0xff]
    %v1060 = vld [vmem:[#allocation4 + $0x338] sm:$0xff]
    %v1061 = vld [vmem:[#allocation4 + $0x340] sm:$0xff]
    %v1062 = vld [vmem:[#allocation4 + $0x348] sm:$0xff]
    %v1063 = vld [vmem:[#allocation4 + $0x350] sm:$0xff]
    %v1064 = vld [vmem:[#allocation4 + $0x358] sm:$0xff]
    %v1065 = vld [vmem:[#allocation4 + $0x360] sm:$0xff]
    %v1066 = vld [vmem:[#allocation4 + $0x368] sm:$0xff]
    %v1067 = vld [vmem:[#allocation4 + $0x370] sm:$0xff]
    %v1068 = vld [vmem:[#allocation4 + $0x378] sm:$0xff]
    %v1069 = vld [vmem:[#allocation4 + $0x380] sm:$0xff]
    %v1070 = vld [vmem:[#allocation4 + $0x388] sm:$0xff]
    %v1071 = vld [vmem:[#allocation4 + $0x390] sm:$0xff]
    %v1072 = vld [vmem:[#allocation4 + $0x398] sm:$0xff]
    %v1073 = vld [vmem:[#allocation4 + $0x3a0] sm:$0xff]
    %v1074 = vld [vmem:[#allocation4 + $0x3a8] sm:$0xff]
    %v1075 = vld [vmem:[#allocation4 + $0x3b0] sm:$0xff]
    %v1076 = vld [vmem:[#allocation4 + $0x3b8] sm:$0xff]
    %v1077 = vld [vmem:[#allocation4 + $0x3c0] sm:$0xff]
    %v1078 = vld [vmem:[#allocation4 + $0x3c8] sm:$0xff]
    %v1079 = vld [vmem:[#allocation4 + $0x3d0] sm:$0xff]
    %v1080 = vld [vmem:[#allocation4 + $0x3d8] sm:$0xff]
    %v1081 = vld [vmem:[#allocation4 + $0x3e0] sm:$0xff]
    %v1082 = vld [vmem:[#allocation4 + $0x3e8] sm:$0xff]
    %v1083 = vld [vmem:[#allocation4 + $0x3f0] sm:$0xff]
    %v1084 = vld [vmem:[#allocation4 + $0x3f8] sm:$0xff]
    %v1085 = vld [vmem:[#allocation3] sm:$0xff]
    %v1086 = vld [vmem:[#allocation3 + $0x8] sm:$0xff]
    %v1087 = vld [vmem:[#allocation3 + $0x10] sm:$0xff]
    %v1088 = vld [vmem:[#allocation3 + $0x18] sm:$0xff]
    %v1089 = vld [vmem:[#allocation3 + $0x20] sm:$0xff]
    %v1090 = vld [vmem:[#allocation3 + $0x28] sm:$0xff]
    %v1091 = vld [vmem:[#allocation3 + $0x30] sm:$0xff]
    %v1092 = vld [vmem:[#allocation3 + $0x38] sm:$0xff]
    %v1221 = vunpack.c.l.b16 %v957
    %v1222 = vunpack.c.h.b16 %v957
    %v1223 = vunpack.c.l.b16 %v958
    %v1224 = vunpack.c.h.b16 %v958
    %v1225 = vunpack.c.l.b16 %v959
    %v1226 = vunpack.c.h.b16 %v959
    %v1227 = vunpack.c.l.b16 %v960
    %v1228 = vunpack.c.h.b16 %v960
    %v1229 = vunpack.c.l.b16 %v961
    %v1230 = vunpack.c.h.b16 %v961
    %v1231 = vunpack.c.l.b16 %v962
    %v1232 = vunpack.c.h.b16 %v962
    %v1233 = vunpack.c.l.b16 %v963
    %v1234 = vunpack.c.h.b16 %v963
    %v1235 = vunpack.c.l.b16 %v964
    %v1236 = vunpack.c.h.b16 %v964
    %v1237 = vunpack.c.l.b16 %v965
    %v1238 = vunpack.c.h.b16 %v965
    %v1239 = vunpack.c.l.b16 %v966
    %v1240 = vunpack.c.h.b16 %v966
    %v1241 = vunpack.c.l.b16 %v967
    %v1242 = vunpack.c.h.b16 %v967
    %v1243 = vunpack.c.l.b16 %v968
    %v1244 = vunpack.c.h.b16 %v968
    %v1245 = vunpack.c.l.b16 %v969
    %v1246 = vunpack.c.h.b16 %v969
    %v1247 = vunpack.c.l.b16 %v970
    %v1248 = vunpack.c.h.b16 %v970
    %v1249 = vunpack.c.l.b16 %v971
    %v1250 = vunpack.c.h.b16 %v971
    %v1251 = vunpack.c.l.b16 %v972
    %v1252 = vunpack.c.h.b16 %v972
    %v1253 = vunpack.c.l.b16 %v973
    %v1254 = vunpack.c.h.b16 %v973
    %v1255 = vunpack.c.l.b16 %v974
    %v1256 = vunpack.c.h.b16 %v974
    %v1257 = vunpack.c.l.b16 %v975
    %v1258 = vunpack.c.h.b16 %v975
    %v1259 = vunpack.c.l.b16 %v976
    %v1260 = vunpack.c.h.b16 %v976
    %v1261 = vunpack.c.l.b16 %v977
    %v1262 = vunpack.c.h.b16 %v977
    %v1263 = vunpack.c.l.b16 %v978
    %v1264 = vunpack.c.h.b16 %v978
    %v1265 = vunpack.c.l.b16 %v979
    %v1266 = vunpack.c.h.b16 %v979
    %v1267 = vunpack.c.l.b16 %v980
    %v1268 = vunpack.c.h.b16 %v980
    %v1269 = vunpack.c.l.b16 %v981
    %v1270 = vunpack.c.h.b16 %v981
    %v1271 = vunpack.c.l.b16 %v982
    %v1272 = vunpack.c.h.b16 %v982
    %v1273 = vunpack.c.l.b16 %v983
    %v1274 = vunpack.c.h.b16 %v983
    %v1275 = vunpack.c.l.b16 %v984
    %v1276 = vunpack.c.h.b16 %v984
    %v1277 = vunpack.c.l.b16 %v985
    %v1278 = vunpack.c.h.b16 %v985
    %v1279 = vunpack.c.l.b16 %v986
    %v1280 = vunpack.c.h.b16 %v986
    %v1281 = vunpack.c.l.b16 %v987
    %v1282 = vunpack.c.h.b16 %v987
    %v1283 = vunpack.c.l.b16 %v988
    %v1284 = vunpack.c.h.b16 %v988
    %v1285 = vunpack.c.l.b16 %v989
    %v1286 = vunpack.c.h.b16 %v989
    %v1287 = vunpack.c.l.b16 %v990
    %v1288 = vunpack.c.h.b16 %v990
    %v1289 = vunpack.c.l.b16 %v991
    %v1290 = vunpack.c.h.b16 %v991
    %v1291 = vunpack.c.l.b16 %v992
    %v1292 = vunpack.c.h.b16 %v992
    %v1293 = vunpack.c.l.b16 %v993
    %v1294 = vunpack.c.h.b16 %v993
    %v1295 = vunpack.c.l.b16 %v994
    %v1296 = vunpack.c.h.b16 %v994
    %v1297 = vunpack.c.l.b16 %v995
    %v1298 = vunpack.c.h.b16 %v995
    %v1299 = vunpack.c.l.b16 %v996
    %v1300 = vunpack.c.h.b16 %v996
    %v1301 = vunpack.c.l.b16 %v997
    %v1302 = vunpack.c.h.b16 %v997
    %v1303 = vunpack.c.l.b16 %v998
    %v1304 = vunpack.c.h.b16 %v998
    %v1305 = vunpack.c.l.b16 %v999
    %v1306 = vunpack.c.h.b16 %v999
    %v1307 = vunpack.c.l.b16 %v1000
    %v1308 = vunpack.c.h.b16 %v1000
    %v1309 = vunpack.c.l.b16 %v1001
    %v1310 = vunpack.c.h.b16 %v1001
    %v1311 = vunpack.c.l.b16 %v1002
    %v1312 = vunpack.c.h.b16 %v1002
    %v1313 = vunpack.c.l.b16 %v1003
    %v1314 = vunpack.c.h.b16 %v1003
    %v1315 = vunpack.c.l.b16 %v1004
    %v1316 = vunpack.c.h.b16 %v1004
    %v1317 = vunpack.c.l.b16 %v1005
    %v1318 = vunpack.c.h.b16 %v1005
    %v1319 = vunpack.c.l.b16 %v1006
    %v1320 = vunpack.c.h.b16 %v1006
    %v1321 = vunpack.c.l.b16 %v1007
    %v1322 = vunpack.c.h.b16 %v1007
    %v1323 = vunpack.c.l.b16 %v1008
    %v1324 = vunpack.c.h.b16 %v1008
    %v1325 = vunpack.c.l.b16 %v1009
    %v1326 = vunpack.c.h.b16 %v1009
    %v1327 = vunpack.c.l.b16 %v1010
    %v1328 = vunpack.c.h.b16 %v1010
    %v1329 = vunpack.c.l.b16 %v1011
    %v1330 = vunpack.c.h.b16 %v1011
    %v1331 = vunpack.c.l.b16 %v1012
    %v1332 = vunpack.c.h.b16 %v1012
    %v1333 = vunpack.c.l.b16 %v1013
    %v1334 = vunpack.c.h.b16 %v1013
    %v1335 = vunpack.c.l.b16 %v1014
    %v1336 = vunpack.c.h.b16 %v1014
    %v1337 = vunpack.c.l.b16 %v1015
    %v1338 = vunpack.c.h.b16 %v1015
    %v1339 = vunpack.c.l.b16 %v1016
    %v1340 = vunpack.c.h.b16 %v1016
    %v1341 = vunpack.c.l.b16 %v1017
    %v1342 = vunpack.c.h.b16 %v1017
    %v1343 = vunpack.c.l.b16 %v1018
    %v1344 = vunpack.c.h.b16 %v1018
    %v1345 = vunpack.c.l.b16 %v1019
    %v1346 = vunpack.c.h.b16 %v1019
    %v1347 = vunpack.c.l.b16 %v1020
    %v1348 = vunpack.c.h.b16 %v1020
    %v1349 = vunpack.c.l.b16 %v1021
    %v1350 = vunpack.c.h.b16 %v1021
    %v1351 = vunpack.c.l.b16 %v1022
    %v1352 = vunpack.c.h.b16 %v1022
    %v1353 = vunpack.c.l.b16 %v1023
    %v1354 = vunpack.c.h.b16 %v1023
    %v1355 = vunpack.c.l.b16 %v1024
    %v1356 = vunpack.c.h.b16 %v1024
    %v1357 = vunpack.c.l.b16 %v1025
    %v1358 = vunpack.c.h.b16 %v1025
    %v1359 = vunpack.c.l.b16 %v1026
    %v1360 = vunpack.c.h.b16 %v1026
    %v1361 = vunpack.c.l.b16 %v1027
    %v1362 = vunpack.c.h.b16 %v1027
    %v1363 = vunpack.c.l.b16 %v1028
    %v1364 = vunpack.c.h.b16 %v1028
    %v1365 = vunpack.c.l.b16 %v1029
    %v1366 = vunpack.c.h.b16 %v1029
    %v1367 = vunpack.c.l.b16 %v1030
    %v1368 = vunpack.c.h.b16 %v1030
    %v1369 = vunpack.c.l.b16 %v1031
    %v1370 = vunpack.c.h.b16 %v1031
    %v1371 = vunpack.c.l.b16 %v1032
    %v1372 = vunpack.c.h.b16 %v1032
    %v1373 = vunpack.c.l.b16 %v1033
    %v1374 = vunpack.c.h.b16 %v1033
    %v1375 = vunpack.c.l.b16 %v1034
    %v1376 = vunpack.c.h.b16 %v1034
    %v1377 = vunpack.c.l.b16 %v1035
    %v1378 = vunpack.c.h.b16 %v1035
    %v1379 = vunpack.c.l.b16 %v1036
    %v1380 = vunpack.c.h.b16 %v1036
    %v1381 = vunpack.c.l.b16 %v1037
    %v1382 = vunpack.c.h.b16 %v1037
    %v1383 = vunpack.c.l.b16 %v1038
    %v1384 = vunpack.c.h.b16 %v1038
    %v1385 = vunpack.c.l.b16 %v1039
    %v1386 = vunpack.c.h.b16 %v1039
    %v1387 = vunpack.c.l.b16 %v1040
    %v1388 = vunpack.c.h.b16 %v1040
    %v1389 = vunpack.c.l.b16 %v1041
    %v1390 = vunpack.c.h.b16 %v1041
    %v1391 = vunpack.c.l.b16 %v1042
    %v1392 = vunpack.c.h.b16 %v1042
    %v1393 = vunpack.c.l.b16 %v1043
    %v1394 = vunpack.c.h.b16 %v1043
    %v1395 = vunpack.c.l.b16 %v1044
    %v1396 = vunpack.c.h.b16 %v1044
    %v1397 = vunpack.c.l.b16 %v1045
    %v1398 = vunpack.c.h.b16 %v1045
    %v1399 = vunpack.c.l.b16 %v1046
    %v1400 = vunpack.c.h.b16 %v1046
    %v1401 = vunpack.c.l.b16 %v1047
    %v1402 = vunpack.c.h.b16 %v1047
    %v1403 = vunpack.c.l.b16 %v1048
    %v1404 = vunpack.c.h.b16 %v1048
    %v1405 = vunpack.c.l.b16 %v1049
    %v1406 = vunpack.c.h.b16 %v1049
    %v1407 = vunpack.c.l.b16 %v1050
    %v1408 = vunpack.c.h.b16 %v1050
    %v1409 = vunpack.c.l.b16 %v1051
    %v1410 = vunpack.c.h.b16 %v1051
    %v1411 = vunpack.c.l.b16 %v1052
    %v1412 = vunpack.c.h.b16 %v1052
    %v1413 = vunpack.c.l.b16 %v1053
    %v1414 = vunpack.c.h.b16 %v1053
    %v1415 = vunpack.c.l.b16 %v1054
    %v1416 = vunpack.c.h.b16 %v1054
    %v1417 = vunpack.c.l.b16 %v1055
    %v1418 = vunpack.c.h.b16 %v1055
    %v1419 = vunpack.c.l.b16 %v1056
    %v1420 = vunpack.c.h.b16 %v1056
    %v1421 = vunpack.c.l.b16 %v1057
    %v1422 = vunpack.c.h.b16 %v1057
    %v1423 = vunpack.c.l.b16 %v1058
    %v1424 = vunpack.c.h.b16 %v1058
    %v1425 = vunpack.c.l.b16 %v1059
    %v1426 = vunpack.c.h.b16 %v1059
    %v1427 = vunpack.c.l.b16 %v1060
    %v1428 = vunpack.c.h.b16 %v1060
    %v1429 = vunpack.c.l.b16 %v1061
    %v1430 = vunpack.c.h.b16 %v1061
    %v1431 = vunpack.c.l.b16 %v1062
    %v1432 = vunpack.c.h.b16 %v1062
    %v1433 = vunpack.c.l.b16 %v1063
    %v1434 = vunpack.c.h.b16 %v1063
    %v1435 = vunpack.c.l.b16 %v1064
    %v1436 = vunpack.c.h.b16 %v1064
    %v1437 = vunpack.c.l.b16 %v1065
    %v1438 = vunpack.c.h.b16 %v1065
    %v1439 = vunpack.c.l.b16 %v1066
    %v1440 = vunpack.c.h.b16 %v1066
    %v1441 = vunpack.c.l.b16 %v1067
    %v1442 = vunpack.c.h.b16 %v1067
    %v1443 = vunpack.c.l.b16 %v1068
    %v1444 = vunpack.c.h.b16 %v1068
    %v1445 = vunpack.c.l.b16 %v1069
    %v1446 = vunpack.c.h.b16 %v1069
    %v1447 = vunpack.c.l.b16 %v1070
    %v1448 = vunpack.c.h.b16 %v1070
    %v1449 = vunpack.c.l.b16 %v1071
    %v1450 = vunpack.c.h.b16 %v1071
    %v1451 = vunpack.c.l.b16 %v1072
    %v1452 = vunpack.c.h.b16 %v1072
    %v1453 = vunpack.c.l.b16 %v1073
    %v1454 = vunpack.c.h.b16 %v1073
    %v1455 = vunpack.c.l.b16 %v1074
    %v1456 = vunpack.c.h.b16 %v1074
    %v1457 = vunpack.c.l.b16 %v1075
    %v1458 = vunpack.c.h.b16 %v1075
    %v1459 = vunpack.c.l.b16 %v1076
    %v1460 = vunpack.c.h.b16 %v1076
    %v1461 = vunpack.c.l.b16 %v1077
    %v1462 = vunpack.c.h.b16 %v1077
    %v1463 = vunpack.c.l.b16 %v1078
    %v1464 = vunpack.c.h.b16 %v1078
    %v1465 = vunpack.c.l.b16 %v1079
    %v1466 = vunpack.c.h.b16 %v1079
    %v1467 = vunpack.c.l.b16 %v1080
    %v1468 = vunpack.c.h.b16 %v1080
    %v1469 = vunpack.c.l.b16 %v1081
    %v1470 = vunpack.c.h.b16 %v1081
    %v1471 = vunpack.c.l.b16 %v1082
    %v1472 = vunpack.c.h.b16 %v1082
    %v1473 = vunpack.c.l.b16 %v1083
    %v1474 = vunpack.c.h.b16 %v1083
    %v1475 = vunpack.c.l.b16 %v1084
    %v1476 = vunpack.c.h.b16 %v1084
    %v1477 = vpack.c.b16 %v1229, %v1221
    %v1478 = vpack.c.b16 %v1230, %v1222
    %v1479 = vpack.c.b16 %v1231, %v1223
    %v1480 = vpack.c.b16 %v1232, %v1224
    %v1481 = vpack.c.b16 %v1233, %v1225
    %v1482 = vpack.c.b16 %v1234, %v1226
    %v1483 = vpack.c.b16 %v1235, %v1227
    %v1484 = vpack.c.b16 %v1236, %v1228
    %v1485 = vpack.c.b16 %v1245, %v1237
    %v1486 = vpack.c.b16 %v1246, %v1238
    %v1487 = vpack.c.b16 %v1247, %v1239
    %v1488 = vpack.c.b16 %v1248, %v1240
    %v1489 = vpack.c.b16 %v1249, %v1241
    %v1490 = vpack.c.b16 %v1250, %v1242
    %v1491 = vpack.c.b16 %v1251, %v1243
    %v1492 = vpack.c.b16 %v1252, %v1244
    %v1493 = vpack.c.b16 %v1261, %v1253
    %v1494 = vpack.c.b16 %v1262, %v1254
    %v1495 = vpack.c.b16 %v1263, %v1255
    %v1496 = vpack.c.b16 %v1264, %v1256
    %v1497 = vpack.c.b16 %v1265, %v1257
    %v1498 = vpack.c.b16 %v1266, %v1258
    %v1499 = vpack.c.b16 %v1267, %v1259
    %v1500 = vpack.c.b16 %v1268, %v1260
    %v1501 = vpack.c.b16 %v1277, %v1269
    %v1502 = vpack.c.b16 %v1278, %v1270
    %v1503 = vpack.c.b16 %v1279, %v1271
    %v1504 = vpack.c.b16 %v1280, %v1272
    %v1505 = vpack.c.b16 %v1281, %v1273
    %v1506 = vpack.c.b16 %v1282, %v1274
    %v1507 = vpack.c.b16 %v1283, %v1275
    %v1508 = vpack.c.b16 %v1284, %v1276
    %v1509 = vpack.c.b16 %v1293, %v1285
    %v1510 = vpack.c.b16 %v1294, %v1286
    %v1511 = vpack.c.b16 %v1295, %v1287
    %v1512 = vpack.c.b16 %v1296, %v1288
    %v1513 = vpack.c.b16 %v1297, %v1289
    %v1514 = vpack.c.b16 %v1298, %v1290
    %v1515 = vpack.c.b16 %v1299, %v1291
    %v1516 = vpack.c.b16 %v1300, %v1292
    %v1517 = vpack.c.b16 %v1309, %v1301
    %v1518 = vpack.c.b16 %v1310, %v1302
    %v1519 = vpack.c.b16 %v1311, %v1303
    %v1520 = vpack.c.b16 %v1312, %v1304
    %v1521 = vpack.c.b16 %v1313, %v1305
    %v1522 = vpack.c.b16 %v1314, %v1306
    %v1523 = vpack.c.b16 %v1315, %v1307
    %v1524 = vpack.c.b16 %v1316, %v1308
    %v1525 = vpack.c.b16 %v1325, %v1317
    %v1526 = vpack.c.b16 %v1326, %v1318
    %v1527 = vpack.c.b16 %v1327, %v1319
    %v1528 = vpack.c.b16 %v1328, %v1320
    %v1529 = vpack.c.b16 %v1329, %v1321
    %v1530 = vpack.c.b16 %v1330, %v1322
    %v1531 = vpack.c.b16 %v1331, %v1323
    %v1532 = vpack.c.b16 %v1332, %v1324
    %v1533 = vpack.c.b16 %v1341, %v1333
    %v1534 = vpack.c.b16 %v1342, %v1334
    %v1535 = vpack.c.b16 %v1343, %v1335
    %v1536 = vpack.c.b16 %v1344, %v1336
    %v1537 = vpack.c.b16 %v1345, %v1337
    %v1538 = vpack.c.b16 %v1346, %v1338
    %v1539 = vpack.c.b16 %v1347, %v1339
    %v1540 = vpack.c.b16 %v1348, %v1340
    %v1541 = vpack.c.b16 %v1357, %v1349
    %v1542 = vpack.c.b16 %v1358, %v1350
    %v1543 = vpack.c.b16 %v1359, %v1351
    %v1544 = vpack.c.b16 %v1360, %v1352
    %v1545 = vpack.c.b16 %v1361, %v1353
    %v1546 = vpack.c.b16 %v1362, %v1354
    %v1547 = vpack.c.b16 %v1363, %v1355
    %v1548 = vpack.c.b16 %v1364, %v1356
    %v1549 = vpack.c.b16 %v1373, %v1365
    %v1550 = vpack.c.b16 %v1374, %v1366
    %v1551 = vpack.c.b16 %v1375, %v1367
    %v1552 = vpack.c.b16 %v1376, %v1368
    %v1553 = vpack.c.b16 %v1377, %v1369
    %v1554 = vpack.c.b16 %v1378, %v1370
    %v1555 = vpack.c.b16 %v1379, %v1371
    %v1556 = vpack.c.b16 %v1380, %v1372
    %v1557 = vpack.c.b16 %v1389, %v1381
    %v1558 = vpack.c.b16 %v1390, %v1382
    %v1559 = vpack.c.b16 %v1391, %v1383
    %v1560 = vpack.c.b16 %v1392, %v1384
    %v1561 = vpack.c.b16 %v1393, %v1385
    %v1562 = vpack.c.b16 %v1394, %v1386
    %v1563 = vpack.c.b16 %v1395, %v1387
    %v1564 = vpack.c.b16 %v1396, %v1388
    %v1565 = vpack.c.b16 %v1405, %v1397
    %v1566 = vpack.c.b16 %v1406, %v1398
    %v1567 = vpack.c.b16 %v1407, %v1399
    %v1568 = vpack.c.b16 %v1408, %v1400
    %v1569 = vpack.c.b16 %v1409, %v1401
    %v1570 = vpack.c.b16 %v1410, %v1402
    %v1571 = vpack.c.b16 %v1411, %v1403
    %v1572 = vpack.c.b16 %v1412, %v1404
    %v1573 = vpack.c.b16 %v1421, %v1413
    %v1574 = vpack.c.b16 %v1422, %v1414
    %v1575 = vpack.c.b16 %v1423, %v1415
    %v1576 = vpack.c.b16 %v1424, %v1416
    %v1577 = vpack.c.b16 %v1425, %v1417
    %v1578 = vpack.c.b16 %v1426, %v1418
    %v1579 = vpack.c.b16 %v1427, %v1419
    %v1580 = vpack.c.b16 %v1428, %v1420
    %v1581 = vpack.c.b16 %v1437, %v1429
    %v1582 = vpack.c.b16 %v1438, %v1430
    %v1583 = vpack.c.b16 %v1439, %v1431
    %v1584 = vpack.c.b16 %v1440, %v1432
    %v1585 = vpack.c.b16 %v1441, %v1433
    %v1586 = vpack.c.b16 %v1442, %v1434
    %v1587 = vpack.c.b16 %v1443, %v1435
    %v1588 = vpack.c.b16 %v1444, %v1436
    %v1589 = vpack.c.b16 %v1453, %v1445
    %v1590 = vpack.c.b16 %v1454, %v1446
    %v1591 = vpack.c.b16 %v1455, %v1447
    %v1592 = vpack.c.b16 %v1456, %v1448
    %v1593 = vpack.c.b16 %v1457, %v1449
    %v1594 = vpack.c.b16 %v1458, %v1450
    %v1595 = vpack.c.b16 %v1459, %v1451
    %v1596 = vpack.c.b16 %v1460, %v1452
    %v1597 = vpack.c.b16 %v1469, %v1461
    %v1598 = vpack.c.b16 %v1470, %v1462
    %v1599 = vpack.c.b16 %v1471, %v1463
    %v1600 = vpack.c.b16 %v1472, %v1464
    %v1601 = vpack.c.b16 %v1473, %v1465
    %v1602 = vpack.c.b16 %v1474, %v1466
    %v1603 = vpack.c.b16 %v1475, %v1467
    %v1604 = vpack.c.b16 %v1476, %v1468
    %1733 = vmatprep.subr.bf16.mxu0 %v1534
    %1734 = vmatpush1.bf16.msra.mxu0 %v1533
    %1735 = vmatprep.subr.bf16.mxu0 %v1526
    %1736 = vmatpush1.bf16.msra.mxu0 %v1525
    %1737 = vmatprep.subr.bf16.mxu0 %v1518
    %1738 = vmatpush1.bf16.msra.mxu0 %v1517
    %1739 = vmatprep.subr.bf16.mxu0 %v1510
    %1740 = vmatpush1.bf16.msra.mxu0 %v1509
    %1741 = vmatprep.subr.bf16.mxu0 %v1502
    %1742 = vmatpush1.bf16.msra.mxu0 %v1501
    %1743 = vmatprep.subr.bf16.mxu0 %v1494
    %1744 = vmatpush1.bf16.msra.mxu0 %v1493
    %1745 = vmatprep.subr.bf16.mxu0 %v1486
    %1746 = vmatpush1.bf16.msra.mxu0 %v1485
    %1747 = vmatprep.subr.bf16.mxu0 %v1478
    %1748 = vmatpush1.bf16.msra.mxu0 %v1477
    %1749 = vmatprep.subr.bf16.mxu0 %v1598
    %1750 = vmatpush2.bf16.msra.mxu0 %v1597
    %1751 = vmatprep.subr.bf16.mxu0 %v1590
    %1752 = vmatpush2.bf16.msra.mxu0 %v1589
    %1753 = vmatprep.subr.bf16.mxu0 %v1582
    %1754 = vmatpush2.bf16.msra.mxu0 %v1581
    %1755 = vmatprep.subr.bf16.mxu0 %v1574
    %1756 = vmatpush2.bf16.msra.mxu0 %v1573
    %1757 = vmatprep.subr.bf16.mxu0 %v1566
    %1758 = vmatpush2.bf16.msra.mxu0 %v1565
    %1759 = vmatprep.subr.bf16.mxu0 %v1558
    %1760 = vmatpush2.bf16.msra.mxu0 %v1557
    %1761 = vmatprep.subr.bf16.mxu0 %v1550
    %1762 = vmatpush2.bf16.msra.mxu0 %v1549
    %1763 = vmatprep.subr.bf16.mxu0 %v1542
    %1764 = vmatpush2.bf16.msra.mxu0 %v1541
    %1765 = vmatprep.mubr.bf16.mxu0 0
    %1766 = vmatmul.mubr.bf16.gmra.mxu0 0
    %v1767 = vpop.f32.mrf.mxu0
    %v1768 = vadd.f32 0.0, %v1767
    %v1769 = vpop.f32.mrf.mxu0
    %v1770 = vadd.f32 0.0, %v1769
    %v1771 = vpop.f32.mrf.mxu0
    %v1772 = vpop.f32.mrf.mxu0
    %1773 = vdwg.mxu0
    %1774 = vmatprep.subr.bf16.mxu0 %v1536
    %1775 = vmatpush1.bf16.msra.mxu0 %v1535
    %1776 = vmatprep.subr.bf16.mxu0 %v1528
    %1777 = vmatpush1.bf16.msra.mxu0 %v1527
    %1778 = vmatprep.subr.bf16.mxu0 %v1520
    %1779 = vmatpush1.bf16.msra.mxu0 %v1519
    %1780 = vmatprep.subr.bf16.mxu0 %v1512
    %1781 = vmatpush1.bf16.msra.mxu0 %v1511
    %1782 = vmatprep.subr.bf16.mxu0 %v1504
    %1783 = vmatpush1.bf16.msra.mxu0 %v1503
    %1784 = vmatprep.subr.bf16.mxu0 %v1496
    %1785 = vmatpush1.bf16.msra.mxu0 %v1495
    %1786 = vmatprep.subr.bf16.mxu0 %v1488
    %1787 = vmatpush1.bf16.msra.mxu0 %v1487
    %1788 = vmatprep.subr.bf16.mxu0 %v1480
    %1789 = vmatpush1.bf16.msra.mxu0 %v1479
    %1790 = vmatprep.subr.bf16.mxu0 %v1600
    %1791 = vmatpush2.bf16.msra.mxu0 %v1599
    %1792 = vmatprep.subr.bf16.mxu0 %v1592
    %1793 = vmatpush2.bf16.msra.mxu0 %v1591
    %1794 = vmatprep.subr.bf16.mxu0 %v1584
    %1795 = vmatpush2.bf16.msra.mxu0 %v1583
    %1796 = vmatprep.subr.bf16.mxu0 %v1576
    %1797 = vmatpush2.bf16.msra.mxu0 %v1575
    %1798 = vmatprep.subr.bf16.mxu0 %v1568
    %1799 = vmatpush2.bf16.msra.mxu0 %v1567
    %1800 = vmatprep.subr.bf16.mxu0 %v1560
    %1801 = vmatpush2.bf16.msra.mxu0 %v1559
    %1802 = vmatprep.subr.bf16.mxu0 %v1552
    %1803 = vmatpush2.bf16.msra.mxu0 %v1551
    %1804 = vmatprep.subr.bf16.mxu0 %v1544
    %1805 = vmatpush2.bf16.msra.mxu0 %v1543
    %1806 = vmatprep.mubr.bf16.mxu0 0
    %1807 = vmatmul.mubr.bf16.gmra.mxu0 0
    %v1808 = vpop.f32.mrf.mxu0
    %v1809 = vadd.f32 0.0, %v1808
    %v1810 = vpop.f32.mrf.mxu0
    %v1811 = vadd.f32 0.0, %v1810
    %v1812 = vpop.f32.mrf.mxu0
    %v1813 = vpop.f32.mrf.mxu0
    %1814 = vdwg.mxu0
    %1815 = vmatprep.subr.bf16.mxu0 %v1538
    %1816 = vmatpush1.bf16.msra.mxu0 %v1537
    %1817 = vmatprep.subr.bf16.mxu0 %v1530
    %1818 = vmatpush1.bf16.msra.mxu0 %v1529
    %1819 = vmatprep.subr.bf16.mxu0 %v1522
    %1820 = vmatpush1.bf16.msra.mxu0 %v1521
    %1821 = vmatprep.subr.bf16.mxu0 %v1514
    %1822 = vmatpush1.bf16.msra.mxu0 %v1513
    %1823 = vmatprep.subr.bf16.mxu0 %v1506
    %1824 = vmatpush1.bf16.msra.mxu0 %v1505
    %1825 = vmatprep.subr.bf16.mxu0 %v1498
    %1826 = vmatpush1.bf16.msra.mxu0 %v1497
    %1827 = vmatprep.subr.bf16.mxu0 %v1490
    %1828 = vmatpush1.bf16.msra.mxu0 %v1489
    %1829 = vmatprep.subr.bf16.mxu0 %v1482
    %1830 = vmatpush1.bf16.msra.mxu0 %v1481
    %1831 = vmatprep.subr.bf16.mxu0 %v1602
    %1832 = vmatpush2.bf16.msra.mxu0 %v1601
    %1833 = vmatprep.subr.bf16.mxu0 %v1594
    %1834 = vmatpush2.bf16.msra.mxu0 %v1593
    %1835 = vmatprep.subr.bf16.mxu0 %v1586
    %1836 = vmatpush2.bf16.msra.mxu0 %v1585
    %1837 = vmatprep.subr.bf16.mxu0 %v1578
    %1838 = vmatpush2.bf16.msra.mxu0 %v1577
    %1839 = vmatprep.subr.bf16.mxu0 %v1570
    %1840 = vmatpush2.bf16.msra.mxu0 %v1569
    %1841 = vmatprep.subr.bf16.mxu0 %v1562
    %1842 = vmatpush2.bf16.msra.mxu0 %v1561
    %1843 = vmatprep.subr.bf16.mxu0 %v1554
    %1844 = vmatpush2.bf16.msra.mxu0 %v1553
    %1845 = vmatprep.subr.bf16.mxu0 %v1546
    %1846 = vmatpush2.bf16.msra.mxu0 %v1545
    %1847 = vmatprep.mubr.bf16.mxu0 0
    %1848 = vmatmul.mubr.bf16.gmra.mxu0 0
    %v1849 = vpop.f32.mrf.mxu0
    %v1850 = vadd.f32 0.0, %v1849
    %v1851 = vpop.f32.mrf.mxu0
    %v1852 = vadd.f32 0.0, %v1851
    %v1853 = vpop.f32.mrf.mxu0
    %v1854 = vpop.f32.mrf.mxu0
    %1855 = vdwg.mxu0
    %1856 = vmatprep.subr.bf16.mxu0 %v1540
    %1857 = vmatpush1.bf16.msra.mxu0 %v1539
    %1858 = vmatprep.subr.bf16.mxu0 %v1532
    %1859 = vmatpush1.bf16.msra.mxu0 %v1531
    %1860 = vmatprep.subr.bf16.mxu0 %v1524
    %1861 = vmatpush1.bf16.msra.mxu0 %v1523
    %1862 = vmatprep.subr.bf16.mxu0 %v1516
    %1863 = vmatpush1.bf16.msra.mxu0 %v1515
    %1864 = vmatprep.subr.bf16.mxu0 %v1508
    %1865 = vmatpush1.bf16.msra.mxu0 %v1507
    %1866 = vmatprep.subr.bf16.mxu0 %v1500
    %1867 = vmatpush1.bf16.msra.mxu0 %v1499
    %1868 = vmatprep.subr.bf16.mxu0 %v1492
    %1869 = vmatpush1.bf16.msra.mxu0 %v1491
    %1870 = vmatprep.subr.bf16.mxu0 %v1484
    %1871 = vmatpush1.bf16.msra.mxu0 %v1483
    %1872 = vmatprep.subr.bf16.mxu0 %v1604
    %1873 = vmatpush2.bf16.msra.mxu0 %v1603
    %1874 = vmatprep.subr.bf16.mxu0 %v1596
    %1875 = vmatpush2.bf16.msra.mxu0 %v1595
    %1876 = vmatprep.subr.bf16.mxu0 %v1588
    %1877 = vmatpush2.bf16.msra.mxu0 %v1587
    %1878 = vmatprep.subr.bf16.mxu0 %v1580
    %1879 = vmatpush2.bf16.msra.mxu0 %v1579
    %1880 = vmatprep.subr.bf16.mxu0 %v1572
    %1881 = vmatpush2.bf16.msra.mxu0 %v1571
    %1882 = vmatprep.subr.bf16.mxu0 %v1564
    %1883 = vmatpush2.bf16.msra.mxu0 %v1563
    %1884 = vmatprep.subr.bf16.mxu0 %v1556
    %1885 = vmatpush2.bf16.msra.mxu0 %v1555
    %1886 = vmatprep.subr.bf16.mxu0 %v1548
    %1887 = vmatpush2.bf16.msra.mxu0 %v1547
    %1888 = vmatprep.mubr.bf16.mxu0 0
    %1889 = vmatmul.mubr.bf16.gmra.mxu0 0
    %v1890 = vpop.f32.mrf.mxu0
    %v1891 = vadd.f32 0.0, %v1890
    %v1892 = vpop.f32.mrf.mxu0
    %v1893 = vadd.f32 0.0, %v1892
    %v1894 = vpop.f32.mrf.mxu0
    %v1895 = vpop.f32.mrf.mxu0
    %1896 = vdwg.mxu0
    %v1897 = vadd.f32 %v1085, %v1768
    %v1898 = vadd.f32 %v1086, %v1770
    %v1899 = vadd.f32 %v1087, %v1809
    %v1900 = vadd.f32 %v1088, %v1811
    %v1901 = vadd.f32 %v1089, %v1850
    %v1902 = vadd.f32 %v1090, %v1852
    %v1903 = vadd.f32 %v1091, %v1891
    %v1904 = vadd.f32 %v1092, %v1893
    %v1905 = vxor.u32 %v1897, 2147483648
    %v1906 = vxor.u32 %v1898, 2147483648
    %v1907 = vmul.f32 %v1905, 1.442695
    %v1908 = vpow.pop %v1907
    %v1909 = vmul.f32 %v1906, 1.442695
    %v1910 = vpow.pop %v1909
    %v1911 = vadd.f32 %v1908, 1.0
    %v1912 = vadd.f32 %v1910, 1.0
    %v1913 = vrcp.pop %v1911
    %v1914 = vmul.f32 1.0, %v1913
    %v1915 = vrcp.pop %v1912
    %v1916 = vmul.f32 1.0, %v1915
    %v1917 = vxor.u32 %v1899, 2147483648
    %v1918 = vxor.u32 %v1900, 2147483648
    %v1919 = vmul.f32 %v1917, 1.442695
    %v1920 = vpow.pop %v1919
    %v1921 = vmul.f32 %v1918, 1.442695
    %v1922 = vpow.pop %v1921
    %v1923 = vadd.f32 %v1920, 1.0
    %v1924 = vadd.f32 %v1922, 1.0
    %v1925 = vrcp.pop %v1923
    %v1926 = vmul.f32 1.0, %v1925
    %v1927 = vrcp.pop %v1924
    %v1928 = vmul.f32 1.0, %v1927
    %v1929 = vtanh.pop %v1901
    %v1930 = vtanh.pop %v1902
    %v1931 = vxor.u32 %v1903, 2147483648
    %v1932 = vxor.u32 %v1904, 2147483648
    %v1933 = vmul.f32 %v1931, 1.442695
    %v1934 = vpow.pop %v1933
    %v1935 = vmul.f32 %v1932, 1.442695
    %v1936 = vpow.pop %v1935
    %v1937 = vadd.f32 %v1934, 1.0
    %v1938 = vadd.f32 %v1936, 1.0
    %v1939 = vrcp.pop %v1937
    %v1940 = vmul.f32 1.0, %v1939
    %v1941 = vrcp.pop %v1938
    %v1942 = vmul.f32 1.0, %v1941
    %v1943 = vmul.f32 %v1926, 0.0
    %v1944 = vmul.f32 %v1928, 0.0
    %v1945 = vmul.f32 %v1914, %v1929
    %v1946 = vmul.f32 %v1916, %v1930
    %v1947 = vadd.f32 %v1943, %v1945
    %v1948 = vadd.f32 %v1944, %v1946
    %v1949 = vtanh.pop %v1947
    %v1950 = vtanh.pop %v1948
    %v1951 = vmul.f32 %v1940, %v1949
    %v1952 = vmul.f32 %v1942, %v1950
    %v1953 = vld [vmem:[#allocation3 + $0x40] sm:$0xff]
    %v1954 = vld [vmem:[#allocation3 + $0x48] sm:$0xff]
    %v1955 = vld [vmem:[#allocation3 + $0x50] sm:$0xff]
    %v1956 = vld [vmem:[#allocation3 + $0x58] sm:$0xff]
    %v1957 = vld [vmem:[#allocation3 + $0x60] sm:$0xff]
    %v1958 = vld [vmem:[#allocation3 + $0x68] sm:$0xff]
    %v1959 = vld [vmem:[#allocation3 + $0x70] sm:$0xff]
    %v1960 = vld [vmem:[#allocation3 + $0x78] sm:$0xff]
    %v1961 = vpack.c.bf16 %v1951, %v1951
    %v1962 = vpack.c.bf16 %v1952, %v1952
    %1963 = vmatprep.subr.bf16.mxu0 %v1534
    %1964 = vmatpush1.bf16.msra.mxu0 %v1533
    %1965 = vmatprep.subr.bf16.mxu0 %v1526
    %1966 = vmatpush1.bf16.msra.mxu0 %v1525
    %1967 = vmatprep.subr.bf16.mxu0 %v1518
    %1968 = vmatpush1.bf16.msra.mxu0 %v1517
    %1969 = vmatprep.subr.bf16.mxu0 %v1510
    %1970 = vmatpush1.bf16.msra.mxu0 %v1509
    %1971 = vmatprep.subr.bf16.mxu0 %v1502
    %1972 = vmatpush1.bf16.msra.mxu0 %v1501
    %1973 = vmatprep.subr.bf16.mxu0 %v1494
    %1974 = vmatpush1.bf16.msra.mxu0 %v1493
    %1975 = vmatprep.subr.bf16.mxu0 %v1486
    %1976 = vmatpush1.bf16.msra.mxu0 %v1485
    %1977 = vmatprep.subr.bf16.mxu0 %v1478
    %1978 = vmatpush1.bf16.msra.mxu0 %v1477
    %1979 = vmatprep.subr.bf16.mxu0 %v1598
    %1980 = vmatpush2.bf16.msra.mxu0 %v1597
    %1981 = vmatprep.subr.bf16.mxu0 %v1590
    %1982 = vmatpush2.bf16.msra.mxu0 %v1589
    %1983 = vmatprep.subr.bf16.mxu0 %v1582
    %1984 = vmatpush2.bf16.msra.mxu0 %v1581
    %1985 = vmatprep.subr.bf16.mxu0 %v1574
    %1986 = vmatpush2.bf16.msra.mxu0 %v1573
    %1987 = vmatprep.subr.bf16.mxu0 %v1566
    %1988 = vmatpush2.bf16.msra.mxu0 %v1565
    %1989 = vmatprep.subr.bf16.mxu0 %v1558
    %1990 = vmatpush2.bf16.msra.mxu0 %v1557
    %1991 = vmatprep.subr.bf16.mxu0 %v1550
    %1992 = vmatpush2.bf16.msra.mxu0 %v1549
    %1993 = vmatprep.subr.bf16.mxu0 %v1542
    %1994 = vmatpush2.bf16.msra.mxu0 %v1541
    %1995 = vmatprep.mubr.bf16.mxu0 %v1962
    %1996 = vmatmul.mubr.bf16.gmra.mxu0 %v1961
    %v1997 = vpop.f32.mrf.mxu0
    %v1998 = vadd.f32 0.0, %v1997
    %v1999 = vpop.f32.mrf.mxu0
    %v2000 = vadd.f32 0.0, %v1999
    %v2001 = vpop.f32.mrf.mxu0
    %v2002 = vpop.f32.mrf.mxu0
    %2003 = vdwg.mxu0
    %2004 = vmatprep.subr.bf16.mxu0 %v1536
    %2005 = vmatpush1.bf16.msra.mxu0 %v1535
    %2006 = vmatprep.subr.bf16.mxu0 %v1528
    %2007 = vmatpush1.bf16.msra.mxu0 %v1527
    %2008 = vmatprep.subr.bf16.mxu0 %v1520
    %2009 = vmatpush1.bf16.msra.mxu0 %v1519
    %2010 = vmatprep.subr.bf16.mxu0 %v1512
    %2011 = vmatpush1.bf16.msra.mxu0 %v1511
    %2012 = vmatprep.subr.bf16.mxu0 %v1504
    %2013 = vmatpush1.bf16.msra.mxu0 %v1503
    %2014 = vmatprep.subr.bf16.mxu0 %v1496
    %2015 = vmatpush1.bf16.msra.mxu0 %v1495
    %2016 = vmatprep.subr.bf16.mxu0 %v1488
    %2017 = vmatpush1.bf16.msra.mxu0 %v1487
    %2018 = vmatprep.subr.bf16.mxu0 %v1480
    %2019 = vmatpush1.bf16.msra.mxu0 %v1479
    %2020 = vmatprep.subr.bf16.mxu0 %v1600
    %2021 = vmatpush2.bf16.msra.mxu0 %v1599
    %2022 = vmatprep.subr.bf16.mxu0 %v1592
    %2023 = vmatpush2.bf16.msra.mxu0 %v1591
    %2024 = vmatprep.subr.bf16.mxu0 %v1584
    %2025 = vmatpush2.bf16.msra.mxu0 %v1583
    %2026 = vmatprep.subr.bf16.mxu0 %v1576
    %2027 = vmatpush2.bf16.msra.mxu0 %v1575
    %2028 = vmatprep.subr.bf16.mxu0 %v1568
    %2029 = vmatpush2.bf16.msra.mxu0 %v1567
    %2030 = vmatprep.subr.bf16.mxu0 %v1560
    %2031 = vmatpush2.bf16.msra.mxu0 %v1559
    %2032 = vmatprep.subr.bf16.mxu0 %v1552
    %2033 = vmatpush2.bf16.msra.mxu0 %v1551
    %2034 = vmatprep.subr.bf16.mxu0 %v1544
    %2035 = vmatpush2.bf16.msra.mxu0 %v1543
    %2036 = vmatprep.mubr.bf16.mxu0 %v1962
    %2037 = vmatmul.mubr.bf16.gmra.mxu0 %v1961
    %v2038 = vpop.f32.mrf.mxu0
    %v2039 = vadd.f32 0.0, %v2038
    %v2040 = vpop.f32.mrf.mxu0
    %v2041 = vadd.f32 0.0, %v2040
    %v2042 = vpop.f32.mrf.mxu0
    %v2043 = vpop.f32.mrf.mxu0
    %2044 = vdwg.mxu0
    %2045 = vmatprep.subr.bf16.mxu0 %v1538
    %2046 = vmatpush1.bf16.msra.mxu0 %v1537
    %2047 = vmatprep.subr.bf16.mxu0 %v1530
    %2048 = vmatpush1.bf16.msra.mxu0 %v1529
    %2049 = vmatprep.subr.bf16.mxu0 %v1522
    %2050 = vmatpush1.bf16.msra.mxu0 %v1521
    %2051 = vmatprep.subr.bf16.mxu0 %v1514
    %2052 = vmatpush1.bf16.msra.mxu0 %v1513
    %2053 = vmatprep.subr.bf16.mxu0 %v1506
    %2054 = vmatpush1.bf16.msra.mxu0 %v1505
    %2055 = vmatprep.subr.bf16.mxu0 %v1498
    %2056 = vmatpush1.bf16.msra.mxu0 %v1497
    %2057 = vmatprep.subr.bf16.mxu0 %v1490
    %2058 = vmatpush1.bf16.msra.mxu0 %v1489
    %2059 = vmatprep.subr.bf16.mxu0 %v1482
    %2060 = vmatpush1.bf16.msra.mxu0 %v1481
    %2061 = vmatprep.subr.bf16.mxu0 %v1602
    %2062 = vmatpush2.bf16.msra.mxu0 %v1601
    %2063 = vmatprep.subr.bf16.mxu0 %v1594
    %2064 = vmatpush2.bf16.msra.mxu0 %v1593
    %2065 = vmatprep.subr.bf16.mxu0 %v1586
    %2066 = vmatpush2.bf16.msra.mxu0 %v1585
    %2067 = vmatprep.subr.bf16.mxu0 %v1578
    %2068 = vmatpush2.bf16.msra.mxu0 %v1577
    %2069 = vmatprep.subr.bf16.mxu0 %v1570
    %2070 = vmatpush2.bf16.msra.mxu0 %v1569
    %2071 = vmatprep.subr.bf16.mxu0 %v1562
    %2072 = vmatpush2.bf16.msra.mxu0 %v1561
    %2073 = vmatprep.subr.bf16.mxu0 %v1554
    %2074 = vmatpush2.bf16.msra.mxu0 %v1553
    %2075 = vmatprep.subr.bf16.mxu0 %v1546
    %2076 = vmatpush2.bf16.msra.mxu0 %v1545
    %2077 = vmatprep.mubr.bf16.mxu0 %v1962
    %2078 = vmatmul.mubr.bf16.gmra.mxu0 %v1961
    %v2079 = vpop.f32.mrf.mxu0
    %v2080 = vadd.f32 0.0, %v2079
    %v2081 = vpop.f32.mrf.mxu0
    %v2082 = vadd.f32 0.0, %v2081
    %v2083 = vpop.f32.mrf.mxu0
    %v2084 = vpop.f32.mrf.mxu0
    %2085 = vdwg.mxu0
    %2086 = vmatprep.subr.bf16.mxu0 %v1540
    %2087 = vmatpush1.bf16.msra.mxu0 %v1539
    %2088 = vmatprep.subr.bf16.mxu0 %v1532
    %2089 = vmatpush1.bf16.msra.mxu0 %v1531
    %2090 = vmatprep.subr.bf16.mxu0 %v1524
    %2091 = vmatpush1.bf16.msra.mxu0 %v1523
    %2092 = vmatprep.subr.bf16.mxu0 %v1516
    %2093 = vmatpush1.bf16.msra.mxu0 %v1515
    %2094 = vmatprep.subr.bf16.mxu0 %v1508
    %2095 = vmatpush1.bf16.msra.mxu0 %v1507
    %2096 = vmatprep.subr.bf16.mxu0 %v1500
    %2097 = vmatpush1.bf16.msra.mxu0 %v1499
    %2098 = vmatprep.subr.bf16.mxu0 %v1492
    %2099 = vmatpush1.bf16.msra.mxu0 %v1491
    %2100 = vmatprep.subr.bf16.mxu0 %v1484
    %2101 = vmatpush1.bf16.msra.mxu0 %v1483
    %2102 = vmatprep.subr.bf16.mxu0 %v1604
    %2103 = vmatpush2.bf16.msra.mxu0 %v1603
    %2104 = vmatprep.subr.bf16.mxu0 %v1596
    %2105 = vmatpush2.bf16.msra.mxu0 %v1595
    %2106 = vmatprep.subr.bf16.mxu0 %v1588
    %2107 = vmatpush2.bf16.msra.mxu0 %v1587
    %2108 = vmatprep.subr.bf16.mxu0 %v1580
    %2109 = vmatpush2.bf16.msra.mxu0 %v1579
    %2110 = vmatprep.subr.bf16.mxu0 %v1572
    %2111 = vmatpush2.bf16.msra.mxu0 %v1571
    %2112 = vmatprep.subr.bf16.mxu0 %v1564
    %2113 = vmatpush2.bf16.msra.mxu0 %v1563
    %2114 = vmatprep.subr.bf16.mxu0 %v1556
    %2115 = vmatpush2.bf16.msra.mxu0 %v1555
    %2116 = vmatprep.subr.bf16.mxu0 %v1548
    %2117 = vmatpush2.bf16.msra.mxu0 %v1547
    %2118 = vmatprep.mubr.bf16.mxu0 %v1962
    %2119 = vmatmul.mubr.bf16.gmra.mxu0 %v1961
    %v2120 = vpop.f32.mrf.mxu0
    %v2121 = vadd.f32 0.0, %v2120
    %v2122 = vpop.f32.mrf.mxu0
    %v2123 = vadd.f32 0.0, %v2122
    %v2124 = vpop.f32.mrf.mxu0
    %v2125 = vpop.f32.mrf.mxu0
    %2126 = vdwg.mxu0
    %v2127 = vadd.f32 %v1953, %v1998
    %v2128 = vadd.f32 %v1954, %v2000
    %v2129 = vadd.f32 %v1955, %v2039
    %v2130 = vadd.f32 %v1956, %v2041
    %v2131 = vadd.f32 %v1957, %v2080
    %v2132 = vadd.f32 %v1958, %v2082
    %v2133 = vadd.f32 %v1959, %v2121
    %v2134 = vadd.f32 %v1960, %v2123
    %v2135 = vxor.u32 %v2127, 2147483648
    %v2136 = vxor.u32 %v2128, 2147483648
    %v2137 = vmul.f32 %v2135, 1.442695
    %v2138 = vpow.pop %v2137
    %v2139 = vmul.f32 %v2136, 1.442695
    %v2140 = vpow.pop %v2139
    %v2141 = vadd.f32 %v2138, 1.0
    %v2142 = vadd.f32 %v2140, 1.0
    %v2143 = vrcp.pop %v2141
    %v2144 = vmul.f32 1.0, %v2143
    %v2145 = vrcp.pop %v2142
    %v2146 = vmul.f32 1.0, %v2145
    %v2147 = vxor.u32 %v2129, 2147483648
    %v2148 = vxor.u32 %v2130, 2147483648
    %v2149 = vmul.f32 %v2147, 1.442695
    %v2150 = vpow.pop %v2149
    %v2151 = vmul.f32 %v2148, 1.442695
    %v2152 = vpow.pop %v2151
    %v2153 = vadd.f32 %v2150, 1.0
    %v2154 = vadd.f32 %v2152, 1.0
    %v2155 = vrcp.pop %v2153
    %v2156 = vmul.f32 1.0, %v2155
    %v2157 = vrcp.pop %v2154
    %v2158 = vmul.f32 1.0, %v2157
    %v2159 = vtanh.pop %v2131
    %v2160 = vtanh.pop %v2132
    %v2161 = vxor.u32 %v2133, 2147483648
    %v2162 = vxor.u32 %v2134, 2147483648
    %v2163 = vmul.f32 %v2161, 1.442695
    %v2164 = vpow.pop %v2163
    %v2165 = vmul.f32 %v2162, 1.442695
    %v2166 = vpow.pop %v2165
    %v2167 = vadd.f32 %v2164, 1.0
    %v2168 = vadd.f32 %v2166, 1.0
    %v2169 = vrcp.pop %v2167
    %v2170 = vmul.f32 1.0, %v2169
    %v2171 = vrcp.pop %v2168
    %v2172 = vmul.f32 1.0, %v2171
    %v2173 = vmul.f32 %v2156, %v1947
    %v2174 = vmul.f32 %v2158, %v1948
    %v2175 = vmul.f32 %v2144, %v2159
    %v2176 = vmul.f32 %v2146, %v2160
    %v2177 = vadd.f32 %v2173, %v2175
    %v2178 = vadd.f32 %v2174, %v2176
    %v2179 = vtanh.pop %v2177
    %v2180 = vtanh.pop %v2178
    %v2181 = vmul.f32 %v2170, %v2179
    %v2182 = vmul.f32 %v2172, %v2180
    %v2183 = vld [vmem:[#allocation3 + $0x80] sm:$0xff]
    %v2184 = vld [vmem:[#allocation3 + $0x88] sm:$0xff]
    %v2185 = vld [vmem:[#allocation3 + $0x90] sm:$0xff]
    %v2186 = vld [vmem:[#allocation3 + $0x98] sm:$0xff]
    %v2187 = vld [vmem:[#allocation3 + $0xa0] sm:$0xff]
    %v2188 = vld [vmem:[#allocation3 + $0xa8] sm:$0xff]
    %v2189 = vld [vmem:[#allocation3 + $0xb0] sm:$0xff]
    %v2190 = vld [vmem:[#allocation3 + $0xb8] sm:$0xff]
    %v2191 = vpack.c.bf16 %v2181, %v2181
    %v2192 = vpack.c.bf16 %v2182, %v2182
    %2193 = vmatprep.subr.bf16.mxu0 %v1534
    %2194 = vmatpush1.bf16.msra.mxu0 %v1533
    %2195 = vmatprep.subr.bf16.mxu0 %v1526
    %2196 = vmatpush1.bf16.msra.mxu0 %v1525
    %2197 = vmatprep.subr.bf16.mxu0 %v1518
    %2198 = vmatpush1.bf16.msra.mxu0 %v1517
    %2199 = vmatprep.subr.bf16.mxu0 %v1510
    %2200 = vmatpush1.bf16.msra.mxu0 %v1509
    %2201 = vmatprep.subr.bf16.mxu0 %v1502
    %2202 = vmatpush1.bf16.msra.mxu0 %v1501
    %2203 = vmatprep.subr.bf16.mxu0 %v1494
    %2204 = vmatpush1.bf16.msra.mxu0 %v1493
    %2205 = vmatprep.subr.bf16.mxu0 %v1486
    %2206 = vmatpush1.bf16.msra.mxu0 %v1485
    %2207 = vmatprep.subr.bf16.mxu0 %v1478
    %2208 = vmatpush1.bf16.msra.mxu0 %v1477
    %2209 = vmatprep.subr.bf16.mxu0 %v1598
    %2210 = vmatpush2.bf16.msra.mxu0 %v1597
    %2211 = vmatprep.subr.bf16.mxu0 %v1590
    %2212 = vmatpush2.bf16.msra.mxu0 %v1589
    %2213 = vmatprep.subr.bf16.mxu0 %v1582
    %2214 = vmatpush2.bf16.msra.mxu0 %v1581
    %2215 = vmatprep.subr.bf16.mxu0 %v1574
    %2216 = vmatpush2.bf16.msra.mxu0 %v1573
    %2217 = vmatprep.subr.bf16.mxu0 %v1566
    %2218 = vmatpush2.bf16.msra.mxu0 %v1565
    %2219 = vmatprep.subr.bf16.mxu0 %v1558
    %2220 = vmatpush2.bf16.msra.mxu0 %v1557
    %2221 = vmatprep.subr.bf16.mxu0 %v1550
    %2222 = vmatpush2.bf16.msra.mxu0 %v1549
    %2223 = vmatprep.subr.bf16.mxu0 %v1542
    %2224 = vmatpush2.bf16.msra.mxu0 %v1541
    %2225 = vmatprep.mubr.bf16.mxu0 %v2192
    %2226 = vmatmul.mubr.bf16.gmra.mxu0 %v2191
    %v2227 = vpop.f32.mrf.mxu0
    %v2228 = vadd.f32 0.0, %v2227
    %v2229 = vpop.f32.mrf.mxu0
    %v2230 = vadd.f32 0.0, %v2229
    %v2231 = vpop.f32.mrf.mxu0
    %v2232 = vpop.f32.mrf.mxu0
    %2233 = vdwg.mxu0
    %2234 = vmatprep.subr.bf16.mxu0 %v1536
    %2235 = vmatpush1.bf16.msra.mxu0 %v1535
    %2236 = vmatprep.subr.bf16.mxu0 %v1528
    %2237 = vmatpush1.bf16.msra.mxu0 %v1527
    %2238 = vmatprep.subr.bf16.mxu0 %v1520
    %2239 = vmatpush1.bf16.msra.mxu0 %v1519
    %2240 = vmatprep.subr.bf16.mxu0 %v1512
    %2241 = vmatpush1.bf16.msra.mxu0 %v1511
    %2242 = vmatprep.subr.bf16.mxu0 %v1504
    %2243 = vmatpush1.bf16.msra.mxu0 %v1503
    %2244 = vmatprep.subr.bf16.mxu0 %v1496
    %2245 = vmatpush1.bf16.msra.mxu0 %v1495
    %2246 = vmatprep.subr.bf16.mxu0 %v1488
    %2247 = vmatpush1.bf16.msra.mxu0 %v1487
    %2248 = vmatprep.subr.bf16.mxu0 %v1480
    %2249 = vmatpush1.bf16.msra.mxu0 %v1479
    %2250 = vmatprep.subr.bf16.mxu0 %v1600
    %2251 = vmatpush2.bf16.msra.mxu0 %v1599
    %2252 = vmatprep.subr.bf16.mxu0 %v1592
    %2253 = vmatpush2.bf16.msra.mxu0 %v1591
    %2254 = vmatprep.subr.bf16.mxu0 %v1584
    %2255 = vmatpush2.bf16.msra.mxu0 %v1583
    %2256 = vmatprep.subr.bf16.mxu0 %v1576
    %2257 = vmatpush2.bf16.msra.mxu0 %v1575
    %2258 = vmatprep.subr.bf16.mxu0 %v1568
    %2259 = vmatpush2.bf16.msra.mxu0 %v1567
    %2260 = vmatprep.subr.bf16.mxu0 %v1560
    %2261 = vmatpush2.bf16.msra.mxu0 %v1559
    %2262 = vmatprep.subr.bf16.mxu0 %v1552
    %2263 = vmatpush2.bf16.msra.mxu0 %v1551
    %2264 = vmatprep.subr.bf16.mxu0 %v1544
    %2265 = vmatpush2.bf16.msra.mxu0 %v1543
    %2266 = vmatprep.mubr.bf16.mxu0 %v2192
    %2267 = vmatmul.mubr.bf16.gmra.mxu0 %v2191
    %v2268 = vpop.f32.mrf.mxu0
    %v2269 = vadd.f32 0.0, %v2268
    %v2270 = vpop.f32.mrf.mxu0
    %v2271 = vadd.f32 0.0, %v2270
    %v2272 = vpop.f32.mrf.mxu0
    %v2273 = vpop.f32.mrf.mxu0
    %2274 = vdwg.mxu0
    %2275 = vmatprep.subr.bf16.mxu0 %v1538
    %2276 = vmatpush1.bf16.msra.mxu0 %v1537
    %2277 = vmatprep.subr.bf16.mxu0 %v1530
    %2278 = vmatpush1.bf16.msra.mxu0 %v1529
    %2279 = vmatprep.subr.bf16.mxu0 %v1522
    %2280 = vmatpush1.bf16.msra.mxu0 %v1521
    %2281 = vmatprep.subr.bf16.mxu0 %v1514
    %2282 = vmatpush1.bf16.msra.mxu0 %v1513
    %2283 = vmatprep.subr.bf16.mxu0 %v1506
    %2284 = vmatpush1.bf16.msra.mxu0 %v1505
    %2285 = vmatprep.subr.bf16.mxu0 %v1498
    %2286 = vmatpush1.bf16.msra.mxu0 %v1497
    %2287 = vmatprep.subr.bf16.mxu0 %v1490
    %2288 = vmatpush1.bf16.msra.mxu0 %v1489
    %2289 = vmatprep.subr.bf16.mxu0 %v1482
    %2290 = vmatpush1.bf16.msra.mxu0 %v1481
    %2291 = vmatprep.subr.bf16.mxu0 %v1602
    %2292 = vmatpush2.bf16.msra.mxu0 %v1601
    %2293 = vmatprep.subr.bf16.mxu0 %v1594
    %2294 = vmatpush2.bf16.msra.mxu0 %v1593
    %2295 = vmatprep.subr.bf16.mxu0 %v1586
    %2296 = vmatpush2.bf16.msra.mxu0 %v1585
    %2297 = vmatprep.subr.bf16.mxu0 %v1578
    %2298 = vmatpush2.bf16.msra.mxu0 %v1577
    %2299 = vmatprep.subr.bf16.mxu0 %v1570
    %2300 = vmatpush2.bf16.msra.mxu0 %v1569
    %2301 = vmatprep.subr.bf16.mxu0 %v1562
    %2302 = vmatpush2.bf16.msra.mxu0 %v1561
    %2303 = vmatprep.subr.bf16.mxu0 %v1554
    %2304 = vmatpush2.bf16.msra.mxu0 %v1553
    %2305 = vmatprep.subr.bf16.mxu0 %v1546
    %2306 = vmatpush2.bf16.msra.mxu0 %v1545
    %2307 = vmatprep.mubr.bf16.mxu0 %v2192
    %2308 = vmatmul.mubr.bf16.gmra.mxu0 %v2191
    %v2309 = vpop.f32.mrf.mxu0
    %v2310 = vadd.f32 0.0, %v2309
    %v2311 = vpop.f32.mrf.mxu0
    %v2312 = vadd.f32 0.0, %v2311
    %v2313 = vpop.f32.mrf.mxu0
    %v2314 = vpop.f32.mrf.mxu0
    %2315 = vdwg.mxu0
    %2316 = vmatprep.subr.bf16.mxu0 %v1540
    %2317 = vmatpush1.bf16.msra.mxu0 %v1539
    %2318 = vmatprep.subr.bf16.mxu0 %v1532
    %2319 = vmatpush1.bf16.msra.mxu0 %v1531
    %2320 = vmatprep.subr.bf16.mxu0 %v1524
    %2321 = vmatpush1.bf16.msra.mxu0 %v1523
    %2322 = vmatprep.subr.bf16.mxu0 %v1516
    %2323 = vmatpush1.bf16.msra.mxu0 %v1515
    %2324 = vmatprep.subr.bf16.mxu0 %v1508
    %2325 = vmatpush1.bf16.msra.mxu0 %v1507
    %2326 = vmatprep.subr.bf16.mxu0 %v1500
    %2327 = vmatpush1.bf16.msra.mxu0 %v1499
    %2328 = vmatprep.subr.bf16.mxu0 %v1492
    %2329 = vmatpush1.bf16.msra.mxu0 %v1491
    %2330 = vmatprep.subr.bf16.mxu0 %v1484
    %2331 = vmatpush1.bf16.msra.mxu0 %v1483
    %2332 = vmatprep.subr.bf16.mxu0 %v1604
    %2333 = vmatpush2.bf16.msra.mxu0 %v1603
    %2334 = vmatprep.subr.bf16.mxu0 %v1596
    %2335 = vmatpush2.bf16.msra.mxu0 %v1595
    %2336 = vmatprep.subr.bf16.mxu0 %v1588
    %2337 = vmatpush2.bf16.msra.mxu0 %v1587
    %2338 = vmatprep.subr.bf16.mxu0 %v1580
    %2339 = vmatpush2.bf16.msra.mxu0 %v1579
    %2340 = vmatprep.subr.bf16.mxu0 %v1572
    %2341 = vmatpush2.bf16.msra.mxu0 %v1571
    %2342 = vmatprep.subr.bf16.mxu0 %v1564
    %2343 = vmatpush2.bf16.msra.mxu0 %v1563
    %2344 = vmatprep.subr.bf16.mxu0 %v1556
    %2345 = vmatpush2.bf16.msra.mxu0 %v1555
    %2346 = vmatprep.subr.bf16.mxu0 %v1548
    %2347 = vmatpush2.bf16.msra.mxu0 %v1547
    %2348 = vmatprep.mubr.bf16.mxu0 %v2192
    %2349 = vmatmul.mubr.bf16.gmra.mxu0 %v2191
    %v2350 = vpop.f32.mrf.mxu0
    %v2351 = vadd.f32 0.0, %v2350
    %v2352 = vpop.f32.mrf.mxu0
    %v2353 = vadd.f32 0.0, %v2352
    %v2354 = vpop.f32.mrf.mxu0
    %v2355 = vpop.f32.mrf.mxu0
    %2356 = vdwg.mxu0
    %v2357 = vadd.f32 %v2183, %v2228
    %v2358 = vadd.f32 %v2184, %v2230
    %v2359 = vadd.f32 %v2185, %v2269
    %v2360 = vadd.f32 %v2186, %v2271
    %v2361 = vadd.f32 %v2187, %v2310
    %v2362 = vadd.f32 %v2188, %v2312
    %v2363 = vadd.f32 %v2189, %v2351
    %v2364 = vadd.f32 %v2190, %v2353
    %v2365 = vxor.u32 %v2357, 2147483648
    %v2366 = vxor.u32 %v2358, 2147483648
    %v2367 = vmul.f32 %v2365, 1.442695
    %v2368 = vpow.pop %v2367
    %v2369 = vmul.f32 %v2366, 1.442695
    %v2370 = vpow.pop %v2369
    %v2371 = vadd.f32 %v2368, 1.0
    %v2372 = vadd.f32 %v2370, 1.0
    %v2373 = vrcp.pop %v2371
    %v2374 = vmul.f32 1.0, %v2373
    %v2375 = vrcp.pop %v2372
    %v2376 = vmul.f32 1.0, %v2375
    %v2377 = vxor.u32 %v2359, 2147483648
    %v2378 = vxor.u32 %v2360, 2147483648
    %v2379 = vmul.f32 %v2377, 1.442695
    %v2380 = vpow.pop %v2379
    %v2381 = vmul.f32 %v2378, 1.442695
    %v2382 = vpow.pop %v2381
    %v2383 = vadd.f32 %v2380, 1.0
    %v2384 = vadd.f32 %v2382, 1.0
    %v2385 = vrcp.pop %v2383
    %v2386 = vmul.f32 1.0, %v2385
    %v2387 = vrcp.pop %v2384
    %v2388 = vmul.f32 1.0, %v2387
    %v2389 = vtanh.pop %v2361
    %v2390 = vtanh.pop %v2362
    %v2391 = vxor.u32 %v2363, 2147483648
    %v2392 = vxor.u32 %v2364, 2147483648
    %v2393 = vmul.f32 %v2391, 1.442695
    %v2394 = vpow.pop %v2393
    %v2395 = vmul.f32 %v2392, 1.442695
    %v2396 = vpow.pop %v2395
    %v2397 = vadd.f32 %v2394, 1.0
    %v2398 = vadd.f32 %v2396, 1.0
    %v2399 = vrcp.pop %v2397
    %v2400 = vmul.f32 1.0, %v2399
    %v2401 = vrcp.pop %v2398
    %v2402 = vmul.f32 1.0, %v2401
    %v2403 = vmul.f32 %v2386, %v2177
    %v2404 = vmul.f32 %v2388, %v2178
    %v2405 = vmul.f32 %v2374, %v2389
    %v2406 = vmul.f32 %v2376, %v2390
    %v2407 = vadd.f32 %v2403, %v2405
    %v2408 = vadd.f32 %v2404, %v2406
    %v2409 = vtanh.pop %v2407
    %v2410 = vtanh.pop %v2408
    %v2411 = vmul.f32 %v2400, %v2409
    %v2412 = vmul.f32 %v2402, %v2410
    %v2413 = vld [vmem:[#allocation3 + $0xc0] sm:$0xff]
    %v2414 = vld [vmem:[#allocation3 + $0xc8] sm:$0xff]
    %v2415 = vld [vmem:[#allocation3 + $0xd0] sm:$0xff]
    %v2416 = vld [vmem:[#allocation3 + $0xd8] sm:$0xff]
    %v2417 = vld [vmem:[#allocation3 + $0xe0] sm:$0xff]
    %v2418 = vld [vmem:[#allocation3 + $0xe8] sm:$0xff]
    %v2419 = vld [vmem:[#allocation3 + $0xf0] sm:$0xff]
    %v2420 = vld [vmem:[#allocation3 + $0xf8] sm:$0xff]
    %v2421 = vpack.c.bf16 %v2411, %v2411
    %v2422 = vpack.c.bf16 %v2412, %v2412
    %2423 = vmatprep.subr.bf16.mxu0 %v1534
    %2424 = vmatpush1.bf16.msra.mxu0 %v1533
    %2425 = vmatprep.subr.bf16.mxu0 %v1526
    %2426 = vmatpush1.bf16.msra.mxu0 %v1525
    %2427 = vmatprep.subr.bf16.mxu0 %v1518
    %2428 = vmatpush1.bf16.msra.mxu0 %v1517
    %2429 = vmatprep.subr.bf16.mxu0 %v1510
    %2430 = vmatpush1.bf16.msra.mxu0 %v1509
    %2431 = vmatprep.subr.bf16.mxu0 %v1502
    %2432 = vmatpush1.bf16.msra.mxu0 %v1501
    %2433 = vmatprep.subr.bf16.mxu0 %v1494
    %2434 = vmatpush1.bf16.msra.mxu0 %v1493
    %2435 = vmatprep.subr.bf16.mxu0 %v1486
    %2436 = vmatpush1.bf16.msra.mxu0 %v1485
    %2437 = vmatprep.subr.bf16.mxu0 %v1478
    %2438 = vmatpush1.bf16.msra.mxu0 %v1477
    %2439 = vmatprep.subr.bf16.mxu0 %v1598
    %2440 = vmatpush2.bf16.msra.mxu0 %v1597
    %2441 = vmatprep.subr.bf16.mxu0 %v1590
    %2442 = vmatpush2.bf16.msra.mxu0 %v1589
    %2443 = vmatprep.subr.bf16.mxu0 %v1582
    %2444 = vmatpush2.bf16.msra.mxu0 %v1581
    %2445 = vmatprep.subr.bf16.mxu0 %v1574
    %2446 = vmatpush2.bf16.msra.mxu0 %v1573
    %2447 = vmatprep.subr.bf16.mxu0 %v1566
    %2448 = vmatpush2.bf16.msra.mxu0 %v1565
    %2449 = vmatprep.subr.bf16.mxu0 %v1558
    %2450 = vmatpush2.bf16.msra.mxu0 %v1557
    %2451 = vmatprep.subr.bf16.mxu0 %v1550
    %2452 = vmatpush2.bf16.msra.mxu0 %v1549
    %2453 = vmatprep.subr.bf16.mxu0 %v1542
    %2454 = vmatpush2.bf16.msra.mxu0 %v1541
    %2455 = vmatprep.mubr.bf16.mxu0 %v2422
    %2456 = vmatmul.mubr.bf16.gmra.mxu0 %v2421
    %v2457 = vpop.f32.mrf.mxu0
    %v2458 = vadd.f32 0.0, %v2457
    %v2459 = vpop.f32.mrf.mxu0
    %v2460 = vadd.f32 0.0, %v2459
    %v2461 = vpop.f32.mrf.mxu0
    %v2462 = vpop.f32.mrf.mxu0
    %2463 = vdwg.mxu0
    %2464 = vmatprep.subr.bf16.mxu0 %v1536
    %2465 = vmatpush1.bf16.msra.mxu0 %v1535
    %2466 = vmatprep.subr.bf16.mxu0 %v1528
    %2467 = vmatpush1.bf16.msra.mxu0 %v1527
    %2468 = vmatprep.subr.bf16.mxu0 %v1520
    %2469 = vmatpush1.bf16.msra.mxu0 %v1519
    %2470 = vmatprep.subr.bf16.mxu0 %v1512
    %2471 = vmatpush1.bf16.msra.mxu0 %v1511
    %2472 = vmatprep.subr.bf16.mxu0 %v1504
    %2473 = vmatpush1.bf16.msra.mxu0 %v1503
    %2474 = vmatprep.subr.bf16.mxu0 %v1496
    %2475 = vmatpush1.bf16.msra.mxu0 %v1495
    %2476 = vmatprep.subr.bf16.mxu0 %v1488
    %2477 = vmatpush1.bf16.msra.mxu0 %v1487
    %2478 = vmatprep.subr.bf16.mxu0 %v1480
    %2479 = vmatpush1.bf16.msra.mxu0 %v1479
    %2480 = vmatprep.subr.bf16.mxu0 %v1600
    %2481 = vmatpush2.bf16.msra.mxu0 %v1599
    %2482 = vmatprep.subr.bf16.mxu0 %v1592
    %2483 = vmatpush2.bf16.msra.mxu0 %v1591
    %2484 = vmatprep.subr.bf16.mxu0 %v1584
    %2485 = vmatpush2.bf16.msra.mxu0 %v1583
    %2486 = vmatprep.subr.bf16.mxu0 %v1576
    %2487 = vmatpush2.bf16.msra.mxu0 %v1575
    %2488 = vmatprep.subr.bf16.mxu0 %v1568
    %2489 = vmatpush2.bf16.msra.mxu0 %v1567
    %2490 = vmatprep.subr.bf16.mxu0 %v1560
    %2491 = vmatpush2.bf16.msra.mxu0 %v1559
    %2492 = vmatprep.subr.bf16.mxu0 %v1552
    %2493 = vmatpush2.bf16.msra.mxu0 %v1551
    %2494 = vmatprep.subr.bf16.mxu0 %v1544
    %2495 = vmatpush2.bf16.msra.mxu0 %v1543
    %2496 = vmatprep.mubr.bf16.mxu0 %v2422
    %2497 = vmatmul.mubr.bf16.gmra.mxu0 %v2421
    %v2498 = vpop.f32.mrf.mxu0
    %v2499 = vadd.f32 0.0, %v2498
    %v2500 = vpop.f32.mrf.mxu0
    %v2501 = vadd.f32 0.0, %v2500
    %v2502 = vpop.f32.mrf.mxu0
    %v2503 = vpop.f32.mrf.mxu0
    %2504 = vdwg.mxu0
    %2505 = vmatprep.subr.bf16.mxu0 %v1538
    %2506 = vmatpush1.bf16.msra.mxu0 %v1537
    %2507 = vmatprep.subr.bf16.mxu0 %v1530
    %2508 = vmatpush1.bf16.msra.mxu0 %v1529
    %2509 = vmatprep.subr.bf16.mxu0 %v1522
    %2510 = vmatpush1.bf16.msra.mxu0 %v1521
    %2511 = vmatprep.subr.bf16.mxu0 %v1514
    %2512 = vmatpush1.bf16.msra.mxu0 %v1513
    %2513 = vmatprep.subr.bf16.mxu0 %v1506
    %2514 = vmatpush1.bf16.msra.mxu0 %v1505
    %2515 = vmatprep.subr.bf16.mxu0 %v1498
    %2516 = vmatpush1.bf16.msra.mxu0 %v1497
    %2517 = vmatprep.subr.bf16.mxu0 %v1490
    %2518 = vmatpush1.bf16.msra.mxu0 %v1489
    %2519 = vmatprep.subr.bf16.mxu0 %v1482
    %2520 = vmatpush1.bf16.msra.mxu0 %v1481
    %2521 = vmatprep.subr.bf16.mxu0 %v1602
    %2522 = vmatpush2.bf16.msra.mxu0 %v1601
    %2523 = vmatprep.subr.bf16.mxu0 %v1594
    %2524 = vmatpush2.bf16.msra.mxu0 %v1593
    %2525 = vmatprep.subr.bf16.mxu0 %v1586
    %2526 = vmatpush2.bf16.msra.mxu0 %v1585
    %2527 = vmatprep.subr.bf16.mxu0 %v1578
    %2528 = vmatpush2.bf16.msra.mxu0 %v1577
    %2529 = vmatprep.subr.bf16.mxu0 %v1570
    %2530 = vmatpush2.bf16.msra.mxu0 %v1569
    %2531 = vmatprep.subr.bf16.mxu0 %v1562
    %2532 = vmatpush2.bf16.msra.mxu0 %v1561
    %2533 = vmatprep.subr.bf16.mxu0 %v1554
    %2534 = vmatpush2.bf16.msra.mxu0 %v1553
    %2535 = vmatprep.subr.bf16.mxu0 %v1546
    %2536 = vmatpush2.bf16.msra.mxu0 %v1545
    %2537 = vmatprep.mubr.bf16.mxu0 %v2422
    %2538 = vmatmul.mubr.bf16.gmra.mxu0 %v2421
    %v2539 = vpop.f32.mrf.mxu0
    %v2540 = vadd.f32 0.0, %v2539
    %v2541 = vpop.f32.mrf.mxu0
    %v2542 = vadd.f32 0.0, %v2541
    %v2543 = vpop.f32.mrf.mxu0
    %v2544 = vpop.f32.mrf.mxu0
    %2545 = vdwg.mxu0
    %2546 = vmatprep.subr.bf16.mxu0 %v1540
    %2547 = vmatpush1.bf16.msra.mxu0 %v1539
    %2548 = vmatprep.subr.bf16.mxu0 %v1532
    %2549 = vmatpush1.bf16.msra.mxu0 %v1531
    %2550 = vmatprep.subr.bf16.mxu0 %v1524
    %2551 = vmatpush1.bf16.msra.mxu0 %v1523
    %2552 = vmatprep.subr.bf16.mxu0 %v1516
    %2553 = vmatpush1.bf16.msra.mxu0 %v1515
    %2554 = vmatprep.subr.bf16.mxu0 %v1508
    %2555 = vmatpush1.bf16.msra.mxu0 %v1507
    %2556 = vmatprep.subr.bf16.mxu0 %v1500
    %2557 = vmatpush1.bf16.msra.mxu0 %v1499
    %2558 = vmatprep.subr.bf16.mxu0 %v1492
    %2559 = vmatpush1.bf16.msra.mxu0 %v1491
    %2560 = vmatprep.subr.bf16.mxu0 %v1484
    %2561 = vmatpush1.bf16.msra.mxu0 %v1483
    %2562 = vmatprep.subr.bf16.mxu0 %v1604
    %2563 = vmatpush2.bf16.msra.mxu0 %v1603
    %2564 = vmatprep.subr.bf16.mxu0 %v1596
    %2565 = vmatpush2.bf16.msra.mxu0 %v1595
    %2566 = vmatprep.subr.bf16.mxu0 %v1588
    %2567 = vmatpush2.bf16.msra.mxu0 %v1587
    %2568 = vmatprep.subr.bf16.mxu0 %v1580
    %2569 = vmatpush2.bf16.msra.mxu0 %v1579
    %2570 = vmatprep.subr.bf16.mxu0 %v1572
    %2571 = vmatpush2.bf16.msra.mxu0 %v1571
    %2572 = vmatprep.subr.bf16.mxu0 %v1564
    %2573 = vmatpush2.bf16.msra.mxu0 %v1563
    %2574 = vmatprep.subr.bf16.mxu0 %v1556
    %2575 = vmatpush2.bf16.msra.mxu0 %v1555
    %2576 = vmatprep.subr.bf16.mxu0 %v1548
    %2577 = vmatpush2.bf16.msra.mxu0 %v1547
    %2578 = vmatprep.mubr.bf16.mxu0 %v2422
    %2579 = vmatmul.mubr.bf16.gmra.mxu0 %v2421
    %v2580 = vpop.f32.mrf.mxu0
    %v2581 = vadd.f32 0.0, %v2580
    %v2582 = vpop.f32.mrf.mxu0
    %v2583 = vadd.f32 0.0, %v2582
    %v2584 = vpop.f32.mrf.mxu0
    %v2585 = vpop.f32.mrf.mxu0
    %2586 = vdwg.mxu0
    %v2587 = vadd.f32 %v2413, %v2458
    %v2588 = vadd.f32 %v2414, %v2460
    %v2589 = vadd.f32 %v2415, %v2499
    %v2590 = vadd.f32 %v2416, %v2501
    %v2591 = vadd.f32 %v2417, %v2540
    %v2592 = vadd.f32 %v2418, %v2542
    %v2593 = vadd.f32 %v2419, %v2581
    %v2594 = vadd.f32 %v2420, %v2583
    %v2595 = vxor.u32 %v2587, 2147483648
    %v2596 = vxor.u32 %v2588, 2147483648
    %v2597 = vmul.f32 %v2595, 1.442695
    %v2598 = vpow.pop %v2597
    %v2599 = vmul.f32 %v2596, 1.442695
    %v2600 = vpow.pop %v2599
    %v2601 = vadd.f32 %v2598, 1.0
    %v2602 = vadd.f32 %v2600, 1.0
    %v2603 = vrcp.pop %v2601
    %v2604 = vmul.f32 1.0, %v2603
    %v2605 = vrcp.pop %v2602
    %v2606 = vmul.f32 1.0, %v2605
    %v2607 = vxor.u32 %v2589, 2147483648
    %v2608 = vxor.u32 %v2590, 2147483648
    %v2609 = vmul.f32 %v2607, 1.442695
    %v2610 = vpow.pop %v2609
    %v2611 = vmul.f32 %v2608, 1.442695
    %v2612 = vpow.pop %v2611
    %v2613 = vadd.f32 %v2610, 1.0
    %v2614 = vadd.f32 %v2612, 1.0
    %v2615 = vrcp.pop %v2613
    %v2616 = vmul.f32 1.0, %v2615
    %v2617 = vrcp.pop %v2614
    %v2618 = vmul.f32 1.0, %v2617
    %v2619 = vtanh.pop %v2591
    %v2620 = vtanh.pop %v2592
    %v2621 = vxor.u32 %v2593, 2147483648
    %v2622 = vxor.u32 %v2594, 2147483648
    %v2623 = vmul.f32 %v2621, 1.442695
    %v2624 = vpow.pop %v2623
    %v2625 = vmul.f32 %v2622, 1.442695
    %v2626 = vpow.pop %v2625
    %v2627 = vadd.f32 %v2624, 1.0
    %v2628 = vadd.f32 %v2626, 1.0
    %v2629 = vrcp.pop %v2627
    %v2630 = vmul.f32 1.0, %v2629
    %v2631 = vrcp.pop %v2628
    %v2632 = vmul.f32 1.0, %v2631
    %v2633 = vmul.f32 %v2616, %v2407
    %v2634 = vmul.f32 %v2618, %v2408
    %v2635 = vmul.f32 %v2604, %v2619
    %v2636 = vmul.f32 %v2606, %v2620
    %v2637 = vadd.f32 %v2633, %v2635
    %v2638 = vadd.f32 %v2634, %v2636
    %v2639 = vtanh.pop %v2637
    %v2640 = vtanh.pop %v2638
    %v2641 = vmul.f32 %v2630, %v2639
    %v2642 = vmul.f32 %v2632, %v2640
    %v2643 = vld [vmem:[#allocation3 + $0x100] sm:$0xff]
    %v2644 = vld [vmem:[#allocation3 + $0x108] sm:$0xff]
    %v2645 = vld [vmem:[#allocation3 + $0x110] sm:$0xff]
    %v2646 = vld [vmem:[#allocation3 + $0x118] sm:$0xff]
    %v2647 = vld [vmem:[#allocation3 + $0x120] sm:$0xff]
    %v2648 = vld [vmem:[#allocation3 + $0x128] sm:$0xff]
    %v2649 = vld [vmem:[#allocation3 + $0x130] sm:$0xff]
    %v2650 = vld [vmem:[#allocation3 + $0x138] sm:$0xff]
    %v2651 = vpack.c.bf16 %v2641, %v2641
    %v2652 = vpack.c.bf16 %v2642, %v2642
    %2653 = vmatprep.subr.bf16.mxu0 %v1534
    %2654 = vmatpush1.bf16.msra.mxu0 %v1533
    %2655 = vmatprep.subr.bf16.mxu0 %v1526
    %2656 = vmatpush1.bf16.msra.mxu0 %v1525
    %2657 = vmatprep.subr.bf16.mxu0 %v1518
    %2658 = vmatpush1.bf16.msra.mxu0 %v1517
    %2659 = vmatprep.subr.bf16.mxu0 %v1510
    %2660 = vmatpush1.bf16.msra.mxu0 %v1509
    %2661 = vmatprep.subr.bf16.mxu0 %v1502
    %2662 = vmatpush1.bf16.msra.mxu0 %v1501
    %2663 = vmatprep.subr.bf16.mxu0 %v1494
    %2664 = vmatpush1.bf16.msra.mxu0 %v1493
    %2665 = vmatprep.subr.bf16.mxu0 %v1486
    %2666 = vmatpush1.bf16.msra.mxu0 %v1485
    %2667 = vmatprep.subr.bf16.mxu0 %v1478
    %2668 = vmatpush1.bf16.msra.mxu0 %v1477
    %2669 = vmatprep.subr.bf16.mxu0 %v1598
    %2670 = vmatpush2.bf16.msra.mxu0 %v1597
    %2671 = vmatprep.subr.bf16.mxu0 %v1590
    %2672 = vmatpush2.bf16.msra.mxu0 %v1589
    %2673 = vmatprep.subr.bf16.mxu0 %v1582
    %2674 = vmatpush2.bf16.msra.mxu0 %v1581
    %2675 = vmatprep.subr.bf16.mxu0 %v1574
    %2676 = vmatpush2.bf16.msra.mxu0 %v1573
    %2677 = vmatprep.subr.bf16.mxu0 %v1566
    %2678 = vmatpush2.bf16.msra.mxu0 %v1565
    %2679 = vmatprep.subr.bf16.mxu0 %v1558
    %2680 = vmatpush2.bf16.msra.mxu0 %v1557
    %2681 = vmatprep.subr.bf16.mxu0 %v1550
    %2682 = vmatpush2.bf16.msra.mxu0 %v1549
    %2683 = vmatprep.subr.bf16.mxu0 %v1542
    %2684 = vmatpush2.bf16.msra.mxu0 %v1541
    %2685 = vmatprep.mubr.bf16.mxu0 %v2652
    %2686 = vmatmul.mubr.bf16.gmra.mxu0 %v2651
    %v2687 = vpop.f32.mrf.mxu0
    %v2688 = vadd.f32 0.0, %v2687
    %v2689 = vpop.f32.mrf.mxu0
    %v2690 = vadd.f32 0.0, %v2689
    %v2691 = vpop.f32.mrf.mxu0
    %v2692 = vpop.f32.mrf.mxu0
    %2693 = vdwg.mxu0
    %2694 = vmatprep.subr.bf16.mxu0 %v1536
    %2695 = vmatpush1.bf16.msra.mxu0 %v1535
    %2696 = vmatprep.subr.bf16.mxu0 %v1528
    %2697 = vmatpush1.bf16.msra.mxu0 %v1527
    %2698 = vmatprep.subr.bf16.mxu0 %v1520
    %2699 = vmatpush1.bf16.msra.mxu0 %v1519
    %2700 = vmatprep.subr.bf16.mxu0 %v1512
    %2701 = vmatpush1.bf16.msra.mxu0 %v1511
    %2702 = vmatprep.subr.bf16.mxu0 %v1504
    %2703 = vmatpush1.bf16.msra.mxu0 %v1503
    %2704 = vmatprep.subr.bf16.mxu0 %v1496
    %2705 = vmatpush1.bf16.msra.mxu0 %v1495
    %2706 = vmatprep.subr.bf16.mxu0 %v1488
    %2707 = vmatpush1.bf16.msra.mxu0 %v1487
    %2708 = vmatprep.subr.bf16.mxu0 %v1480
    %2709 = vmatpush1.bf16.msra.mxu0 %v1479
    %2710 = vmatprep.subr.bf16.mxu0 %v1600
    %2711 = vmatpush2.bf16.msra.mxu0 %v1599
    %2712 = vmatprep.subr.bf16.mxu0 %v1592
    %2713 = vmatpush2.bf16.msra.mxu0 %v1591
    %2714 = vmatprep.subr.bf16.mxu0 %v1584
    %2715 = vmatpush2.bf16.msra.mxu0 %v1583
    %2716 = vmatprep.subr.bf16.mxu0 %v1576
    %2717 = vmatpush2.bf16.msra.mxu0 %v1575
    %2718 = vmatprep.subr.bf16.mxu0 %v1568
    %2719 = vmatpush2.bf16.msra.mxu0 %v1567
    %2720 = vmatprep.subr.bf16.mxu0 %v1560
    %2721 = vmatpush2.bf16.msra.mxu0 %v1559
    %2722 = vmatprep.subr.bf16.mxu0 %v1552
    %2723 = vmatpush2.bf16.msra.mxu0 %v1551
    %2724 = vmatprep.subr.bf16.mxu0 %v1544
    %2725 = vmatpush2.bf16.msra.mxu0 %v1543
    %2726 = vmatprep.mubr.bf16.mxu0 %v2652
    %2727 = vmatmul.mubr.bf16.gmra.mxu0 %v2651
    %v2728 = vpop.f32.mrf.mxu0
    %v2729 = vadd.f32 0.0, %v2728
    %v2730 = vpop.f32.mrf.mxu0
    %v2731 = vadd.f32 0.0, %v2730
    %v2732 = vpop.f32.mrf.mxu0
    %v2733 = vpop.f32.mrf.mxu0
    %2734 = vdwg.mxu0
    %2735 = vmatprep.subr.bf16.mxu0 %v1538
    %2736 = vmatpush1.bf16.msra.mxu0 %v1537
    %2737 = vmatprep.subr.bf16.mxu0 %v1530
    %2738 = vmatpush1.bf16.msra.mxu0 %v1529
    %2739 = vmatprep.subr.bf16.mxu0 %v1522
    %2740 = vmatpush1.bf16.msra.mxu0 %v1521
    %2741 = vmatprep.subr.bf16.mxu0 %v1514
    %2742 = vmatpush1.bf16.msra.mxu0 %v1513
    %2743 = vmatprep.subr.bf16.mxu0 %v1506
    %2744 = vmatpush1.bf16.msra.mxu0 %v1505
    %2745 = vmatprep.subr.bf16.mxu0 %v1498
    %2746 = vmatpush1.bf16.msra.mxu0 %v1497
    %2747 = vmatprep.subr.bf16.mxu0 %v1490
    %2748 = vmatpush1.bf16.msra.mxu0 %v1489
    %2749 = vmatprep.subr.bf16.mxu0 %v1482
    %2750 = vmatpush1.bf16.msra.mxu0 %v1481
    %2751 = vmatprep.subr.bf16.mxu0 %v1602
    %2752 = vmatpush2.bf16.msra.mxu0 %v1601
    %2753 = vmatprep.subr.bf16.mxu0 %v1594
    %2754 = vmatpush2.bf16.msra.mxu0 %v1593
    %2755 = vmatprep.subr.bf16.mxu0 %v1586
    %2756 = vmatpush2.bf16.msra.mxu0 %v1585
    %2757 = vmatprep.subr.bf16.mxu0 %v1578
    %2758 = vmatpush2.bf16.msra.mxu0 %v1577
    %2759 = vmatprep.subr.bf16.mxu0 %v1570
    %2760 = vmatpush2.bf16.msra.mxu0 %v1569
    %2761 = vmatprep.subr.bf16.mxu0 %v1562
    %2762 = vmatpush2.bf16.msra.mxu0 %v1561
    %2763 = vmatprep.subr.bf16.mxu0 %v1554
    %2764 = vmatpush2.bf16.msra.mxu0 %v1553
    %2765 = vmatprep.subr.bf16.mxu0 %v1546
    %2766 = vmatpush2.bf16.msra.mxu0 %v1545
    %2767 = vmatprep.mubr.bf16.mxu0 %v2652
    %2768 = vmatmul.mubr.bf16.gmra.mxu0 %v2651
    %v2769 = vpop.f32.mrf.mxu0
    %v2770 = vadd.f32 0.0, %v2769
    %v2771 = vpop.f32.mrf.mxu0
    %v2772 = vadd.f32 0.0, %v2771
    %v2773 = vpop.f32.mrf.mxu0
    %v2774 = vpop.f32.mrf.mxu0
    %2775 = vdwg.mxu0
    %2776 = vmatprep.subr.bf16.mxu0 %v1540
    %2777 = vmatpush1.bf16.msra.mxu0 %v1539
    %2778 = vmatprep.subr.bf16.mxu0 %v1532
    %2779 = vmatpush1.bf16.msra.mxu0 %v1531
    %2780 = vmatprep.subr.bf16.mxu0 %v1524
    %2781 = vmatpush1.bf16.msra.mxu0 %v1523
    %2782 = vmatprep.subr.bf16.mxu0 %v1516
    %2783 = vmatpush1.bf16.msra.mxu0 %v1515
    %2784 = vmatprep.subr.bf16.mxu0 %v1508
    %2785 = vmatpush1.bf16.msra.mxu0 %v1507
    %2786 = vmatprep.subr.bf16.mxu0 %v1500
    %2787 = vmatpush1.bf16.msra.mxu0 %v1499
    %2788 = vmatprep.subr.bf16.mxu0 %v1492
    %2789 = vmatpush1.bf16.msra.mxu0 %v1491
    %2790 = vmatprep.subr.bf16.mxu0 %v1484
    %2791 = vmatpush1.bf16.msra.mxu0 %v1483
    %2792 = vmatprep.subr.bf16.mxu0 %v1604
    %2793 = vmatpush2.bf16.msra.mxu0 %v1603
    %2794 = vmatprep.subr.bf16.mxu0 %v1596
    %2795 = vmatpush2.bf16.msra.mxu0 %v1595
    %2796 = vmatprep.subr.bf16.mxu0 %v1588
    %2797 = vmatpush2.bf16.msra.mxu0 %v1587
    %2798 = vmatprep.subr.bf16.mxu0 %v1580
    %2799 = vmatpush2.bf16.msra.mxu0 %v1579
    %2800 = vmatprep.subr.bf16.mxu0 %v1572
    %2801 = vmatpush2.bf16.msra.mxu0 %v1571
    %2802 = vmatprep.subr.bf16.mxu0 %v1564
    %2803 = vmatpush2.bf16.msra.mxu0 %v1563
    %2804 = vmatprep.subr.bf16.mxu0 %v1556
    %2805 = vmatpush2.bf16.msra.mxu0 %v1555
    %2806 = vmatprep.subr.bf16.mxu0 %v1548
    %2807 = vmatpush2.bf16.msra.mxu0 %v1547
    %2808 = vmatprep.mubr.bf16.mxu0 %v2652
    %2809 = vmatmul.mubr.bf16.gmra.mxu0 %v2651
    %v2810 = vpop.f32.mrf.mxu0
    %v2811 = vadd.f32 0.0, %v2810
    %v2812 = vpop.f32.mrf.mxu0
    %v2813 = vadd.f32 0.0, %v2812
    %v2814 = vpop.f32.mrf.mxu0
    %v2815 = vpop.f32.mrf.mxu0
    %2816 = vdwg.mxu0
    %v2817 = vadd.f32 %v2643, %v2688
    %v2818 = vadd.f32 %v2644, %v2690
    %v2819 = vadd.f32 %v2645, %v2729
    %v2820 = vadd.f32 %v2646, %v2731
    %v2821 = vadd.f32 %v2647, %v2770
    %v2822 = vadd.f32 %v2648, %v2772
    %v2823 = vadd.f32 %v2649, %v2811
    %v2824 = vadd.f32 %v2650, %v2813
    %v2825 = vxor.u32 %v2817, 2147483648
    %v2826 = vxor.u32 %v2818, 2147483648
    %v2827 = vmul.f32 %v2825, 1.442695
    %v2828 = vpow.pop %v2827
    %v2829 = vmul.f32 %v2826, 1.442695
    %v2830 = vpow.pop %v2829
    %v2831 = vadd.f32 %v2828, 1.0
    %v2832 = vadd.f32 %v2830, 1.0
    %v2833 = vrcp.pop %v2831
    %v2834 = vmul.f32 1.0, %v2833
    %v2835 = vrcp.pop %v2832
    %v2836 = vmul.f32 1.0, %v2835
    %v2837 = vxor.u32 %v2819, 2147483648
    %v2838 = vxor.u32 %v2820, 2147483648
    %v2839 = vmul.f32 %v2837, 1.442695
    %v2840 = vpow.pop %v2839
    %v2841 = vmul.f32 %v2838, 1.442695
    %v2842 = vpow.pop %v2841
    %v2843 = vadd.f32 %v2840, 1.0
    %v2844 = vadd.f32 %v2842, 1.0
    %v2845 = vrcp.pop %v2843
    %v2846 = vmul.f32 1.0, %v2845
    %v2847 = vrcp.pop %v2844
    %v2848 = vmul.f32 1.0, %v2847
    %v2849 = vtanh.pop %v2821
    %v2850 = vtanh.pop %v2822
    %v2851 = vxor.u32 %v2823, 2147483648
    %v2852 = vxor.u32 %v2824, 2147483648
    %v2853 = vmul.f32 %v2851, 1.442695
    %v2854 = vpow.pop %v2853
    %v2855 = vmul.f32 %v2852, 1.442695
    %v2856 = vpow.pop %v2855
    %v2857 = vadd.f32 %v2854, 1.0
    %v2858 = vadd.f32 %v2856, 1.0
    %v2859 = vrcp.pop %v2857
    %v2860 = vmul.f32 1.0, %v2859
    %v2861 = vrcp.pop %v2858
    %v2862 = vmul.f32 1.0, %v2861
    %v2863 = vmul.f32 %v2846, %v2637
    %v2864 = vmul.f32 %v2848, %v2638
    %v2865 = vmul.f32 %v2834, %v2849
    %v2866 = vmul.f32 %v2836, %v2850
    %v2867 = vadd.f32 %v2863, %v2865
    %v2868 = vadd.f32 %v2864, %v2866
    %v2869 = vtanh.pop %v2867
    %v2870 = vtanh.pop %v2868
    %v2871 = vmul.f32 %v2860, %v2869
    %v2872 = vmul.f32 %v2862, %v2870
    %v2873 = vld [vmem:[#allocation3 + $0x140] sm:$0xff]
    %v2874 = vld [vmem:[#allocation3 + $0x148] sm:$0xff]
    %v2875 = vld [vmem:[#allocation3 + $0x150] sm:$0xff]
    %v2876 = vld [vmem:[#allocation3 + $0x158] sm:$0xff]
    %v2877 = vld [vmem:[#allocation3 + $0x160] sm:$0xff]
    %v2878 = vld [vmem:[#allocation3 + $0x168] sm:$0xff]
    %v2879 = vld [vmem:[#allocation3 + $0x170] sm:$0xff]
    %v2880 = vld [vmem:[#allocation3 + $0x178] sm:$0xff]
    %v2881 = vpack.c.bf16 %v2871, %v2871
    %v2882 = vpack.c.bf16 %v2872, %v2872
    %2883 = vmatprep.subr.bf16.mxu0 %v1534
    %2884 = vmatpush1.bf16.msra.mxu0 %v1533
    %2885 = vmatprep.subr.bf16.mxu0 %v1526
    %2886 = vmatpush1.bf16.msra.mxu0 %v1525
    %2887 = vmatprep.subr.bf16.mxu0 %v1518
    %2888 = vmatpush1.bf16.msra.mxu0 %v1517
    %2889 = vmatprep.subr.bf16.mxu0 %v1510
    %2890 = vmatpush1.bf16.msra.mxu0 %v1509
    %2891 = vmatprep.subr.bf16.mxu0 %v1502
    %2892 = vmatpush1.bf16.msra.mxu0 %v1501
    %2893 = vmatprep.subr.bf16.mxu0 %v1494
    %2894 = vmatpush1.bf16.msra.mxu0 %v1493
    %2895 = vmatprep.subr.bf16.mxu0 %v1486
    %2896 = vmatpush1.bf16.msra.mxu0 %v1485
    %2897 = vmatprep.subr.bf16.mxu0 %v1478
    %2898 = vmatpush1.bf16.msra.mxu0 %v1477
    %2899 = vmatprep.subr.bf16.mxu0 %v1598
    %2900 = vmatpush2.bf16.msra.mxu0 %v1597
    %2901 = vmatprep.subr.bf16.mxu0 %v1590
    %2902 = vmatpush2.bf16.msra.mxu0 %v1589
    %2903 = vmatprep.subr.bf16.mxu0 %v1582
    %2904 = vmatpush2.bf16.msra.mxu0 %v1581
    %2905 = vmatprep.subr.bf16.mxu0 %v1574
    %2906 = vmatpush2.bf16.msra.mxu0 %v1573
    %2907 = vmatprep.subr.bf16.mxu0 %v1566
    %2908 = vmatpush2.bf16.msra.mxu0 %v1565
    %2909 = vmatprep.subr.bf16.mxu0 %v1558
    %2910 = vmatpush2.bf16.msra.mxu0 %v1557
    %2911 = vmatprep.subr.bf16.mxu0 %v1550
    %2912 = vmatpush2.bf16.msra.mxu0 %v1549
    %2913 = vmatprep.subr.bf16.mxu0 %v1542
    %2914 = vmatpush2.bf16.msra.mxu0 %v1541
    %2915 = vmatprep.mubr.bf16.mxu0 %v2882
    %2916 = vmatmul.mubr.bf16.gmra.mxu0 %v2881
    %v2917 = vpop.f32.mrf.mxu0
    %v2918 = vadd.f32 0.0, %v2917
    %v2919 = vpop.f32.mrf.mxu0
    %v2920 = vadd.f32 0.0, %v2919
    %v2921 = vpop.f32.mrf.mxu0
    %v2922 = vpop.f32.mrf.mxu0
    %2923 = vdwg.mxu0
    %2924 = vmatprep.subr.bf16.mxu0 %v1536
    %2925 = vmatpush1.bf16.msra.mxu0 %v1535
    %2926 = vmatprep.subr.bf16.mxu0 %v1528
    %2927 = vmatpush1.bf16.msra.mxu0 %v1527
    %2928 = vmatprep.subr.bf16.mxu0 %v1520
    %2929 = vmatpush1.bf16.msra.mxu0 %v1519
    %2930 = vmatprep.subr.bf16.mxu0 %v1512
    %2931 = vmatpush1.bf16.msra.mxu0 %v1511
    %2932 = vmatprep.subr.bf16.mxu0 %v1504
    %2933 = vmatpush1.bf16.msra.mxu0 %v1503
    %2934 = vmatprep.subr.bf16.mxu0 %v1496
    %2935 = vmatpush1.bf16.msra.mxu0 %v1495
    %2936 = vmatprep.subr.bf16.mxu0 %v1488
    %2937 = vmatpush1.bf16.msra.mxu0 %v1487
    %2938 = vmatprep.subr.bf16.mxu0 %v1480
    %2939 = vmatpush1.bf16.msra.mxu0 %v1479
    %2940 = vmatprep.subr.bf16.mxu0 %v1600
    %2941 = vmatpush2.bf16.msra.mxu0 %v1599
    %2942 = vmatprep.subr.bf16.mxu0 %v1592
    %2943 = vmatpush2.bf16.msra.mxu0 %v1591
    %2944 = vmatprep.subr.bf16.mxu0 %v1584
    %2945 = vmatpush2.bf16.msra.mxu0 %v1583
    %2946 = vmatprep.subr.bf16.mxu0 %v1576
    %2947 = vmatpush2.bf16.msra.mxu0 %v1575
    %2948 = vmatprep.subr.bf16.mxu0 %v1568
    %2949 = vmatpush2.bf16.msra.mxu0 %v1567
    %2950 = vmatprep.subr.bf16.mxu0 %v1560
    %2951 = vmatpush2.bf16.msra.mxu0 %v1559
    %2952 = vmatprep.subr.bf16.mxu0 %v1552
    %2953 = vmatpush2.bf16.msra.mxu0 %v1551
    %2954 = vmatprep.subr.bf16.mxu0 %v1544
    %2955 = vmatpush2.bf16.msra.mxu0 %v1543
    %2956 = vmatprep.mubr.bf16.mxu0 %v2882
    %2957 = vmatmul.mubr.bf16.gmra.mxu0 %v2881
    %v2958 = vpop.f32.mrf.mxu0
    %v2959 = vadd.f32 0.0, %v2958
    %v2960 = vpop.f32.mrf.mxu0
    %v2961 = vadd.f32 0.0, %v2960
    %v2962 = vpop.f32.mrf.mxu0
    %v2963 = vpop.f32.mrf.mxu0
    %2964 = vdwg.mxu0
    %2965 = vmatprep.subr.bf16.mxu0 %v1538
    %2966 = vmatpush1.bf16.msra.mxu0 %v1537
    %2967 = vmatprep.subr.bf16.mxu0 %v1530
    %2968 = vmatpush1.bf16.msra.mxu0 %v1529
    %2969 = vmatprep.subr.bf16.mxu0 %v1522
    %2970 = vmatpush1.bf16.msra.mxu0 %v1521
    %2971 = vmatprep.subr.bf16.mxu0 %v1514
    %2972 = vmatpush1.bf16.msra.mxu0 %v1513
    %2973 = vmatprep.subr.bf16.mxu0 %v1506
    %2974 = vmatpush1.bf16.msra.mxu0 %v1505
    %2975 = vmatprep.subr.bf16.mxu0 %v1498
    %2976 = vmatpush1.bf16.msra.mxu0 %v1497
    %2977 = vmatprep.subr.bf16.mxu0 %v1490
    %2978 = vmatpush1.bf16.msra.mxu0 %v1489
    %2979 = vmatprep.subr.bf16.mxu0 %v1482
    %2980 = vmatpush1.bf16.msra.mxu0 %v1481
    %2981 = vmatprep.subr.bf16.mxu0 %v1602
    %2982 = vmatpush2.bf16.msra.mxu0 %v1601
    %2983 = vmatprep.subr.bf16.mxu0 %v1594
    %2984 = vmatpush2.bf16.msra.mxu0 %v1593
    %2985 = vmatprep.subr.bf16.mxu0 %v1586
    %2986 = vmatpush2.bf16.msra.mxu0 %v1585
    %2987 = vmatprep.subr.bf16.mxu0 %v1578
    %2988 = vmatpush2.bf16.msra.mxu0 %v1577
    %2989 = vmatprep.subr.bf16.mxu0 %v1570
    %2990 = vmatpush2.bf16.msra.mxu0 %v1569
    %2991 = vmatprep.subr.bf16.mxu0 %v1562
    %2992 = vmatpush2.bf16.msra.mxu0 %v1561
    %2993 = vmatprep.subr.bf16.mxu0 %v1554
    %2994 = vmatpush2.bf16.msra.mxu0 %v1553
    %2995 = vmatprep.subr.bf16.mxu0 %v1546
    %2996 = vmatpush2.bf16.msra.mxu0 %v1545
    %2997 = vmatprep.mubr.bf16.mxu0 %v2882
    %2998 = vmatmul.mubr.bf16.gmra.mxu0 %v2881
    %v2999 = vpop.f32.mrf.mxu0
    %v3000 = vadd.f32 0.0, %v2999
    %v3001 = vpop.f32.mrf.mxu0
    %v3002 = vadd.f32 0.0, %v3001
    %v3003 = vpop.f32.mrf.mxu0
    %v3004 = vpop.f32.mrf.mxu0
    %3005 = vdwg.mxu0
    %3006 = vmatprep.subr.bf16.mxu0 %v1540
    %3007 = vmatpush1.bf16.msra.mxu0 %v1539
    %3008 = vmatprep.subr.bf16.mxu0 %v1532
    %3009 = vmatpush1.bf16.msra.mxu0 %v1531
    %3010 = vmatprep.subr.bf16.mxu0 %v1524
    %3011 = vmatpush1.bf16.msra.mxu0 %v1523
    %3012 = vmatprep.subr.bf16.mxu0 %v1516
    %3013 = vmatpush1.bf16.msra.mxu0 %v1515
    %3014 = vmatprep.subr.bf16.mxu0 %v1508
    %3015 = vmatpush1.bf16.msra.mxu0 %v1507
    %3016 = vmatprep.subr.bf16.mxu0 %v1500
    %3017 = vmatpush1.bf16.msra.mxu0 %v1499
    %3018 = vmatprep.subr.bf16.mxu0 %v1492
    %3019 = vmatpush1.bf16.msra.mxu0 %v1491
    %3020 = vmatprep.subr.bf16.mxu0 %v1484
    %3021 = vmatpush1.bf16.msra.mxu0 %v1483
    %3022 = vmatprep.subr.bf16.mxu0 %v1604
    %3023 = vmatpush2.bf16.msra.mxu0 %v1603
    %3024 = vmatprep.subr.bf16.mxu0 %v1596
    %3025 = vmatpush2.bf16.msra.mxu0 %v1595
    %3026 = vmatprep.subr.bf16.mxu0 %v1588
    %3027 = vmatpush2.bf16.msra.mxu0 %v1587
    %3028 = vmatprep.subr.bf16.mxu0 %v1580
    %3029 = vmatpush2.bf16.msra.mxu0 %v1579
    %3030 = vmatprep.subr.bf16.mxu0 %v1572
    %3031 = vmatpush2.bf16.msra.mxu0 %v1571
    %3032 = vmatprep.subr.bf16.mxu0 %v1564
    %3033 = vmatpush2.bf16.msra.mxu0 %v1563
    %3034 = vmatprep.subr.bf16.mxu0 %v1556
    %3035 = vmatpush2.bf16.msra.mxu0 %v1555
    %3036 = vmatprep.subr.bf16.mxu0 %v1548
    %3037 = vmatpush2.bf16.msra.mxu0 %v1547
    %3038 = vmatprep.mubr.bf16.mxu0 %v2882
    %3039 = vmatmul.mubr.bf16.gmra.mxu0 %v2881
    %v3040 = vpop.f32.mrf.mxu0
    %v3041 = vadd.f32 0.0, %v3040
    %v3042 = vpop.f32.mrf.mxu0
    %v3043 = vadd.f32 0.0, %v3042
    %v3044 = vpop.f32.mrf.mxu0
    %v3045 = vpop.f32.mrf.mxu0
    %3046 = vdwg.mxu0
    %v3047 = vadd.f32 %v2873, %v2918
    %v3048 = vadd.f32 %v2874, %v2920
    %v3049 = vadd.f32 %v2875, %v2959
    %v3050 = vadd.f32 %v2876, %v2961
    %v3051 = vadd.f32 %v2877, %v3000
    %v3052 = vadd.f32 %v2878, %v3002
    %v3053 = vadd.f32 %v2879, %v3041
    %v3054 = vadd.f32 %v2880, %v3043
    %v3055 = vxor.u32 %v3047, 2147483648
    %v3056 = vxor.u32 %v3048, 2147483648
    %v3057 = vmul.f32 %v3055, 1.442695
    %v3058 = vpow.pop %v3057
    %v3059 = vmul.f32 %v3056, 1.442695
    %v3060 = vpow.pop %v3059
    %v3061 = vadd.f32 %v3058, 1.0
    %v3062 = vadd.f32 %v3060, 1.0
    %v3063 = vrcp.pop %v3061
    %v3064 = vmul.f32 1.0, %v3063
    %v3065 = vrcp.pop %v3062
    %v3066 = vmul.f32 1.0, %v3065
    %v3067 = vxor.u32 %v3049, 2147483648
    %v3068 = vxor.u32 %v3050, 2147483648
    %v3069 = vmul.f32 %v3067, 1.442695
    %v3070 = vpow.pop %v3069
    %v3071 = vmul.f32 %v3068, 1.442695
    %v3072 = vpow.pop %v3071
    %v3073 = vadd.f32 %v3070, 1.0
    %v3074 = vadd.f32 %v3072, 1.0
    %v3075 = vrcp.pop %v3073
    %v3076 = vmul.f32 1.0, %v3075
    %v3077 = vrcp.pop %v3074
    %v3078 = vmul.f32 1.0, %v3077
    %v3079 = vtanh.pop %v3051
    %v3080 = vtanh.pop %v3052
    %v3081 = vxor.u32 %v3053, 2147483648
    %v3082 = vxor.u32 %v3054, 2147483648
    %v3083 = vmul.f32 %v3081, 1.442695
    %v3084 = vpow.pop %v3083
    %v3085 = vmul.f32 %v3082, 1.442695
    %v3086 = vpow.pop %v3085
    %v3087 = vadd.f32 %v3084, 1.0
    %v3088 = vadd.f32 %v3086, 1.0
    %v3089 = vrcp.pop %v3087
    %v3090 = vmul.f32 1.0, %v3089
    %v3091 = vrcp.pop %v3088
    %v3092 = vmul.f32 1.0, %v3091
    %v3093 = vmul.f32 %v3076, %v2867
    %v3094 = vmul.f32 %v3078, %v2868
    %v3095 = vmul.f32 %v3064, %v3079
    %v3096 = vmul.f32 %v3066, %v3080
    %v3097 = vadd.f32 %v3093, %v3095
    %v3098 = vadd.f32 %v3094, %v3096
    %v3099 = vtanh.pop %v3097
    %v3100 = vtanh.pop %v3098
    %v3101 = vmul.f32 %v3090, %v3099
    %v3102 = vmul.f32 %v3092, %v3100
    %v3103 = vld [vmem:[#allocation3 + $0x180] sm:$0xff]
    %v3104 = vld [vmem:[#allocation3 + $0x188] sm:$0xff]
    %v3105 = vld [vmem:[#allocation3 + $0x190] sm:$0xff]
    %v3106 = vld [vmem:[#allocation3 + $0x198] sm:$0xff]
    %v3107 = vld [vmem:[#allocation3 + $0x1a0] sm:$0xff]
    %v3108 = vld [vmem:[#allocation3 + $0x1a8] sm:$0xff]
    %v3109 = vld [vmem:[#allocation3 + $0x1b0] sm:$0xff]
    %v3110 = vld [vmem:[#allocation3 + $0x1b8] sm:$0xff]
    %v3111 = vpack.c.bf16 %v3101, %v3101
    %v3112 = vpack.c.bf16 %v3102, %v3102
    %3113 = vmatprep.subr.bf16.mxu0 %v1534
    %3114 = vmatpush1.bf16.msra.mxu0 %v1533
    %3115 = vmatprep.subr.bf16.mxu0 %v1526
    %3116 = vmatpush1.bf16.msra.mxu0 %v1525
    %3117 = vmatprep.subr.bf16.mxu0 %v1518
    %3118 = vmatpush1.bf16.msra.mxu0 %v1517
    %3119 = vmatprep.subr.bf16.mxu0 %v1510
    %3120 = vmatpush1.bf16.msra.mxu0 %v1509
    %3121 = vmatprep.subr.bf16.mxu0 %v1502
    %3122 = vmatpush1.bf16.msra.mxu0 %v1501
    %3123 = vmatprep.subr.bf16.mxu0 %v1494
    %3124 = vmatpush1.bf16.msra.mxu0 %v1493
    %3125 = vmatprep.subr.bf16.mxu0 %v1486
    %3126 = vmatpush1.bf16.msra.mxu0 %v1485
    %3127 = vmatprep.subr.bf16.mxu0 %v1478
    %3128 = vmatpush1.bf16.msra.mxu0 %v1477
    %3129 = vmatprep.subr.bf16.mxu0 %v1598
    %3130 = vmatpush2.bf16.msra.mxu0 %v1597
    %3131 = vmatprep.subr.bf16.mxu0 %v1590
    %3132 = vmatpush2.bf16.msra.mxu0 %v1589
    %3133 = vmatprep.subr.bf16.mxu0 %v1582
    %3134 = vmatpush2.bf16.msra.mxu0 %v1581
    %3135 = vmatprep.subr.bf16.mxu0 %v1574
    %3136 = vmatpush2.bf16.msra.mxu0 %v1573
    %3137 = vmatprep.subr.bf16.mxu0 %v1566
    %3138 = vmatpush2.bf16.msra.mxu0 %v1565
    %3139 = vmatprep.subr.bf16.mxu0 %v1558
    %3140 = vmatpush2.bf16.msra.mxu0 %v1557
    %3141 = vmatprep.subr.bf16.mxu0 %v1550
    %3142 = vmatpush2.bf16.msra.mxu0 %v1549
    %3143 = vmatprep.subr.bf16.mxu0 %v1542
    %3144 = vmatpush2.bf16.msra.mxu0 %v1541
    %3145 = vmatprep.mubr.bf16.mxu0 %v3112
    %3146 = vmatmul.mubr.bf16.gmra.mxu0 %v3111
    %v3147 = vpop.f32.mrf.mxu0
    %v3148 = vadd.f32 0.0, %v3147
    %v3149 = vpop.f32.mrf.mxu0
    %v3150 = vadd.f32 0.0, %v3149
    %v3151 = vpop.f32.mrf.mxu0
    %v3152 = vpop.f32.mrf.mxu0
    %3153 = vdwg.mxu0
    %3154 = vmatprep.subr.bf16.mxu0 %v1536
    %3155 = vmatpush1.bf16.msra.mxu0 %v1535
    %3156 = vmatprep.subr.bf16.mxu0 %v1528
    %3157 = vmatpush1.bf16.msra.mxu0 %v1527
    %3158 = vmatprep.subr.bf16.mxu0 %v1520
    %3159 = vmatpush1.bf16.msra.mxu0 %v1519
    %3160 = vmatprep.subr.bf16.mxu0 %v1512
    %3161 = vmatpush1.bf16.msra.mxu0 %v1511
    %3162 = vmatprep.subr.bf16.mxu0 %v1504
    %3163 = vmatpush1.bf16.msra.mxu0 %v1503
    %3164 = vmatprep.subr.bf16.mxu0 %v1496
    %3165 = vmatpush1.bf16.msra.mxu0 %v1495
    %3166 = vmatprep.subr.bf16.mxu0 %v1488
    %3167 = vmatpush1.bf16.msra.mxu0 %v1487
    %3168 = vmatprep.subr.bf16.mxu0 %v1480
    %3169 = vmatpush1.bf16.msra.mxu0 %v1479
    %3170 = vmatprep.subr.bf16.mxu0 %v1600
    %3171 = vmatpush2.bf16.msra.mxu0 %v1599
    %3172 = vmatprep.subr.bf16.mxu0 %v1592
    %3173 = vmatpush2.bf16.msra.mxu0 %v1591
    %3174 = vmatprep.subr.bf16.mxu0 %v1584
    %3175 = vmatpush2.bf16.msra.mxu0 %v1583
    %3176 = vmatprep.subr.bf16.mxu0 %v1576
    %3177 = vmatpush2.bf16.msra.mxu0 %v1575
    %3178 = vmatprep.subr.bf16.mxu0 %v1568
    %3179 = vmatpush2.bf16.msra.mxu0 %v1567
    %3180 = vmatprep.subr.bf16.mxu0 %v1560
    %3181 = vmatpush2.bf16.msra.mxu0 %v1559
    %3182 = vmatprep.subr.bf16.mxu0 %v1552
    %3183 = vmatpush2.bf16.msra.mxu0 %v1551
    %3184 = vmatprep.subr.bf16.mxu0 %v1544
    %3185 = vmatpush2.bf16.msra.mxu0 %v1543
    %3186 = vmatprep.mubr.bf16.mxu0 %v3112
    %3187 = vmatmul.mubr.bf16.gmra.mxu0 %v3111
    %v3188 = vpop.f32.mrf.mxu0
    %v3189 = vadd.f32 0.0, %v3188
    %v3190 = vpop.f32.mrf.mxu0
    %v3191 = vadd.f32 0.0, %v3190
    %v3192 = vpop.f32.mrf.mxu0
    %v3193 = vpop.f32.mrf.mxu0
    %3194 = vdwg.mxu0
    %3195 = vmatprep.subr.bf16.mxu0 %v1538
    %3196 = vmatpush1.bf16.msra.mxu0 %v1537
    %3197 = vmatprep.subr.bf16.mxu0 %v1530
    %3198 = vmatpush1.bf16.msra.mxu0 %v1529
    %3199 = vmatprep.subr.bf16.mxu0 %v1522
    %3200 = vmatpush1.bf16.msra.mxu0 %v1521
    %3201 = vmatprep.subr.bf16.mxu0 %v1514
    %3202 = vmatpush1.bf16.msra.mxu0 %v1513
    %3203 = vmatprep.subr.bf16.mxu0 %v1506
    %3204 = vmatpush1.bf16.msra.mxu0 %v1505
    %3205 = vmatprep.subr.bf16.mxu0 %v1498
    %3206 = vmatpush1.bf16.msra.mxu0 %v1497
    %3207 = vmatprep.subr.bf16.mxu0 %v1490
    %3208 = vmatpush1.bf16.msra.mxu0 %v1489
    %3209 = vmatprep.subr.bf16.mxu0 %v1482
    %3210 = vmatpush1.bf16.msra.mxu0 %v1481
    %3211 = vmatprep.subr.bf16.mxu0 %v1602
    %3212 = vmatpush2.bf16.msra.mxu0 %v1601
    %3213 = vmatprep.subr.bf16.mxu0 %v1594
    %3214 = vmatpush2.bf16.msra.mxu0 %v1593
    %3215 = vmatprep.subr.bf16.mxu0 %v1586
    %3216 = vmatpush2.bf16.msra.mxu0 %v1585
    %3217 = vmatprep.subr.bf16.mxu0 %v1578
    %3218 = vmatpush2.bf16.msra.mxu0 %v1577
    %3219 = vmatprep.subr.bf16.mxu0 %v1570
    %3220 = vmatpush2.bf16.msra.mxu0 %v1569
    %3221 = vmatprep.subr.bf16.mxu0 %v1562
    %3222 = vmatpush2.bf16.msra.mxu0 %v1561
    %3223 = vmatprep.subr.bf16.mxu0 %v1554
    %3224 = vmatpush2.bf16.msra.mxu0 %v1553
    %3225 = vmatprep.subr.bf16.mxu0 %v1546
    %3226 = vmatpush2.bf16.msra.mxu0 %v1545
    %3227 = vmatprep.mubr.bf16.mxu0 %v3112
    %3228 = vmatmul.mubr.bf16.gmra.mxu0 %v3111
    %v3229 = vpop.f32.mrf.mxu0
    %v3230 = vadd.f32 0.0, %v3229
    %v3231 = vpop.f32.mrf.mxu0
    %v3232 = vadd.f32 0.0, %v3231
    %v3233 = vpop.f32.mrf.mxu0
    %v3234 = vpop.f32.mrf.mxu0
    %3235 = vdwg.mxu0
    %3236 = vmatprep.subr.bf16.mxu0 %v1540
    %3237 = vmatpush1.bf16.msra.mxu0 %v1539
    %3238 = vmatprep.subr.bf16.mxu0 %v1532
    %3239 = vmatpush1.bf16.msra.mxu0 %v1531
    %3240 = vmatprep.subr.bf16.mxu0 %v1524
    %3241 = vmatpush1.bf16.msra.mxu0 %v1523
    %3242 = vmatprep.subr.bf16.mxu0 %v1516
    %3243 = vmatpush1.bf16.msra.mxu0 %v1515
    %3244 = vmatprep.subr.bf16.mxu0 %v1508
    %3245 = vmatpush1.bf16.msra.mxu0 %v1507
    %3246 = vmatprep.subr.bf16.mxu0 %v1500
    %3247 = vmatpush1.bf16.msra.mxu0 %v1499
    %3248 = vmatprep.subr.bf16.mxu0 %v1492
    %3249 = vmatpush1.bf16.msra.mxu0 %v1491
    %3250 = vmatprep.subr.bf16.mxu0 %v1484
    %3251 = vmatpush1.bf16.msra.mxu0 %v1483
    %3252 = vmatprep.subr.bf16.mxu0 %v1604
    %3253 = vmatpush2.bf16.msra.mxu0 %v1603
    %3254 = vmatprep.subr.bf16.mxu0 %v1596
    %3255 = vmatpush2.bf16.msra.mxu0 %v1595
    %3256 = vmatprep.subr.bf16.mxu0 %v1588
    %3257 = vmatpush2.bf16.msra.mxu0 %v1587
    %3258 = vmatprep.subr.bf16.mxu0 %v1580
    %3259 = vmatpush2.bf16.msra.mxu0 %v1579
    %3260 = vmatprep.subr.bf16.mxu0 %v1572
    %3261 = vmatpush2.bf16.msra.mxu0 %v1571
    %3262 = vmatprep.subr.bf16.mxu0 %v1564
    %3263 = vmatpush2.bf16.msra.mxu0 %v1563
    %3264 = vmatprep.subr.bf16.mxu0 %v1556
    %3265 = vmatpush2.bf16.msra.mxu0 %v1555
    %3266 = vmatprep.subr.bf16.mxu0 %v1548
    %3267 = vmatpush2.bf16.msra.mxu0 %v1547
    %3268 = vmatprep.mubr.bf16.mxu0 %v3112
    %3269 = vmatmul.mubr.bf16.gmra.mxu0 %v3111
    %v3270 = vpop.f32.mrf.mxu0
    %v3271 = vadd.f32 0.0, %v3270
    %v3272 = vpop.f32.mrf.mxu0
    %v3273 = vadd.f32 0.0, %v3272
    %v3274 = vpop.f32.mrf.mxu0
    %v3275 = vpop.f32.mrf.mxu0
    %3276 = vdwg.mxu0
    %v3277 = vadd.f32 %v3103, %v3148
    %v3278 = vadd.f32 %v3104, %v3150
    %v3279 = vadd.f32 %v3105, %v3189
    %v3280 = vadd.f32 %v3106, %v3191
    %v3281 = vadd.f32 %v3107, %v3230
    %v3282 = vadd.f32 %v3108, %v3232
    %v3283 = vadd.f32 %v3109, %v3271
    %v3284 = vadd.f32 %v3110, %v3273
    %v3285 = vxor.u32 %v3277, 2147483648
    %v3286 = vxor.u32 %v3278, 2147483648
    %v3287 = vmul.f32 %v3285, 1.442695
    %v3288 = vpow.pop %v3287
    %v3289 = vmul.f32 %v3286, 1.442695
    %v3290 = vpow.pop %v3289
    %v3291 = vadd.f32 %v3288, 1.0
    %v3292 = vadd.f32 %v3290, 1.0
    %v3293 = vrcp.pop %v3291
    %v3294 = vmul.f32 1.0, %v3293
    %v3295 = vrcp.pop %v3292
    %v3296 = vmul.f32 1.0, %v3295
    %v3297 = vxor.u32 %v3279, 2147483648
    %v3298 = vxor.u32 %v3280, 2147483648
    %v3299 = vmul.f32 %v3297, 1.442695
    %v3300 = vpow.pop %v3299
    %v3301 = vmul.f32 %v3298, 1.442695
    %v3302 = vpow.pop %v3301
    %v3303 = vadd.f32 %v3300, 1.0
    %v3304 = vadd.f32 %v3302, 1.0
    %v3305 = vrcp.pop %v3303
    %v3306 = vmul.f32 1.0, %v3305
    %v3307 = vrcp.pop %v3304
    %v3308 = vmul.f32 1.0, %v3307
    %v3309 = vtanh.pop %v3281
    %v3310 = vtanh.pop %v3282
    %v3311 = vxor.u32 %v3283, 2147483648
    %v3312 = vxor.u32 %v3284, 2147483648
    %v3313 = vmul.f32 %v3311, 1.442695
    %v3314 = vpow.pop %v3313
    %v3315 = vmul.f32 %v3312, 1.442695
    %v3316 = vpow.pop %v3315
    %v3317 = vadd.f32 %v3314, 1.0
    %v3318 = vadd.f32 %v3316, 1.0
    %v3319 = vrcp.pop %v3317
    %v3320 = vmul.f32 1.0, %v3319
    %v3321 = vrcp.pop %v3318
    %v3322 = vmul.f32 1.0, %v3321
    %v3323 = vmul.f32 %v3306, %v3097
    %v3324 = vmul.f32 %v3308, %v3098
    %v3325 = vmul.f32 %v3294, %v3309
    %v3326 = vmul.f32 %v3296, %v3310
    %v3327 = vadd.f32 %v3323, %v3325
    %v3328 = vadd.f32 %v3324, %v3326
    %v3329 = vtanh.pop %v3327
    %v3330 = vtanh.pop %v3328
    %v3331 = vmul.f32 %v3320, %v3329
    %v3332 = vmul.f32 %v3322, %v3330
    %v3333 = vld [vmem:[#allocation3 + $0x1c0] sm:$0xff]
    %v3334 = vld [vmem:[#allocation3 + $0x1c8] sm:$0xff]
    %v3335 = vld [vmem:[#allocation3 + $0x1d0] sm:$0xff]
    %v3336 = vld [vmem:[#allocation3 + $0x1d8] sm:$0xff]
    %v3337 = vld [vmem:[#allocation3 + $0x1e0] sm:$0xff]
    %v3338 = vld [vmem:[#allocation3 + $0x1e8] sm:$0xff]
    %v3339 = vld [vmem:[#allocation3 + $0x1f0] sm:$0xff]
    %v3340 = vld [vmem:[#allocation3 + $0x1f8] sm:$0xff]
    %v3341 = vpack.c.bf16 %v3331, %v3331
    %v3342 = vpack.c.bf16 %v3332, %v3332
    %3343 = vmatprep.subr.bf16.mxu0 %v1534
    %3344 = vmatpush1.bf16.msra.mxu0 %v1533
    %3345 = vmatprep.subr.bf16.mxu0 %v1526
    %3346 = vmatpush1.bf16.msra.mxu0 %v1525
    %3347 = vmatprep.subr.bf16.mxu0 %v1518
    %3348 = vmatpush1.bf16.msra.mxu0 %v1517
    %3349 = vmatprep.subr.bf16.mxu0 %v1510
    %3350 = vmatpush1.bf16.msra.mxu0 %v1509
    %3351 = vmatprep.subr.bf16.mxu0 %v1502
    %3352 = vmatpush1.bf16.msra.mxu0 %v1501
    %3353 = vmatprep.subr.bf16.mxu0 %v1494
    %3354 = vmatpush1.bf16.msra.mxu0 %v1493
    %3355 = vmatprep.subr.bf16.mxu0 %v1486
    %3356 = vmatpush1.bf16.msra.mxu0 %v1485
    %3357 = vmatprep.subr.bf16.mxu0 %v1478
    %3358 = vmatpush1.bf16.msra.mxu0 %v1477
    %3359 = vmatprep.subr.bf16.mxu0 %v1598
    %3360 = vmatpush2.bf16.msra.mxu0 %v1597
    %3361 = vmatprep.subr.bf16.mxu0 %v1590
    %3362 = vmatpush2.bf16.msra.mxu0 %v1589
    %3363 = vmatprep.subr.bf16.mxu0 %v1582
    %3364 = vmatpush2.bf16.msra.mxu0 %v1581
    %3365 = vmatprep.subr.bf16.mxu0 %v1574
    %3366 = vmatpush2.bf16.msra.mxu0 %v1573
    %3367 = vmatprep.subr.bf16.mxu0 %v1566
    %3368 = vmatpush2.bf16.msra.mxu0 %v1565
    %3369 = vmatprep.subr.bf16.mxu0 %v1558
    %3370 = vmatpush2.bf16.msra.mxu0 %v1557
    %3371 = vmatprep.subr.bf16.mxu0 %v1550
    %3372 = vmatpush2.bf16.msra.mxu0 %v1549
    %3373 = vmatprep.subr.bf16.mxu0 %v1542
    %3374 = vmatpush2.bf16.msra.mxu0 %v1541
    %3375 = vmatprep.mubr.bf16.mxu0 %v3342
    %3376 = vmatmul.mubr.bf16.gmra.mxu0 %v3341
    %v3377 = vpop.f32.mrf.mxu0
    %v3378 = vadd.f32 0.0, %v3377
    %v3379 = vpop.f32.mrf.mxu0
    %v3380 = vadd.f32 0.0, %v3379
    %v3381 = vpop.f32.mrf.mxu0
    %v3382 = vpop.f32.mrf.mxu0
    %3383 = vdwg.mxu0
    %3384 = vmatprep.subr.bf16.mxu0 %v1536
    %3385 = vmatpush1.bf16.msra.mxu0 %v1535
    %3386 = vmatprep.subr.bf16.mxu0 %v1528
    %3387 = vmatpush1.bf16.msra.mxu0 %v1527
    %3388 = vmatprep.subr.bf16.mxu0 %v1520
    %3389 = vmatpush1.bf16.msra.mxu0 %v1519
    %3390 = vmatprep.subr.bf16.mxu0 %v1512
    %3391 = vmatpush1.bf16.msra.mxu0 %v1511
    %3392 = vmatprep.subr.bf16.mxu0 %v1504
    %3393 = vmatpush1.bf16.msra.mxu0 %v1503
    %3394 = vmatprep.subr.bf16.mxu0 %v1496
    %3395 = vmatpush1.bf16.msra.mxu0 %v1495
    %3396 = vmatprep.subr.bf16.mxu0 %v1488
    %3397 = vmatpush1.bf16.msra.mxu0 %v1487
    %3398 = vmatprep.subr.bf16.mxu0 %v1480
    %3399 = vmatpush1.bf16.msra.mxu0 %v1479
    %3400 = vmatprep.subr.bf16.mxu0 %v1600
    %3401 = vmatpush2.bf16.msra.mxu0 %v1599
    %3402 = vmatprep.subr.bf16.mxu0 %v1592
    %3403 = vmatpush2.bf16.msra.mxu0 %v1591
    %3404 = vmatprep.subr.bf16.mxu0 %v1584
    %3405 = vmatpush2.bf16.msra.mxu0 %v1583
    %3406 = vmatprep.subr.bf16.mxu0 %v1576
    %3407 = vmatpush2.bf16.msra.mxu0 %v1575
    %3408 = vmatprep.subr.bf16.mxu0 %v1568
    %3409 = vmatpush2.bf16.msra.mxu0 %v1567
    %3410 = vmatprep.subr.bf16.mxu0 %v1560
    %3411 = vmatpush2.bf16.msra.mxu0 %v1559
    %3412 = vmatprep.subr.bf16.mxu0 %v1552
    %3413 = vmatpush2.bf16.msra.mxu0 %v1551
    %3414 = vmatprep.subr.bf16.mxu0 %v1544
    %3415 = vmatpush2.bf16.msra.mxu0 %v1543
    %3416 = vmatprep.mubr.bf16.mxu0 %v3342
    %3417 = vmatmul.mubr.bf16.gmra.mxu0 %v3341
    %v3418 = vpop.f32.mrf.mxu0
    %v3419 = vadd.f32 0.0, %v3418
    %v3420 = vpop.f32.mrf.mxu0
    %v3421 = vadd.f32 0.0, %v3420
    %v3422 = vpop.f32.mrf.mxu0
    %v3423 = vpop.f32.mrf.mxu0
    %3424 = vdwg.mxu0
    %3425 = vmatprep.subr.bf16.mxu0 %v1538
    %3426 = vmatpush1.bf16.msra.mxu0 %v1537
    %3427 = vmatprep.subr.bf16.mxu0 %v1530
    %3428 = vmatpush1.bf16.msra.mxu0 %v1529
    %3429 = vmatprep.subr.bf16.mxu0 %v1522
    %3430 = vmatpush1.bf16.msra.mxu0 %v1521
    %3431 = vmatprep.subr.bf16.mxu0 %v1514
    %3432 = vmatpush1.bf16.msra.mxu0 %v1513
    %3433 = vmatprep.subr.bf16.mxu0 %v1506
    %3434 = vmatpush1.bf16.msra.mxu0 %v1505
    %3435 = vmatprep.subr.bf16.mxu0 %v1498
    %3436 = vmatpush1.bf16.msra.mxu0 %v1497
    %3437 = vmatprep.subr.bf16.mxu0 %v1490
    %3438 = vmatpush1.bf16.msra.mxu0 %v1489
    %3439 = vmatprep.subr.bf16.mxu0 %v1482
    %3440 = vmatpush1.bf16.msra.mxu0 %v1481
    %3441 = vmatprep.subr.bf16.mxu0 %v1602
    %3442 = vmatpush2.bf16.msra.mxu0 %v1601
    %3443 = vmatprep.subr.bf16.mxu0 %v1594
    %3444 = vmatpush2.bf16.msra.mxu0 %v1593
    %3445 = vmatprep.subr.bf16.mxu0 %v1586
    %3446 = vmatpush2.bf16.msra.mxu0 %v1585
    %3447 = vmatprep.subr.bf16.mxu0 %v1578
    %3448 = vmatpush2.bf16.msra.mxu0 %v1577
    %3449 = vmatprep.subr.bf16.mxu0 %v1570
    %3450 = vmatpush2.bf16.msra.mxu0 %v1569
    %3451 = vmatprep.subr.bf16.mxu0 %v1562
    %3452 = vmatpush2.bf16.msra.mxu0 %v1561
    %3453 = vmatprep.subr.bf16.mxu0 %v1554
    %3454 = vmatpush2.bf16.msra.mxu0 %v1553
    %3455 = vmatprep.subr.bf16.mxu0 %v1546
    %3456 = vmatpush2.bf16.msra.mxu0 %v1545
    %3457 = vmatprep.mubr.bf16.mxu0 %v3342
    %3458 = vmatmul.mubr.bf16.gmra.mxu0 %v3341
    %v3459 = vpop.f32.mrf.mxu0
    %v3460 = vadd.f32 0.0, %v3459
    %v3461 = vpop.f32.mrf.mxu0
    %v3462 = vadd.f32 0.0, %v3461
    %v3463 = vpop.f32.mrf.mxu0
    %v3464 = vpop.f32.mrf.mxu0
    %3465 = vdwg.mxu0
    %3466 = vmatprep.subr.bf16.mxu0 %v1540
    %3467 = vmatpush1.bf16.msra.mxu0 %v1539
    %3468 = vmatprep.subr.bf16.mxu0 %v1532
    %3469 = vmatpush1.bf16.msra.mxu0 %v1531
    %3470 = vmatprep.subr.bf16.mxu0 %v1524
    %3471 = vmatpush1.bf16.msra.mxu0 %v1523
    %3472 = vmatprep.subr.bf16.mxu0 %v1516
    %3473 = vmatpush1.bf16.msra.mxu0 %v1515
    %3474 = vmatprep.subr.bf16.mxu0 %v1508
    %3475 = vmatpush1.bf16.msra.mxu0 %v1507
    %3476 = vmatprep.subr.bf16.mxu0 %v1500
    %3477 = vmatpush1.bf16.msra.mxu0 %v1499
    %3478 = vmatprep.subr.bf16.mxu0 %v1492
    %3479 = vmatpush1.bf16.msra.mxu0 %v1491
    %3480 = vmatprep.subr.bf16.mxu0 %v1484
    %3481 = vmatpush1.bf16.msra.mxu0 %v1483
    %3482 = vmatprep.subr.bf16.mxu0 %v1604
    %3483 = vmatpush2.bf16.msra.mxu0 %v1603
    %3484 = vmatprep.subr.bf16.mxu0 %v1596
    %3485 = vmatpush2.bf16.msra.mxu0 %v1595
    %3486 = vmatprep.subr.bf16.mxu0 %v1588
    %3487 = vmatpush2.bf16.msra.mxu0 %v1587
    %3488 = vmatprep.subr.bf16.mxu0 %v1580
    %3489 = vmatpush2.bf16.msra.mxu0 %v1579
    %3490 = vmatprep.subr.bf16.mxu0 %v1572
    %3491 = vmatpush2.bf16.msra.mxu0 %v1571
    %3492 = vmatprep.subr.bf16.mxu0 %v1564
    %3493 = vmatpush2.bf16.msra.mxu0 %v1563
    %3494 = vmatprep.subr.bf16.mxu0 %v1556
    %3495 = vmatpush2.bf16.msra.mxu0 %v1555
    %3496 = vmatprep.subr.bf16.mxu0 %v1548
    %3497 = vmatpush2.bf16.msra.mxu0 %v1547
    %3498 = vmatprep.mubr.bf16.mxu0 %v3342
    %3499 = vmatmul.mubr.bf16.gmra.mxu0 %v3341
    %v3500 = vpop.f32.mrf.mxu0
    %v3501 = vadd.f32 0.0, %v3500
    %v3502 = vpop.f32.mrf.mxu0
    %v3503 = vadd.f32 0.0, %v3502
    %v3504 = vpop.f32.mrf.mxu0
    %v3505 = vpop.f32.mrf.mxu0
    %3506 = vdwg.mxu0
    %v3507 = vadd.f32 %v3333, %v3378
    %v3508 = vadd.f32 %v3334, %v3380
    %v3509 = vadd.f32 %v3335, %v3419
    %v3510 = vadd.f32 %v3336, %v3421
    %v3511 = vadd.f32 %v3337, %v3460
    %v3512 = vadd.f32 %v3338, %v3462
    %v3513 = vadd.f32 %v3339, %v3501
    %v3514 = vadd.f32 %v3340, %v3503
    %v3515 = vxor.u32 %v3507, 2147483648
    %v3516 = vxor.u32 %v3508, 2147483648
    %v3517 = vmul.f32 %v3515, 1.442695
    %v3518 = vpow.pop %v3517
    %v3519 = vmul.f32 %v3516, 1.442695
    %v3520 = vpow.pop %v3519
    %v3521 = vadd.f32 %v3518, 1.0
    %v3522 = vadd.f32 %v3520, 1.0
    %v3523 = vrcp.pop %v3521
    %v3524 = vmul.f32 1.0, %v3523
    %v3525 = vrcp.pop %v3522
    %v3526 = vmul.f32 1.0, %v3525
    %v3527 = vxor.u32 %v3509, 2147483648
    %v3528 = vxor.u32 %v3510, 2147483648
    %v3529 = vmul.f32 %v3527, 1.442695
    %v3530 = vpow.pop %v3529
    %v3531 = vmul.f32 %v3528, 1.442695
    %v3532 = vpow.pop %v3531
    %v3533 = vadd.f32 %v3530, 1.0
    %v3534 = vadd.f32 %v3532, 1.0
    %v3535 = vrcp.pop %v3533
    %v3536 = vmul.f32 1.0, %v3535
    %v3537 = vrcp.pop %v3534
    %v3538 = vmul.f32 1.0, %v3537
    %v3539 = vtanh.pop %v3511
    %v3540 = vtanh.pop %v3512
    %v3541 = vxor.u32 %v3513, 2147483648
    %v3542 = vxor.u32 %v3514, 2147483648
    %v3543 = vmul.f32 %v3541, 1.442695
    %v3544 = vpow.pop %v3543
    %v3545 = vmul.f32 %v3542, 1.442695
    %v3546 = vpow.pop %v3545
    %v3547 = vadd.f32 %v3544, 1.0
    %v3548 = vadd.f32 %v3546, 1.0
    %v3549 = vrcp.pop %v3547
    %v3550 = vmul.f32 1.0, %v3549
    %v3551 = vrcp.pop %v3548
    %v3552 = vmul.f32 1.0, %v3551
    %v3553 = vmul.f32 %v3536, %v3327
    %v3554 = vmul.f32 %v3538, %v3328
    %v3555 = vmul.f32 %v3524, %v3539
    %v3556 = vmul.f32 %v3526, %v3540
    %v3557 = vadd.f32 %v3553, %v3555
    %v3558 = vadd.f32 %v3554, %v3556
    %v3559 = vtanh.pop %v3557
    %v3560 = vtanh.pop %v3558
    %v3561 = vmul.f32 %v3550, %v3559
    %v3562 = vmul.f32 %v3552, %v3560
    %s3563 = smul.u32 %s953, 1
    %s3564 = sshll.u32 %s3563, 4
    %3565 = dma.done %s75, %s3564
    %v3566 = vpack.c.bf16 %v3561, %v3561
    %v3567 = vpack.c.bf16 %v3562, %v3562
    %v3568 = vld [vmem:[#allocation5] sm:$0xf]
    %v3569 = vld [vmem:[#allocation5 + $0x4] sm:$0xf]
    %v3570 = vld [vmem:[#allocation5 + $0x8] sm:$0xf]
    %v3571 = vld [vmem:[#allocation5 + $0xc] sm:$0xf]
    %v3572 = vld [vmem:[#allocation5 + $0x10] sm:$0xf]
    %v3573 = vld [vmem:[#allocation5 + $0x14] sm:$0xf]
    %v3574 = vld [vmem:[#allocation5 + $0x18] sm:$0xf]
    %v3575 = vld [vmem:[#allocation5 + $0x1c] sm:$0xf]
    %v3576 = vld [vmem:[#allocation5 + $0x20] sm:$0xf]
    %v3577 = vld [vmem:[#allocation5 + $0x24] sm:$0xf]
    %v3578 = vld [vmem:[#allocation5 + $0x28] sm:$0xf]
    %v3579 = vld [vmem:[#allocation5 + $0x2c] sm:$0xf]
    %v3580 = vld [vmem:[#allocation5 + $0x30] sm:$0xf]
    %v3581 = vld [vmem:[#allocation5 + $0x34] sm:$0xf]
    %v3582 = vld [vmem:[#allocation5 + $0x38] sm:$0xf]
    %v3583 = vld [vmem:[#allocation5 + $0x3c] sm:$0xf]
    %v3584 = vld [vmem:[#allocation5 + $0x40] sm:$0xf]
    %v3585 = vld [vmem:[#allocation5 + $0x44] sm:$0xf]
    %v3586 = vld [vmem:[#allocation5 + $0x48] sm:$0xf]
    %v3587 = vld [vmem:[#allocation5 + $0x4c] sm:$0xf]
    %v3588 = vld [vmem:[#allocation5 + $0x50] sm:$0xf]
    %v3589 = vld [vmem:[#allocation5 + $0x54] sm:$0xf]
    %v3590 = vld [vmem:[#allocation5 + $0x58] sm:$0xf]
    %v3591 = vld [vmem:[#allocation5 + $0x5c] sm:$0xf]
    %v3592 = vld [vmem:[#allocation5 + $0x60] sm:$0xf]
    %v3593 = vld [vmem:[#allocation5 + $0x64] sm:$0xf]
    %v3594 = vld [vmem:[#allocation5 + $0x68] sm:$0xf]
    %v3595 = vld [vmem:[#allocation5 + $0x6c] sm:$0xf]
    %v3596 = vld [vmem:[#allocation5 + $0x70] sm:$0xf]
    %v3597 = vld [vmem:[#allocation5 + $0x74] sm:$0xf]
    %v3598 = vld [vmem:[#allocation5 + $0x78] sm:$0xf]
    %v3599 = vld [vmem:[#allocation5 + $0x7c] sm:$0xf]
    %v3600 = vld [vmem:[%s6] sm:$0x1]
    %v3602 = vlaneseq
    %v3603 = vshrl.u32 %v3602, 7
    %v3604 = vsub.s32 0, %v3603
    %v3605 = vrot.slane %v3600, %v3604
    %v3639 = vunpack.c.l.b16 %v3568
    %v3640 = vunpack.c.l.b16 %v3569
    %v3641 = vunpack.c.l.b16 %v3570
    %v3642 = vunpack.c.l.b16 %v3571
    %v3643 = vunpack.c.l.b16 %v3572
    %v3644 = vunpack.c.l.b16 %v3573
    %v3645 = vunpack.c.l.b16 %v3574
    %v3646 = vunpack.c.l.b16 %v3575
    %v3647 = vunpack.c.l.b16 %v3576
    %v3648 = vunpack.c.l.b16 %v3577
    %v3649 = vunpack.c.l.b16 %v3578
    %v3650 = vunpack.c.l.b16 %v3579
    %v3651 = vunpack.c.l.b16 %v3580
    %v3652 = vunpack.c.l.b16 %v3581
    %v3653 = vunpack.c.l.b16 %v3582
    %v3654 = vunpack.c.l.b16 %v3583
    %v3655 = vunpack.c.l.b16 %v3584
    %v3656 = vunpack.c.l.b16 %v3585
    %v3657 = vunpack.c.l.b16 %v3586
    %v3658 = vunpack.c.l.b16 %v3587
    %v3659 = vunpack.c.l.b16 %v3588
    %v3660 = vunpack.c.l.b16 %v3589
    %v3661 = vunpack.c.l.b16 %v3590
    %v3662 = vunpack.c.l.b16 %v3591
    %v3663 = vunpack.c.l.b16 %v3592
    %v3664 = vunpack.c.l.b16 %v3593
    %v3665 = vunpack.c.l.b16 %v3594
    %v3666 = vunpack.c.l.b16 %v3595
    %v3667 = vunpack.c.l.b16 %v3596
    %v3668 = vunpack.c.l.b16 %v3597
    %v3669 = vunpack.c.l.b16 %v3598
    %v3670 = vunpack.c.l.b16 %v3599
    %v3671 = vpack.c.b16 %v3640, %v3639
    %v3672 = vpack.c.b16 %v3642, %v3641
    %v3673 = vpack.c.b16 %v3644, %v3643
    %v3674 = vpack.c.b16 %v3646, %v3645
    %v3675 = vpack.c.b16 %v3648, %v3647
    %v3676 = vpack.c.b16 %v3650, %v3649
    %v3677 = vpack.c.b16 %v3652, %v3651
    %v3678 = vpack.c.b16 %v3654, %v3653
    %v3679 = vpack.c.b16 %v3656, %v3655
    %v3680 = vpack.c.b16 %v3658, %v3657
    %v3681 = vpack.c.b16 %v3660, %v3659
    %v3682 = vpack.c.b16 %v3662, %v3661
    %v3683 = vpack.c.b16 %v3664, %v3663
    %v3684 = vpack.c.b16 %v3666, %v3665
    %v3685 = vpack.c.b16 %v3668, %v3667
    %v3686 = vpack.c.b16 %v3670, %v3669
    %3703 = vmatprep.subr.bf16.mxu0 0
    %3704 = vmatpush1.bf16.msra.mxu0 %v3678
    %3705 = vmatprep.subr.bf16.mxu0 0
    %3706 = vmatpush1.bf16.msra.mxu0 %v3677
    %3707 = vmatprep.subr.bf16.mxu0 0
    %3708 = vmatpush1.bf16.msra.mxu0 %v3676
    %3709 = vmatprep.subr.bf16.mxu0 0
    %3710 = vmatpush1.bf16.msra.mxu0 %v3675
    %3711 = vmatprep.subr.bf16.mxu0 0
    %3712 = vmatpush1.bf16.msra.mxu0 %v3674
    %3713 = vmatprep.subr.bf16.mxu0 0
    %3714 = vmatpush1.bf16.msra.mxu0 %v3673
    %3715 = vmatprep.subr.bf16.mxu0 0
    %3716 = vmatpush1.bf16.msra.mxu0 %v3672
    %3717 = vmatprep.subr.bf16.mxu0 0
    %3718 = vmatpush1.bf16.msra.mxu0 %v3671
    %3719 = vmatprep.subr.bf16.mxu0 0
    %3720 = vmatpush2.bf16.msra.mxu0 %v3686
    %3721 = vmatprep.subr.bf16.mxu0 0
    %3722 = vmatpush2.bf16.msra.mxu0 %v3685
    %3723 = vmatprep.subr.bf16.mxu0 0
    %3724 = vmatpush2.bf16.msra.mxu0 %v3684
    %3725 = vmatprep.subr.bf16.mxu0 0
    %3726 = vmatpush2.bf16.msra.mxu0 %v3683
    %3727 = vmatprep.subr.bf16.mxu0 0
    %3728 = vmatpush2.bf16.msra.mxu0 %v3682
    %3729 = vmatprep.subr.bf16.mxu0 0
    %3730 = vmatpush2.bf16.msra.mxu0 %v3681
    %3731 = vmatprep.subr.bf16.mxu0 0
    %3732 = vmatpush2.bf16.msra.mxu0 %v3680
    %3733 = vmatprep.subr.bf16.mxu0 0
    %3734 = vmatpush2.bf16.msra.mxu0 %v3679
    %3735 = vmatprep.mubr.bf16.mxu0 %v3567
    %3736 = vmatmul.mubr.bf16.gmra.mxu0 %v3566
    %v3737 = vpop.f32.mrf.mxu0
    %v3738 = vadd.f32 %v3605, %v3737
    %v3739 = vpop.f32.mrf.mxu0
    %v3740 = vpop.f32.mrf.mxu0
    %v3741 = vpop.f32.mrf.mxu0
    %3742 = vdwg.mxu0
    %v3743 = vxor.u32 %v3738, 2147483648
    %v3744 = vmul.f32 %v3743, 1.442695
    %v3745 = vpow.pop %v3744
    %v3746 = vadd.f32 %v3745, 1.0
    %v3747 = vrcp.pop %v3746
    %v3748 = vmul.f32 1.0, %v3747
    %3749 = vst [vmem:[%s7] sm:$0xff] %v3748
    // Predicated region
    $region38: #{lstm_forward_pallas.1} parent=1 // pred_check
      _
    $region39: #{lstm_forward_pallas.1} parent=1 // pred_check_branch
      %3751 = sbr.rel (0) target = $region41
    $region40: #{lstm_forward_pallas.1} parent=1 // pred_region
      _
    $region41: #{lstm_forward_pallas.1} parent=1 // pred_fallthru
      _
    // Predicated region
    $region42: #{lstm_forward_pallas.1} parent=1 // pred_check
      _
    $region43: #{lstm_forward_pallas.1} parent=1 // pred_check_branch
      %3753 = sbr.rel (0) target = $region45
    $region44: #{lstm_forward_pallas.1} parent=1 // pred_region
      _
    $region45: #{lstm_forward_pallas.1} parent=1 // pred_fallthru
      _
    %3754 = vsyncpa [#allocation10], 1
    %3755 = vsyncpa [#allocation12], 1
  %3756 = vsyncmov [#allocation6]
  %s3757 = vpop.sfrf %3756
  %p3758 = scmp.eq.s32.totalorder %s3757, 0
  %p3759 = pneg %p3758
  %3761 = shalt.err (%p3759)
  %s3762 = scalar_lea.sflag [#allocation6], 1
  %3763 = vsyncmov %s3762
  %s3764 = vpop.sfrf %3763
  %p3765 = scmp.eq.s32.totalorder %s3764, 0
  %p3766 = pneg %p3765
  %3768 = shalt.err (%p3766)

</llo_original>
